<compile_context>
chip_gen: v7x
topology: tpu7x:2x2x1
jax: 0.10.0
libtpu: 0.0.40
codegen_flags: <defaults>
</compile_context>

<pallas_src>
import functools

import jax
import jax.numpy as jnp
from jax import lax
from jax.experimental import pallas as pl
from jax.experimental.pallas import tpu as pltpu


def _layernorm(x, gamma, beta, eps=1e-5):
    mu = jnp.mean(x, axis=-1, keepdims=True)
    xc = x - mu
    var = jnp.mean(xc * xc, axis=-1, keepdims=True)
    return xc * lax.rsqrt(var + eps) * gamma + beta


def _block_kernel(x_ref,
                  ln1_g_ref, ln1_b_ref,
                  w_qkv_ref, scale_ref,
                  w_o_ref, b_o_ref,
                  ln2_g_ref, ln2_b_ref,
                  w1_ref, b1_ref,
                  w2_ref, b2_ref,
                  o_ref, *, num_heads):
    x = x_ref[0]                                  # (n, dim) f32, one batch row
    n, dim = x.shape
    inner = w_qkv_ref.shape[1] // 3
    d = inner // num_heads

    # ----------------- norm1 + LSA attention -----------------
    xn = _layernorm(x, ln1_g_ref[...], ln1_b_ref[...])
    qkv = jnp.dot(xn, w_qkv_ref[...], preferred_element_type=jnp.float32)  # (n, 3*inner)

    # Learned per-head scale folded into q: (q*s_h) @ k^T == s_h * (q @ k^T).
    q = qkv[:, :inner] * scale_ref[...]
    k = qkv[:, inner:2 * inner]
    v = qkv[:, 2 * inner:]

    # LSA diagonal mask (torch.eye(num_patches+1); here n == num_patches+1).
    diag = (lax.broadcasted_iota(jnp.int32, (n, n), 0)
            == lax.broadcasted_iota(jnp.int32, (n, n), 1))

    proj = jnp.zeros((n, dim), dtype=jnp.float32)
    for h in range(num_heads):                    # static unroll, heads are few
        sl = slice(h * d, (h + 1) * d)
        qh, kh, vh = q[:, sl], k[:, sl], v[:, sl]
        dots = lax.dot_general(qh, kh, (((1,), (1,)), ((), ())),
                               preferred_element_type=jnp.float32)   # (n, n)
        dots = jnp.where(diag, -987654321.0, dots)
        dots = dots - jnp.max(dots, axis=-1, keepdims=True)
        p = jnp.exp(dots)
        attn = p / jnp.sum(p, axis=-1, keepdims=True)
        out_h = jnp.dot(attn, vh, preferred_element_type=jnp.float32)  # (n, d)
        # concat_h(out_h) @ W_o == sum_h out_h @ W_o[h*d:(h+1)*d, :]
        proj = proj + jnp.dot(out_h, w_o_ref[sl, :],
                              preferred_element_type=jnp.float32)
    attn_out = proj + b_o_ref[...]

    x1 = x + attn_out          # residual 1 (drop_path / dropout = identity, p=0)

    # ----------------- norm2 + MLP -----------------
    xn2 = _layernorm(x1, ln2_g_ref[...], ln2_b_ref[...])
    hdn = jnp.dot(xn2, w1_ref[...], preferred_element_type=jnp.float32) + b1_ref[...]
    # TODO(synk): PyTorch nn.GELU() is the exact erf GELU; tanh approximation used here.
    hdn = jax.nn.gelu(hdn, approximate=True)
    y = jnp.dot(hdn, w2_ref[...], preferred_element_type=jnp.float32) + b2_ref[...]

    o_ref[0] = (x1 + y).astype(o_ref.dtype)       # lane-dense (n, 128) store


def vit_block(x, params, *, num_heads):
    """Fused ViT Block forward: x + attn(ln1(x)), then + mlp(ln2(.))."""
    B, n, dim = x.shape
    w_qkv = params["w_qkv"]
    inner = w_qkv.shape[1] // 3
    d = inner // num_heads
    hidden = params["w1"].shape[1]

    # 2-D, lane-dense parameter views (last dim multiple of 128).
    scale_row = jnp.repeat(params["scale"], d).reshape(1, inner).astype(x.dtype)
    ln1_g = params["ln1_g"].reshape(1, dim)
    ln1_b = params["ln1_b"].reshape(1, dim)
    ln2_g = params["ln2_g"].reshape(1, dim)
    ln2_b = params["ln2_b"].reshape(1, dim)
    b_o = params["b_o"].reshape(1, dim)
    b1 = params["b1"].reshape(1, hidden)
    b2 = params["b2"].reshape(1, dim)

    def param_spec(shape):
        # Constant block index -> fetched once, stays VMEM-resident across grid.
        return pl.BlockSpec(shape, lambda b: (0, 0))

    flops = 2 * B * n * (dim * 3 * inner + 2 * n * inner + inner * dim
                         + 2 * dim * hidden)
    transcendentals = B * n * (num_heads * n + hidden)
    bytes_accessed = 4 * (2 * B * n * dim
                          + dim * 3 * inner + inner * dim + 2 * dim * hidden
                          + inner + hidden + 6 * dim)

    return pl.pallas_call(
        functools.partial(_block_kernel, num_heads=num_heads),
        out_shape=jax.ShapeDtypeStruct((B, n, dim), x.dtype),
        grid=(B,),
        in_specs=[
            pl.BlockSpec((1, n, dim), lambda b: (b, 0, 0)),      # x (one batch row)
            param_spec((1, dim)), param_spec((1, dim)),          # ln1 gamma/beta
            param_spec((dim, 3 * inner)),                        # W_qkv (no bias)
            param_spec((1, inner)),                              # per-head scale (expanded)
            param_spec((inner, dim)), param_spec((1, dim)),      # W_o, b_o
            param_spec((1, dim)), param_spec((1, dim)),          # ln2 gamma/beta
            param_spec((dim, hidden)), param_spec((1, hidden)),  # W1, b1
            param_spec((hidden, dim)), param_spec((1, dim)),     # W2, b2
        ],
        out_specs=pl.BlockSpec((1, n, dim), lambda b: (b, 0, 0)),
        compiler_params=pltpu.CompilerParams(
            dimension_semantics=("parallel",)),
        cost_estimate=pl.CostEstimate(
            flops=flops, transcendentals=transcendentals,
            bytes_accessed=bytes_accessed),
    )(x, ln1_g, ln1_b, w_qkv, scale_row, params["w_o"], b_o,
      ln2_g, ln2_b, params["w1"], b1, params["w2"], b2)


def _reference_block(x, params, *, num_heads):
    """Plain-JAX reference mirroring the PyTorch Block forward (eval mode)."""
    B, n, dim = x.shape
    inner = params["w_qkv"].shape[1] // 3
    d = inner // num_heads

    def ln(t, g, b):
        mu = t.mean(-1, keepdims=True)
        var = ((t - mu) ** 2).mean(-1, keepdims=True)
        return (t - mu) / jnp.sqrt(var + 1e-5) * g + b

    xn = ln(x, params["ln1_g"], params["ln1_b"])
    qkv = xn @ params["w_qkv"]
    q, k, v = jnp.split(qkv, 3, axis=-1)
    to_heads = lambda t: t.reshape(B, n, num_heads, d).transpose(0, 2, 1, 3)
    q, k, v = to_heads(q), to_heads(k), to_heads(v)
    dots = jnp.einsum("bhid,bhjd->bhij", q, k) * params["scale"][None, :, None, None]
    dots = jnp.where(jnp.eye(n, dtype=bool)[None, None], -987654321.0, dots)
    attn = jax.nn.softmax(dots, axis=-1)
    out = jnp.einsum("bhij,bhjd->bhid", attn, v)
    out = out.transpose(0, 2, 1, 3).reshape(B, n, inner)
    out = out @ params["w_o"] + params["b_o"]
    x1 = x + out
    xn2 = ln(x1, params["ln2_g"], params["ln2_b"])
    hdn = jax.nn.gelu(xn2 @ params["w1"] + params["b1"], approximate=True)
    y = hdn @ params["w2"] + params["b2"]
    return x1 + y


if __name__ == "__main__":
    key = jax.random.PRNGKey(0)
    ks = jax.random.split(key, 9)

    # The module's Attention hard-codes num_patches=30, so seq len n = 31.
    # dim=128 keeps all matmuls / stores lane-dense (perf-review item).
    B, dim, num_heads = 2, 128, 4
    n = 31                                   # num_patches + 1
    dim_head = dim // num_heads
    inner = dim_head * num_heads
    hidden = int(dim * 4.0)

    def init(k, shape, fan_in):
        return jax.random.normal(k, shape, dtype=jnp.float32) / jnp.sqrt(float(fan_in))

    x = jax.random.normal(ks[0], (B, n, dim), dtype=jnp.float32)

    params = dict(
        ln1_g=jnp.ones((dim,), jnp.float32),
        ln1_b=jnp.zeros((dim,), jnp.float32),
        w_qkv=init(ks[1], (dim, 3 * inner), dim),
        scale=(dim_head ** -0.5)
        * jax.random.uniform(ks[2], (num_heads,), jnp.float32, 0.5, 1.5),
        w_o=init(ks[3], (inner, dim), inner),
        b_o=0.01 * jax.random.normal(ks[4], (dim,), jnp.float32),
        ln2_g=jnp.ones((dim,), jnp.float32),
        ln2_b=jnp.zeros((dim,), jnp.float32),
        w1=init(ks[5], (dim, hidden), dim),
        b1=0.01 * jax.random.normal(ks[6], (hidden,), jnp.float32),
        w2=init(ks[7], (hidden, dim), hidden),
        b2=0.01 * jax.random.normal(ks[8], (dim,), jnp.float32),
    )

    out = vit_block(x, params, num_heads=num_heads)
    out = jax.block_until_ready(out)

    ref = _reference_block(x, params, num_heads=num_heads)
    assert out.shape == (B, n, dim)
    assert jnp.allclose(out, ref, atol=1e-3, rtol=1e-3), (
        "max abs err = %g" % float(jnp.max(jnp.abs(out - ref))))

    print("KERNEL_OK")
</pallas_src>

<mosaic_0001>
module attributes {stable_mosaic.version = 11 : i64} {
  func.func @_block_kernel(%arg0: i32, %arg1: memref<1x31x128xf32, #tpu.memory_space<vmem>>, %arg2: memref<1x128xf32, #tpu.memory_space<vmem>>, %arg3: memref<1x128xf32, #tpu.memory_space<vmem>>, %arg4: memref<128x384xf32, #tpu.memory_space<vmem>>, %arg5: memref<1x128xf32, #tpu.memory_space<vmem>>, %arg6: memref<128x128xf32, #tpu.memory_space<vmem>>, %arg7: memref<1x128xf32, #tpu.memory_space<vmem>>, %arg8: memref<1x128xf32, #tpu.memory_space<vmem>>, %arg9: memref<1x128xf32, #tpu.memory_space<vmem>>, %arg10: memref<128x512xf32, #tpu.memory_space<vmem>>, %arg11: memref<1x512xf32, #tpu.memory_space<vmem>>, %arg12: memref<512x128xf32, #tpu.memory_space<vmem>>, %arg13: memref<1x128xf32, #tpu.memory_space<vmem>>, %arg14: memref<1x31x128xf32, #tpu.memory_space<vmem>>) attributes {dimension_semantics = [#tpu.dimension_semantics<parallel>], iteration_bounds = array<i64: 2>, scalar_prefetch = 0 : i64, scratch_operands = 0 : i64, tpu.core_type = #tpu.core_type<tc>, window_params = [{transform_indices = @transform_0, window_bounds = array<i64: 1, 31, 128>}, {pipeline_mode = #tpu.pipeline_mode<synchronous>, transform_indices = @transform_1, window_bounds = array<i64: 1, 128>}, {pipeline_mode = #tpu.pipeline_mode<synchronous>, transform_indices = @transform_2, window_bounds = array<i64: 1, 128>}, {pipeline_mode = #tpu.pipeline_mode<synchronous>, transform_indices = @transform_3, window_bounds = array<i64: 128, 384>}, {pipeline_mode = #tpu.pipeline_mode<synchronous>, transform_indices = @transform_4, window_bounds = array<i64: 1, 128>}, {pipeline_mode = #tpu.pipeline_mode<synchronous>, transform_indices = @transform_5, window_bounds = array<i64: 128, 128>}, {pipeline_mode = #tpu.pipeline_mode<synchronous>, transform_indices = @transform_6, window_bounds = array<i64: 1, 128>}, {pipeline_mode = #tpu.pipeline_mode<synchronous>, transform_indices = @transform_7, window_bounds = array<i64: 1, 128>}, {pipeline_mode = #tpu.pipeline_mode<synchronous>, transform_indices = @transform_8, window_bounds = array<i64: 1, 128>}, {pipeline_mode = #tpu.pipeline_mode<synchronous>, transform_indices = @transform_9, window_bounds = array<i64: 128, 512>}, {pipeline_mode = #tpu.pipeline_mode<synchronous>, transform_indices = @transform_10, window_bounds = array<i64: 1, 512>}, {pipeline_mode = #tpu.pipeline_mode<synchronous>, transform_indices = @transform_11, window_bounds = array<i64: 512, 128>}, {pipeline_mode = #tpu.pipeline_mode<synchronous>, transform_indices = @transform_12, window_bounds = array<i64: 1, 128>}, {transform_indices = @transform_13, window_bounds = array<i64: 1, 31, 128>}]} {
    %c0 = arith.constant 0 : index
    %c0_0 = arith.constant 0 : index
    %c0_1 = arith.constant 0 : index
    %0 = vector.load %arg1[%c0, %c0_0, %c0_1] : memref<1x31x128xf32, #tpu.memory_space<vmem>>, vector<1x31x128xf32>
    %1 = vector.shape_cast %0 : vector<1x31x128xf32> to vector<31x128xf32>
    %c0_2 = arith.constant 0 : index
    %c0_3 = arith.constant 0 : index
    %2 = vector.load %arg2[%c0_2, %c0_3] : memref<1x128xf32, #tpu.memory_space<vmem>>, vector<1x128xf32>
    %c0_4 = arith.constant 0 : index
    %c0_5 = arith.constant 0 : index
    %3 = vector.load %arg3[%c0_4, %c0_5] : memref<1x128xf32, #tpu.memory_space<vmem>>, vector<1x128xf32>
    %cst = arith.constant dense<0.000000e+00> : vector<31xf32>
    %4 = vector.multi_reduction <add>, %1, %cst [1] : vector<31x128xf32> to vector<31xf32>
    %5 = vector.shape_cast %4 : vector<31xf32> to vector<31x1xf32>
    %cst_6 = arith.constant 1.280000e+02 : f32
    %6 = vector.broadcast %cst_6 : f32 to vector<31x1xf32>
    %7 = arith.divf %5, %6 : vector<31x1xf32>
    %8 = vector.broadcast %7 : vector<31x1xf32> to vector<31x128xf32>
    %9 = arith.subf %1, %8 : vector<31x128xf32>
    %10 = arith.mulf %9, %9 : vector<31x128xf32>
    %cst_7 = arith.constant dense<0.000000e+00> : vector<31xf32>
    %11 = vector.multi_reduction <add>, %10, %cst_7 [1] : vector<31x128xf32> to vector<31xf32>
    %12 = vector.shape_cast %11 : vector<31xf32> to vector<31x1xf32>
    %cst_8 = arith.constant 1.280000e+02 : f32
    %13 = vector.broadcast %cst_8 : f32 to vector<31x1xf32>
    %14 = arith.divf %12, %13 : vector<31x1xf32>
    %cst_9 = arith.constant 9.99999974E-6 : f32
    %15 = vector.broadcast %cst_9 : f32 to vector<31x1xf32>
    %16 = arith.addf %14, %15 : vector<31x1xf32>
    %17 = math.rsqrt %16 : vector<31x1xf32>
    %18 = vector.broadcast %17 : vector<31x1xf32> to vector<31x128xf32>
    %19 = arith.mulf %9, %18 : vector<31x128xf32>
    %20 = vector.broadcast %2 : vector<1x128xf32> to vector<31x128xf32>
    %21 = arith.mulf %19, %20 : vector<31x128xf32>
    %22 = vector.broadcast %3 : vector<1x128xf32> to vector<31x128xf32>
    %23 = arith.addf %21, %22 : vector<31x128xf32>
    %c0_10 = arith.constant 0 : index
    %c0_11 = arith.constant 0 : index
    %24 = vector.load %arg4[%c0_10, %c0_11] : memref<128x384xf32, #tpu.memory_space<vmem>>, vector<128x384xf32>
    %cst_12 = arith.constant dense<0.000000e+00> : vector<31x384xf32>
    %25 = tpu.matmul %23, %24, %cst_12 {dimension_numbers = #tpu.dot_dimension_numbers<[1], [0], [0], [1], [0, 0, 1, 1], [], []>} : vector<31x128xf32>, vector<128x384xf32>, vector<31x384xf32> -> vector<31x384xf32>
    %26 = vector.extract_strided_slice %25 {offsets = [0, 0], sizes = [31, 128], strides = [1, 1]} : vector<31x384xf32> to vector<31x128xf32>
    %c0_13 = arith.constant 0 : index
    %c0_14 = arith.constant 0 : index
    %27 = vector.load %arg5[%c0_13, %c0_14] : memref<1x128xf32, #tpu.memory_space<vmem>>, vector<1x128xf32>
    %28 = vector.broadcast %27 : vector<1x128xf32> to vector<31x128xf32>
    %29 = arith.mulf %26, %28 : vector<31x128xf32>
    %30 = vector.extract_strided_slice %25 {offsets = [0, 128], sizes = [31, 128], strides = [1, 1]} : vector<31x384xf32> to vector<31x128xf32>
    %31 = vector.extract_strided_slice %25 {offsets = [0, 256], sizes = [31, 128], strides = [1, 1]} : vector<31x384xf32> to vector<31x128xf32>
    %32 = tpu.iota {dimensions = array<i32: 0>} : vector<31x31xi32>
    %33 = tpu.iota {dimensions = array<i32: 1>} : vector<31x31xi32>
    %34 = arith.cmpi eq, %32, %33 : vector<31x31xi32>
    %cst_15 = arith.constant 0.000000e+00 : f32
    %35 = vector.broadcast %cst_15 : f32 to vector<31x128xf32>
    %36 = vector.extract_strided_slice %29 {offsets = [0, 0], sizes = [31, 32], strides = [1, 1]} : vector<31x128xf32> to vector<31x32xf32>
    %37 = vector.extract_strided_slice %30 {offsets = [0, 0], sizes = [31, 32], strides = [1, 1]} : vector<31x128xf32> to vector<31x32xf32>
    %38 = vector.extract_strided_slice %31 {offsets = [0, 0], sizes = [31, 32], strides = [1, 1]} : vector<31x128xf32> to vector<31x32xf32>
    %cst_16 = arith.constant dense<0.000000e+00> : vector<31x31xf32>
    %39 = tpu.matmul %36, %37, %cst_16 {dimension_numbers = #tpu.dot_dimension_numbers<[1], [1], [0], [0], [0, 0, 1, 0], [], []>} : vector<31x32xf32>, vector<31x32xf32>, vector<31x31xf32> -> vector<31x31xf32>
    %cst_17 = arith.constant 0xCE6B79A3 : f32
    %40 = vector.broadcast %cst_17 : f32 to vector<31x31xf32>
    %41 = arith.select %34, %40, %39 : vector<31x31xi1>, vector<31x31xf32>
    %cst_18 = arith.constant dense<0xFF800000> : vector<31xf32>
    %42 = vector.multi_reduction <maximumf>, %41, %cst_18 [1] : vector<31x31xf32> to vector<31xf32>
    %43 = vector.shape_cast %42 : vector<31xf32> to vector<31x1xf32>
    %44 = vector.broadcast %43 : vector<31x1xf32> to vector<31x31xf32>
    %45 = arith.subf %41, %44 : vector<31x31xf32>
    %46 = math.exp %45 : vector<31x31xf32>
    %cst_19 = arith.constant dense<0.000000e+00> : vector<31xf32>
    %47 = vector.multi_reduction <add>, %46, %cst_19 [1] : vector<31x31xf32> to vector<31xf32>
    %48 = vector.shape_cast %47 : vector<31xf32> to vector<31x1xf32>
    %49 = vector.broadcast %48 : vector<31x1xf32> to vector<31x31xf32>
    %50 = arith.divf %46, %49 : vector<31x31xf32>
    %cst_20 = arith.constant dense<0.000000e+00> : vector<31x32xf32>
    %51 = tpu.matmul %50, %38, %cst_20 {dimension_numbers = #tpu.dot_dimension_numbers<[1], [0], [0], [1], [0, 0, 1, 1], [], []>} : vector<31x31xf32>, vector<31x32xf32>, vector<31x32xf32> -> vector<31x32xf32>
    %c0_21 = arith.constant 0 : index
    %c0_22 = arith.constant 0 : index
    %52 = vector.load %arg6[%c0_21, %c0_22] : memref<128x128xf32, #tpu.memory_space<vmem>>, vector<32x128xf32>
    %cst_23 = arith.constant dense<0.000000e+00> : vector<31x128xf32>
    %53 = tpu.matmul %51, %52, %cst_23 {dimension_numbers = #tpu.dot_dimension_numbers<[1], [0], [0], [1], [0, 0, 1, 1], [], []>} : vector<31x32xf32>, vector<32x128xf32>, vector<31x128xf32> -> vector<31x128xf32>
    %54 = arith.addf %35, %53 : vector<31x128xf32>
    %55 = vector.extract_strided_slice %29 {offsets = [0, 32], sizes = [31, 32], strides = [1, 1]} : vector<31x128xf32> to vector<31x32xf32>
    %56 = vector.extract_strided_slice %30 {offsets = [0, 32], sizes = [31, 32], strides = [1, 1]} : vector<31x128xf32> to vector<31x32xf32>
    %57 = vector.extract_strided_slice %31 {offsets = [0, 32], sizes = [31, 32], strides = [1, 1]} : vector<31x128xf32> to vector<31x32xf32>
    %cst_24 = arith.constant dense<0.000000e+00> : vector<31x31xf32>
    %58 = tpu.matmul %55, %56, %cst_24 {dimension_numbers = #tpu.dot_dimension_numbers<[1], [1], [0], [0], [0, 0, 1, 0], [], []>} : vector<31x32xf32>, vector<31x32xf32>, vector<31x31xf32> -> vector<31x31xf32>
    %cst_25 = arith.constant 0xCE6B79A3 : f32
    %59 = vector.broadcast %cst_25 : f32 to vector<31x31xf32>
    %60 = arith.select %34, %59, %58 : vector<31x31xi1>, vector<31x31xf32>
    %cst_26 = arith.constant dense<0xFF800000> : vector<31xf32>
    %61 = vector.multi_reduction <maximumf>, %60, %cst_26 [1] : vector<31x31xf32> to vector<31xf32>
    %62 = vector.shape_cast %61 : vector<31xf32> to vector<31x1xf32>
    %63 = vector.broadcast %62 : vector<31x1xf32> to vector<31x31xf32>
    %64 = arith.subf %60, %63 : vector<31x31xf32>
    %65 = math.exp %64 : vector<31x31xf32>
    %cst_27 = arith.constant dense<0.000000e+00> : vector<31xf32>
    %66 = vector.multi_reduction <add>, %65, %cst_27 [1] : vector<31x31xf32> to vector<31xf32>
    %67 = vector.shape_cast %66 : vector<31xf32> to vector<31x1xf32>
    %68 = vector.broadcast %67 : vector<31x1xf32> to vector<31x31xf32>
    %69 = arith.divf %65, %68 : vector<31x31xf32>
    %cst_28 = arith.constant dense<0.000000e+00> : vector<31x32xf32>
    %70 = tpu.matmul %69, %57, %cst_28 {dimension_numbers = #tpu.dot_dimension_numbers<[1], [0], [0], [1], [0, 0, 1, 1], [], []>} : vector<31x31xf32>, vector<31x32xf32>, vector<31x32xf32> -> vector<31x32xf32>
    %c32 = arith.constant 32 : index
    %c0_29 = arith.constant 0 : index
    %71 = vector.load %arg6[%c32, %c0_29] : memref<128x128xf32, #tpu.memory_space<vmem>>, vector<32x128xf32>
    %cst_30 = arith.constant dense<0.000000e+00> : vector<31x128xf32>
    %72 = tpu.matmul %70, %71, %cst_30 {dimension_numbers = #tpu.dot_dimension_numbers<[1], [0], [0], [1], [0, 0, 1, 1], [], []>} : vector<31x32xf32>, vector<32x128xf32>, vector<31x128xf32> -> vector<31x128xf32>
    %73 = arith.addf %54, %72 : vector<31x128xf32>
    %74 = vector.extract_strided_slice %29 {offsets = [0, 64], sizes = [31, 32], strides = [1, 1]} : vector<31x128xf32> to vector<31x32xf32>
    %75 = vector.extract_strided_slice %30 {offsets = [0, 64], sizes = [31, 32], strides = [1, 1]} : vector<31x128xf32> to vector<31x32xf32>
    %76 = vector.extract_strided_slice %31 {offsets = [0, 64], sizes = [31, 32], strides = [1, 1]} : vector<31x128xf32> to vector<31x32xf32>
    %cst_31 = arith.constant dense<0.000000e+00> : vector<31x31xf32>
    %77 = tpu.matmul %74, %75, %cst_31 {dimension_numbers = #tpu.dot_dimension_numbers<[1], [1], [0], [0], [0, 0, 1, 0], [], []>} : vector<31x32xf32>, vector<31x32xf32>, vector<31x31xf32> -> vector<31x31xf32>
    %cst_32 = arith.constant 0xCE6B79A3 : f32
    %78 = vector.broadcast %cst_32 : f32 to vector<31x31xf32>
    %79 = arith.select %34, %78, %77 : vector<31x31xi1>, vector<31x31xf32>
    %cst_33 = arith.constant dense<0xFF800000> : vector<31xf32>
    %80 = vector.multi_reduction <maximumf>, %79, %cst_33 [1] : vector<31x31xf32> to vector<31xf32>
    %81 = vector.shape_cast %80 : vector<31xf32> to vector<31x1xf32>
    %82 = vector.broadcast %81 : vector<31x1xf32> to vector<31x31xf32>
    %83 = arith.subf %79, %82 : vector<31x31xf32>
    %84 = math.exp %83 : vector<31x31xf32>
    %cst_34 = arith.constant dense<0.000000e+00> : vector<31xf32>
    %85 = vector.multi_reduction <add>, %84, %cst_34 [1] : vector<31x31xf32> to vector<31xf32>
    %86 = vector.shape_cast %85 : vector<31xf32> to vector<31x1xf32>
    %87 = vector.broadcast %86 : vector<31x1xf32> to vector<31x31xf32>
    %88 = arith.divf %84, %87 : vector<31x31xf32>
    %cst_35 = arith.constant dense<0.000000e+00> : vector<31x32xf32>
    %89 = tpu.matmul %88, %76, %cst_35 {dimension_numbers = #tpu.dot_dimension_numbers<[1], [0], [0], [1], [0, 0, 1, 1], [], []>} : vector<31x31xf32>, vector<31x32xf32>, vector<31x32xf32> -> vector<31x32xf32>
    %c64 = arith.constant 64 : index
    %c0_36 = arith.constant 0 : index
    %90 = vector.load %arg6[%c64, %c0_36] : memref<128x128xf32, #tpu.memory_space<vmem>>, vector<32x128xf32>
    %cst_37 = arith.constant dense<0.000000e+00> : vector<31x128xf32>
    %91 = tpu.matmul %89, %90, %cst_37 {dimension_numbers = #tpu.dot_dimension_numbers<[1], [0], [0], [1], [0, 0, 1, 1], [], []>} : vector<31x32xf32>, vector<32x128xf32>, vector<31x128xf32> -> vector<31x128xf32>
    %92 = arith.addf %73, %91 : vector<31x128xf32>
    %93 = vector.extract_strided_slice %29 {offsets = [0, 96], sizes = [31, 32], strides = [1, 1]} : vector<31x128xf32> to vector<31x32xf32>
    %94 = vector.extract_strided_slice %30 {offsets = [0, 96], sizes = [31, 32], strides = [1, 1]} : vector<31x128xf32> to vector<31x32xf32>
    %95 = vector.extract_strided_slice %31 {offsets = [0, 96], sizes = [31, 32], strides = [1, 1]} : vector<31x128xf32> to vector<31x32xf32>
    %cst_38 = arith.constant dense<0.000000e+00> : vector<31x31xf32>
    %96 = tpu.matmul %93, %94, %cst_38 {dimension_numbers = #tpu.dot_dimension_numbers<[1], [1], [0], [0], [0, 0, 1, 0], [], []>} : vector<31x32xf32>, vector<31x32xf32>, vector<31x31xf32> -> vector<31x31xf32>
    %cst_39 = arith.constant 0xCE6B79A3 : f32
    %97 = vector.broadcast %cst_39 : f32 to vector<31x31xf32>
    %98 = arith.select %34, %97, %96 : vector<31x31xi1>, vector<31x31xf32>
    %cst_40 = arith.constant dense<0xFF800000> : vector<31xf32>
    %99 = vector.multi_reduction <maximumf>, %98, %cst_40 [1] : vector<31x31xf32> to vector<31xf32>
    %100 = vector.shape_cast %99 : vector<31xf32> to vector<31x1xf32>
    %101 = vector.broadcast %100 : vector<31x1xf32> to vector<31x31xf32>
    %102 = arith.subf %98, %101 : vector<31x31xf32>
    %103 = math.exp %102 : vector<31x31xf32>
    %cst_41 = arith.constant dense<0.000000e+00> : vector<31xf32>
    %104 = vector.multi_reduction <add>, %103, %cst_41 [1] : vector<31x31xf32> to vector<31xf32>
    %105 = vector.shape_cast %104 : vector<31xf32> to vector<31x1xf32>
    %106 = vector.broadcast %105 : vector<31x1xf32> to vector<31x31xf32>
    %107 = arith.divf %103, %106 : vector<31x31xf32>
    %cst_42 = arith.constant dense<0.000000e+00> : vector<31x32xf32>
    %108 = tpu.matmul %107, %95, %cst_42 {dimension_numbers = #tpu.dot_dimension_numbers<[1], [0], [0], [1], [0, 0, 1, 1], [], []>} : vector<31x31xf32>, vector<31x32xf32>, vector<31x32xf32> -> vector<31x32xf32>
    %c96 = arith.constant 96 : index
    %c0_43 = arith.constant 0 : index
    %109 = vector.load %arg6[%c96, %c0_43] : memref<128x128xf32, #tpu.memory_space<vmem>>, vector<32x128xf32>
    %cst_44 = arith.constant dense<0.000000e+00> : vector<31x128xf32>
    %110 = tpu.matmul %108, %109, %cst_44 {dimension_numbers = #tpu.dot_dimension_numbers<[1], [0], [0], [1], [0, 0, 1, 1], [], []>} : vector<31x32xf32>, vector<32x128xf32>, vector<31x128xf32> -> vector<31x128xf32>
    %111 = arith.addf %92, %110 : vector<31x128xf32>
    %c0_45 = arith.constant 0 : index
    %c0_46 = arith.constant 0 : index
    %112 = vector.load %arg7[%c0_45, %c0_46] : memref<1x128xf32, #tpu.memory_space<vmem>>, vector<1x128xf32>
    %113 = vector.broadcast %112 : vector<1x128xf32> to vector<31x128xf32>
    %114 = arith.addf %111, %113 : vector<31x128xf32>
    %115 = arith.addf %1, %114 : vector<31x128xf32>
    %c0_47 = arith.constant 0 : index
    %c0_48 = arith.constant 0 : index
    %116 = vector.load %arg8[%c0_47, %c0_48] : memref<1x128xf32, #tpu.memory_space<vmem>>, vector<1x128xf32>
    %c0_49 = arith.constant 0 : index
    %c0_50 = arith.constant 0 : index
    %117 = vector.load %arg9[%c0_49, %c0_50] : memref<1x128xf32, #tpu.memory_space<vmem>>, vector<1x128xf32>
    %cst_51 = arith.constant dense<0.000000e+00> : vector<31xf32>
    %118 = vector.multi_reduction <add>, %115, %cst_51 [1] : vector<31x128xf32> to vector<31xf32>
    %119 = vector.shape_cast %118 : vector<31xf32> to vector<31x1xf32>
    %cst_52 = arith.constant 1.280000e+02 : f32
    %120 = vector.broadcast %cst_52 : f32 to vector<31x1xf32>
    %121 = arith.divf %119, %120 : vector<31x1xf32>
    %122 = vector.broadcast %121 : vector<31x1xf32> to vector<31x128xf32>
    %123 = arith.subf %115, %122 : vector<31x128xf32>
    %124 = arith.mulf %123, %123 : vector<31x128xf32>
    %cst_53 = arith.constant dense<0.000000e+00> : vector<31xf32>
    %125 = vector.multi_reduction <add>, %124, %cst_53 [1] : vector<31x128xf32> to vector<31xf32>
    %126 = vector.shape_cast %125 : vector<31xf32> to vector<31x1xf32>
    %cst_54 = arith.constant 1.280000e+02 : f32
    %127 = vector.broadcast %cst_54 : f32 to vector<31x1xf32>
    %128 = arith.divf %126, %127 : vector<31x1xf32>
    %cst_55 = arith.constant 9.99999974E-6 : f32
    %129 = vector.broadcast %cst_55 : f32 to vector<31x1xf32>
    %130 = arith.addf %128, %129 : vector<31x1xf32>
    %131 = math.rsqrt %130 : vector<31x1xf32>
    %132 = vector.broadcast %131 : vector<31x1xf32> to vector<31x128xf32>
    %133 = arith.mulf %123, %132 : vector<31x128xf32>
    %134 = vector.broadcast %116 : vector<1x128xf32> to vector<31x128xf32>
    %135 = arith.mulf %133, %134 : vector<31x128xf32>
    %136 = vector.broadcast %117 : vector<1x128xf32> to vector<31x128xf32>
    %137 = arith.addf %135, %136 : vector<31x128xf32>
    %c0_56 = arith.constant 0 : index
    %c0_57 = arith.constant 0 : index
    %138 = vector.load %arg10[%c0_56, %c0_57] : memref<128x512xf32, #tpu.memory_space<vmem>>, vector<128x512xf32>
    %cst_58 = arith.constant dense<0.000000e+00> : vector<31x512xf32>
    %139 = tpu.matmul %137, %138, %cst_58 {dimension_numbers = #tpu.dot_dimension_numbers<[1], [0], [0], [1], [0, 0, 1, 1], [], []>} : vector<31x128xf32>, vector<128x512xf32>, vector<31x512xf32> -> vector<31x512xf32>
    %c0_59 = arith.constant 0 : index
    %c0_60 = arith.constant 0 : index
    %140 = vector.load %arg11[%c0_59, %c0_60] : memref<1x512xf32, #tpu.memory_space<vmem>>, vector<1x512xf32>
    %141 = vector.broadcast %140 : vector<1x512xf32> to vector<31x512xf32>
    %142 = arith.addf %139, %141 : vector<31x512xf32>
    %143 = arith.mulf %142, %142 : vector<31x512xf32>
    %144 = arith.mulf %142, %143 : vector<31x512xf32>
    %cst_61 = arith.constant 4.471500e-02 : f32
    %145 = vector.broadcast %cst_61 : f32 to vector<31x512xf32>
    %146 = arith.mulf %145, %144 : vector<31x512xf32>
    %147 = arith.addf %142, %146 : vector<31x512xf32>
    %cst_62 = arith.constant 0.797884583 : f32
    %148 = vector.broadcast %cst_62 : f32 to vector<31x512xf32>
    %149 = arith.mulf %148, %147 : vector<31x512xf32>
    %150 = math.tanh %149 : vector<31x512xf32>
    %cst_63 = arith.constant 1.000000e+00 : f32
    %151 = vector.broadcast %cst_63 : f32 to vector<31x512xf32>
    %152 = arith.addf %151, %150 : vector<31x512xf32>
    %cst_64 = arith.constant 5.000000e-01 : f32
    %153 = vector.broadcast %cst_64 : f32 to vector<31x512xf32>
    %154 = arith.mulf %153, %152 : vector<31x512xf32>
    %155 = arith.mulf %142, %154 : vector<31x512xf32>
    %c0_65 = arith.constant 0 : index
    %c0_66 = arith.constant 0 : index
    %156 = vector.load %arg12[%c0_65, %c0_66] : memref<512x128xf32, #tpu.memory_space<vmem>>, vector<512x128xf32>
    %cst_67 = arith.constant dense<0.000000e+00> : vector<31x128xf32>
    %157 = tpu.matmul %155, %156, %cst_67 {dimension_numbers = #tpu.dot_dimension_numbers<[1], [0], [0], [1], [0, 0, 1, 1], [], []>} : vector<31x512xf32>, vector<512x128xf32>, vector<31x128xf32> -> vector<31x128xf32>
    %c0_68 = arith.constant 0 : index
    %c0_69 = arith.constant 0 : index
    %158 = vector.load %arg13[%c0_68, %c0_69] : memref<1x128xf32, #tpu.memory_space<vmem>>, vector<1x128xf32>
    %159 = vector.broadcast %158 : vector<1x128xf32> to vector<31x128xf32>
    %160 = arith.addf %157, %159 : vector<31x128xf32>
    %161 = arith.addf %115, %160 : vector<31x128xf32>
    %c0_70 = arith.constant 0 : index
    %c0_71 = arith.constant 0 : index
    %c0_72 = arith.constant 0 : index
    %162 = vector.load %arg14[%c0_70, %c0_71, %c0_72] : memref<1x31x128xf32, #tpu.memory_space<vmem>>, vector<1x31x128xf32>
    %163 = vector.shape_cast %162 : vector<1x31x128xf32> to vector<31x128xf32>
    %164 = vector.shape_cast %161 : vector<31x128xf32> to vector<1x31x128xf32>
    tpu.vector_store %arg14[%c0_70, %c0_71, %c0_72], %164 {strides = array<i32>} : memref<1x31x128xf32, #tpu.memory_space<vmem>>, vector<1x31x128xf32>,
    return
  }
  func.func @transform_0(%arg0: i32) -> (i32, i32, i32) {
    %c0_i32 = arith.constant 0 : i32
    %c0_i32_0 = arith.constant 0 : i32
    %c0_i32_1 = arith.constant 0 : i32
    return %arg0, %c0_i32, %c0_i32_0 : i32, i32, i32
  }
  func.func @transform_1(%arg0: i32) -> (i32, i32) {
    %c0_i32 = arith.constant 0 : i32
    %c0_i32_0 = arith.constant 0 : i32
    %c0_i32_1 = arith.constant 0 : i32
    return %c0_i32, %c0_i32_0 : i32, i32
  }
  func.func @transform_2(%arg0: i32) -> (i32, i32) {
    %c0_i32 = arith.constant 0 : i32
    %c0_i32_0 = arith.constant 0 : i32
    %c0_i32_1 = arith.constant 0 : i32
    return %c0_i32, %c0_i32_0 : i32, i32
  }
  func.func @transform_3(%arg0: i32) -> (i32, i32) {
    %c0_i32 = arith.constant 0 : i32
    %c0_i32_0 = arith.constant 0 : i32
    %c0_i32_1 = arith.constant 0 : i32
    return %c0_i32, %c0_i32_0 : i32, i32
  }
  func.func @transform_4(%arg0: i32) -> (i32, i32) {
    %c0_i32 = arith.constant 0 : i32
    %c0_i32_0 = arith.constant 0 : i32
    %c0_i32_1 = arith.constant 0 : i32
    return %c0_i32, %c0_i32_0 : i32, i32
  }
  func.func @transform_5(%arg0: i32) -> (i32, i32) {
    %c0_i32 = arith.constant 0 : i32
    %c0_i32_0 = arith.constant 0 : i32
    %c0_i32_1 = arith.constant 0 : i32
    return %c0_i32, %c0_i32_0 : i32, i32
  }
  func.func @transform_6(%arg0: i32) -> (i32, i32) {
    %c0_i32 = arith.constant 0 : i32
    %c0_i32_0 = arith.constant 0 : i32
    %c0_i32_1 = arith.constant 0 : i32
    return %c0_i32, %c0_i32_0 : i32, i32
  }
  func.func @transform_7(%arg0: i32) -> (i32, i32) {
    %c0_i32 = arith.constant 0 : i32
    %c0_i32_0 = arith.constant 0 : i32
    %c0_i32_1 = arith.constant 0 : i32
    return %c0_i32, %c0_i32_0 : i32, i32
  }
  func.func @transform_8(%arg0: i32) -> (i32, i32) {
    %c0_i32 = arith.constant 0 : i32
    %c0_i32_0 = arith.constant 0 : i32
    %c0_i32_1 = arith.constant 0 : i32
    return %c0_i32, %c0_i32_0 : i32, i32
  }
  func.func @transform_9(%arg0: i32) -> (i32, i32) {
    %c0_i32 = arith.constant 0 : i32
    %c0_i32_0 = arith.constant 0 : i32
    %c0_i32_1 = arith.constant 0 : i32
    return %c0_i32, %c0_i32_0 : i32, i32
  }
  func.func @transform_10(%arg0: i32) -> (i32, i32) {
    %c0_i32 = arith.constant 0 : i32
    %c0_i32_0 = arith.constant 0 : i32
    %c0_i32_1 = arith.constant 0 : i32
    return %c0_i32, %c0_i32_0 : i32, i32
  }
  func.func @transform_11(%arg0: i32) -> (i32, i32) {
    %c0_i32 = arith.constant 0 : i32
    %c0_i32_0 = arith.constant 0 : i32
    %c0_i32_1 = arith.constant 0 : i32
    return %c0_i32, %c0_i32_0 : i32, i32
  }
  func.func @transform_12(%arg0: i32) -> (i32, i32) {
    %c0_i32 = arith.constant 0 : i32
    %c0_i32_0 = arith.constant 0 : i32
    %c0_i32_1 = arith.constant 0 : i32
    return %c0_i32, %c0_i32_0 : i32, i32
  }
  func.func @transform_13(%arg0: i32) -> (i32, i32, i32) {
    %c0_i32 = arith.constant 0 : i32
    %c0_i32_0 = arith.constant 0 : i32
    %c0_i32_1 = arith.constant 0 : i32
    return %arg0, %c0_i32, %c0_i32_0 : i32, i32, i32
  }
}

</mosaic_0001>

<llo_original>
// kernel: tpu_custom_call.1
$region0: #{tpu_custom_call.1}
  #allocation0 [shape = 'u32[]', space=smem, size = 0x4, offset = 0x4, fixed_abs, tag = 'smem constant byte address 0x4 - core index']
  #allocation1 [shape = 'u32[144,128]{1,0:T(1,128)}', space=vmem, size = 0x12000, scoped, tag = 'internal scratch']
  %s0 = inlined_call_operand.vmem [shape: f32[2,31,128], index: 0, kind: input, shape index: {}]
  %s1 = inlined_call_operand.vmem [shape: f32[1,128], index: 1, kind: input, shape index: {}]
  %s2 = inlined_call_operand.vmem [shape: f32[1,128], index: 2, kind: input, shape index: {}]
  %s3 = inlined_call_operand.hbm [shape: f32[128,384], index: 3, kind: input, shape index: {}]
  %s4 = inlined_call_operand.vmem [shape: f32[1,128], index: 4, kind: input, shape index: {}]
  %s5 = inlined_call_operand.vmem [shape: f32[128,128], index: 5, kind: input, shape index: {}]
  %s6 = inlined_call_operand.vmem [shape: f32[1,128], index: 6, kind: input, shape index: {}]
  %s7 = inlined_call_operand.vmem [shape: f32[1,128], index: 7, kind: input, shape index: {}]
  %s8 = inlined_call_operand.vmem [shape: f32[1,128], index: 8, kind: input, shape index: {}]
  %s9 = inlined_call_operand.hbm [shape: f32[128,512], index: 9, kind: input, shape index: {}]
  %s10 = inlined_call_operand.vmem [shape: f32[1,512], index: 10, kind: input, shape index: {}]
  %s11 = inlined_call_operand.hbm [shape: f32[512,128], index: 11, kind: input, shape index: {}]
  %s12 = inlined_call_operand.vmem [shape: f32[1,128], index: 12, kind: input, shape index: {}]
  %s13 = inlined_call_operand.vmem [shape: f32[2,31,128], index: 13, kind: output, shape index: {}]
  %s14 = sld [smem:[#allocation0]]
  $region97: #{tpu_custom_call.1} parent=0
    _
  %s16 = ssub.s32 1, %s14
  %s17 = scalar_select 0, %s16, %s14
  $region1: #{tpu_custom_call.1} parent=0
    #allocation2 [shape = 'u8[196608]{0}', space=vmem, size = 0x30000, scoped, tag = 'input window, operand 3, single buffered']
    #allocation3 [shape = 's32[2]{0}', space=sflag, size = 0x8, scoped, tag = 'scoped memory for tpu_custom_call.1']
    #allocation4 [shape = 'u8[262144]{0}', space=vmem, size = 0x40000, scoped, tag = 'input window, operand 9, single buffered']
    #allocation5 [shape = 's32[1]{0}', space=sflag, size = 0x4, scoped, tag = 'scoped memory for tpu_custom_call.1']
    #allocation6 [shape = 'u8[262144]{0}', space=vmem, size = 0x40000, scoped, tag = 'input window, operand 11, single buffered']
    %18 = vsyncpa [#allocation3], 0
    %19 = vsyncpa [#allocation5], 0
    loop: start=0, step=1, limit=4
    $region2: #{tpu_custom_call.1} parent=1 // loop_pre_header
      _
    $region3: #{tpu_custom_call.1} parent=1 // loop_header
      %s21 = sphi 0, %s25
      %p22 = scmp.ge.s32.totalorder %s21, 4
      %s31 = sphi 0, %s33
      %s34 = sphi 0, %s31
      %s35 = sphi 0, %s34
      %s51 = sphi 0, %s35
      %s55 = sphi 0, %s55
      %s57 = sphi 0, %s55
      %s58 = sphi 0, %s57
      %s72 = sphi 0, %s58
      %s76 = sphi 0, %s76
      %s78 = sphi 0, %s76
      %s79 = sphi 0, %s78
      %s93 = sphi 0, %s79
      %s97 = sphi 0, %s97
      %s99 = sphi 0, %s97
      %s100 = sphi 0, %s99
      %s114 = sphi 0, %s100
      %s118 = sphi 0, %s118
      %s120 = sphi 0, %s118
      %s121 = sphi 0, %s120
      %s135 = sphi 0, %s121
      %s139 = sphi 0, %s139
      %s141 = sphi 0, %s139
      %s142 = sphi 0, %s141
      %s156 = sphi 0, %s142
      %s160 = sphi 0, %s160
      %s162 = sphi 0, %s160
      %s163 = sphi 0, %s162
      %s177 = sphi 0, %s163
      %s181 = sphi 0, %s181
      %s183 = sphi 0, %s181
      %s184 = sphi 0, %s183
      %s198 = sphi 0, %s184
      %s202 = sphi 0, %s202
      %s204 = sphi 0, %s202
      %s205 = sphi 0, %s204
      %s219 = sphi 0, %s205
      %s223 = sphi 0, %s223
      %s225 = sphi 0, %s223
      %s226 = sphi 0, %s225
      %s240 = sphi 0, %s226
      %s244 = sphi 0, %s244
      %s246 = sphi 0, %s244
      %s247 = sphi 0, %s246
      %s261 = sphi 0, %s247
      %s265 = sphi 0, %s265
      %s267 = sphi 0, %s265
      %s268 = sphi 0, %s267
      %s282 = sphi 0, %s268
      %s286 = sphi 0, %s286
      %s288 = sphi 0, %s286
      %s289 = sphi 0, %s288
      %s303 = sphi 0, %s289
      %s309 = sphi 0, %s311
      %s312 = sphi 0, %s309
      %s313 = sphi 0, %s312
      %s329 = sphi 0, %s313
    $region4: #{tpu_custom_call.1} parent=1 // loop_header_branch
      %24 = sbr.rel (%p22) target = $region8
    $region5: #{tpu_custom_call.1} parent=1 // loop_body
      %s26 = ssub.s32 %s21, 1
      %s27 = ssub.s32 %s21, 2
      %s28 = sadd.s32 %s21, 1
      %s29 = ssub.s32 %s21, %s28
      %p30 = scmp.eq.s32.totalorder %s29, 0
      %s32 = sadd.s32 %s31, 1
      %s33 = scalar_select %p30, %s31, %s32
      %p36 = pneg %p30
      %p37 = scmp.eq.s32.totalorder %s21, 1
      %p38 = por %p36, %p37
      %p39 = scmp.ne.s32.totalorder %s31, %s34
      %p40 = scmp.eq.s32.totalorder %s21, 0
      %p41 = por %p39, %p40
      %p42 = scmp.ne.s32.totalorder %s31, %s34
      %p43 = scmp.eq.s32.totalorder %s26, 1
      %p44 = por %p42, %p43
      %p45 = scmp.ne.s32.totalorder %s34, %s35
      %p46 = scmp.eq.s32.totalorder %s26, 0
      %p47 = por %p45, %p46
      %p48 = scmp.ne.s32.totalorder %s34, %s35
      %p49 = scmp.eq.s32.totalorder %s27, 1
      %p50 = por %p48, %p49
      %p52 = scmp.ne.s32.totalorder %s35, %s51
      %p53 = scmp.eq.s32.totalorder %s27, 0
      %p54 = por %p52, %p53
      %s56 = sadd.s32 %s55, 1
      %p59 = scmp.eq.s32.totalorder %s21, 1
      %p60 = scmp.ne.s32.totalorder %s55, %s57
      %p61 = scmp.eq.s32.totalorder %s21, 0
      %p62 = por %p60, %p61
      %p63 = scmp.ne.s32.totalorder %s55, %s57
      %p64 = scmp.eq.s32.totalorder %s26, 1
      %p65 = por %p63, %p64
      %p66 = scmp.ne.s32.totalorder %s57, %s58
      %p67 = scmp.eq.s32.totalorder %s26, 0
      %p68 = por %p66, %p67
      %p69 = scmp.ne.s32.totalorder %s57, %s58
      %p70 = scmp.eq.s32.totalorder %s27, 1
      %p71 = por %p69, %p70
      %p73 = scmp.ne.s32.totalorder %s58, %s72
      %p74 = scmp.eq.s32.totalorder %s27, 0
      %p75 = por %p73, %p74
      %s77 = sadd.s32 %s76, 1
      %p80 = scmp.eq.s32.totalorder %s21, 1
      %p81 = scmp.ne.s32.totalorder %s76, %s78
      %p82 = scmp.eq.s32.totalorder %s21, 0
      %p83 = por %p81, %p82
      %p84 = scmp.ne.s32.totalorder %s76, %s78
      %p85 = scmp.eq.s32.totalorder %s26, 1
      %p86 = por %p84, %p85
      %p87 = scmp.ne.s32.totalorder %s78, %s79
      %p88 = scmp.eq.s32.totalorder %s26, 0
      %p89 = por %p87, %p88
      %p90 = scmp.ne.s32.totalorder %s78, %s79
      %p91 = scmp.eq.s32.totalorder %s27, 1
      %p92 = por %p90, %p91
      %p94 = scmp.ne.s32.totalorder %s79, %s93
      %p95 = scmp.eq.s32.totalorder %s27, 0
      %p96 = por %p94, %p95
      %s98 = sadd.s32 %s97, 1
      %p101 = scmp.eq.s32.totalorder %s21, 1
      %p102 = scmp.ne.s32.totalorder %s97, %s99
      %p103 = scmp.eq.s32.totalorder %s21, 0
      %p104 = por %p102, %p103
      %p105 = scmp.ne.s32.totalorder %s97, %s99
      %p106 = scmp.eq.s32.totalorder %s26, 1
      %p107 = por %p105, %p106
      %p108 = scmp.ne.s32.totalorder %s99, %s100
      %p109 = scmp.eq.s32.totalorder %s26, 0
      %p110 = por %p108, %p109
      %p111 = scmp.ne.s32.totalorder %s99, %s100
      %p112 = scmp.eq.s32.totalorder %s27, 1
      %p113 = por %p111, %p112
      %p115 = scmp.ne.s32.totalorder %s100, %s114
      %p116 = scmp.eq.s32.totalorder %s27, 0
      %p117 = por %p115, %p116
      %s119 = sadd.s32 %s118, 1
      %p122 = scmp.eq.s32.totalorder %s21, 1
      %p123 = scmp.ne.s32.totalorder %s118, %s120
      %p124 = scmp.eq.s32.totalorder %s21, 0
      %p125 = por %p123, %p124
      %p126 = scmp.ne.s32.totalorder %s118, %s120
      %p127 = scmp.eq.s32.totalorder %s26, 1
      %p128 = por %p126, %p127
      %p129 = scmp.ne.s32.totalorder %s120, %s121
      %p130 = scmp.eq.s32.totalorder %s26, 0
      %p131 = por %p129, %p130
      %p132 = scmp.ne.s32.totalorder %s120, %s121
      %p133 = scmp.eq.s32.totalorder %s27, 1
      %p134 = por %p132, %p133
      %p136 = scmp.ne.s32.totalorder %s121, %s135
      %p137 = scmp.eq.s32.totalorder %s27, 0
      %p138 = por %p136, %p137
      %s140 = sadd.s32 %s139, 1
      %p143 = scmp.eq.s32.totalorder %s21, 1
      %p144 = scmp.ne.s32.totalorder %s139, %s141
      %p145 = scmp.eq.s32.totalorder %s21, 0
      %p146 = por %p144, %p145
      %p147 = scmp.ne.s32.totalorder %s139, %s141
      %p148 = scmp.eq.s32.totalorder %s26, 1
      %p149 = por %p147, %p148
      %p150 = scmp.ne.s32.totalorder %s141, %s142
      %p151 = scmp.eq.s32.totalorder %s26, 0
      %p152 = por %p150, %p151
      %p153 = scmp.ne.s32.totalorder %s141, %s142
      %p154 = scmp.eq.s32.totalorder %s27, 1
      %p155 = por %p153, %p154
      %p157 = scmp.ne.s32.totalorder %s142, %s156
      %p158 = scmp.eq.s32.totalorder %s27, 0
      %p159 = por %p157, %p158
      %s161 = sadd.s32 %s160, 1
      %p164 = scmp.eq.s32.totalorder %s21, 1
      %p165 = scmp.ne.s32.totalorder %s160, %s162
      %p166 = scmp.eq.s32.totalorder %s21, 0
      %p167 = por %p165, %p166
      %p168 = scmp.ne.s32.totalorder %s160, %s162
      %p169 = scmp.eq.s32.totalorder %s26, 1
      %p170 = por %p168, %p169
      %p171 = scmp.ne.s32.totalorder %s162, %s163
      %p172 = scmp.eq.s32.totalorder %s26, 0
      %p173 = por %p171, %p172
      %p174 = scmp.ne.s32.totalorder %s162, %s163
      %p175 = scmp.eq.s32.totalorder %s27, 1
      %p176 = por %p174, %p175
      %p178 = scmp.ne.s32.totalorder %s163, %s177
      %p179 = scmp.eq.s32.totalorder %s27, 0
      %p180 = por %p178, %p179
      %s182 = sadd.s32 %s181, 1
      %p185 = scmp.eq.s32.totalorder %s21, 1
      %p186 = scmp.ne.s32.totalorder %s181, %s183
      %p187 = scmp.eq.s32.totalorder %s21, 0
      %p188 = por %p186, %p187
      %p189 = scmp.ne.s32.totalorder %s181, %s183
      %p190 = scmp.eq.s32.totalorder %s26, 1
      %p191 = por %p189, %p190
      %p192 = scmp.ne.s32.totalorder %s183, %s184
      %p193 = scmp.eq.s32.totalorder %s26, 0
      %p194 = por %p192, %p193
      %p195 = scmp.ne.s32.totalorder %s183, %s184
      %p196 = scmp.eq.s32.totalorder %s27, 1
      %p197 = por %p195, %p196
      %p199 = scmp.ne.s32.totalorder %s184, %s198
      %p200 = scmp.eq.s32.totalorder %s27, 0
      %p201 = por %p199, %p200
      %s203 = sadd.s32 %s202, 1
      %p206 = scmp.eq.s32.totalorder %s21, 1
      %p207 = scmp.ne.s32.totalorder %s202, %s204
      %p208 = scmp.eq.s32.totalorder %s21, 0
      %p209 = por %p207, %p208
      %p210 = scmp.ne.s32.totalorder %s202, %s204
      %p211 = scmp.eq.s32.totalorder %s26, 1
      %p212 = por %p210, %p211
      %p213 = scmp.ne.s32.totalorder %s204, %s205
      %p214 = scmp.eq.s32.totalorder %s26, 0
      %p215 = por %p213, %p214
      %p216 = scmp.ne.s32.totalorder %s204, %s205
      %p217 = scmp.eq.s32.totalorder %s27, 1
      %p218 = por %p216, %p217
      %p220 = scmp.ne.s32.totalorder %s205, %s219
      %p221 = scmp.eq.s32.totalorder %s27, 0
      %p222 = por %p220, %p221
      %s224 = sadd.s32 %s223, 1
      %p227 = scmp.eq.s32.totalorder %s21, 1
      %p228 = scmp.ne.s32.totalorder %s223, %s225
      %p229 = scmp.eq.s32.totalorder %s21, 0
      %p230 = por %p228, %p229
      %p231 = scmp.ne.s32.totalorder %s223, %s225
      %p232 = scmp.eq.s32.totalorder %s26, 1
      %p233 = por %p231, %p232
      %p234 = scmp.ne.s32.totalorder %s225, %s226
      %p235 = scmp.eq.s32.totalorder %s26, 0
      %p236 = por %p234, %p235
      %p237 = scmp.ne.s32.totalorder %s225, %s226
      %p238 = scmp.eq.s32.totalorder %s27, 1
      %p239 = por %p237, %p238
      %p241 = scmp.ne.s32.totalorder %s226, %s240
      %p242 = scmp.eq.s32.totalorder %s27, 0
      %p243 = por %p241, %p242
      %s245 = sadd.s32 %s244, 1
      %p248 = scmp.eq.s32.totalorder %s21, 1
      %p249 = scmp.ne.s32.totalorder %s244, %s246
      %p250 = scmp.eq.s32.totalorder %s21, 0
      %p251 = por %p249, %p250
      %p252 = scmp.ne.s32.totalorder %s244, %s246
      %p253 = scmp.eq.s32.totalorder %s26, 1
      %p254 = por %p252, %p253
      %p255 = scmp.ne.s32.totalorder %s246, %s247
      %p256 = scmp.eq.s32.totalorder %s26, 0
      %p257 = por %p255, %p256
      %p258 = scmp.ne.s32.totalorder %s246, %s247
      %p259 = scmp.eq.s32.totalorder %s27, 1
      %p260 = por %p258, %p259
      %p262 = scmp.ne.s32.totalorder %s247, %s261
      %p263 = scmp.eq.s32.totalorder %s27, 0
      %p264 = por %p262, %p263
      %s266 = sadd.s32 %s265, 1
      %p269 = scmp.eq.s32.totalorder %s21, 1
      %p270 = scmp.ne.s32.totalorder %s265, %s267
      %p271 = scmp.eq.s32.totalorder %s21, 0
      %p272 = por %p270, %p271
      %p273 = scmp.ne.s32.totalorder %s265, %s267
      %p274 = scmp.eq.s32.totalorder %s26, 1
      %p275 = por %p273, %p274
      %p276 = scmp.ne.s32.totalorder %s267, %s268
      %p277 = scmp.eq.s32.totalorder %s26, 0
      %p278 = por %p276, %p277
      %p279 = scmp.ne.s32.totalorder %s267, %s268
      %p280 = scmp.eq.s32.totalorder %s27, 1
      %p281 = por %p279, %p280
      %p283 = scmp.ne.s32.totalorder %s268, %s282
      %p284 = scmp.eq.s32.totalorder %s27, 0
      %p285 = por %p283, %p284
      %s287 = sadd.s32 %s286, 1
      %p290 = scmp.eq.s32.totalorder %s21, 1
      %p291 = scmp.ne.s32.totalorder %s286, %s288
      %p292 = scmp.eq.s32.totalorder %s21, 0
      %p293 = por %p291, %p292
      %p294 = scmp.ne.s32.totalorder %s286, %s288
      %p295 = scmp.eq.s32.totalorder %s26, 1
      %p296 = por %p294, %p295
      %p297 = scmp.ne.s32.totalorder %s288, %s289
      %p298 = scmp.eq.s32.totalorder %s26, 0
      %p299 = por %p297, %p298
      %p300 = scmp.ne.s32.totalorder %s288, %s289
      %p301 = scmp.eq.s32.totalorder %s27, 1
      %p302 = por %p300, %p301
      %p304 = scmp.ne.s32.totalorder %s289, %s303
      %p305 = scmp.eq.s32.totalorder %s27, 0
      %p306 = por %p304, %p305
      %s307 = ssub.s32 %s21, %s28
      %p308 = scmp.eq.s32.totalorder %s307, 0
      %s310 = sadd.s32 %s309, 1
      %s311 = scalar_select %p308, %s309, %s310
      %p314 = pneg %p308
      %p315 = scmp.eq.s32.totalorder %s21, 1
      %p316 = por %p314, %p315
      %p317 = scmp.ne.s32.totalorder %s309, %s312
      %p318 = scmp.eq.s32.totalorder %s21, 0
      %p319 = por %p317, %p318
      %p320 = scmp.ne.s32.totalorder %s309, %s312
      %p321 = scmp.eq.s32.totalorder %s26, 1
      %p322 = por %p320, %p321
      %p323 = scmp.ne.s32.totalorder %s312, %s313
      %p324 = scmp.eq.s32.totalorder %s26, 0
      %p325 = por %p323, %p324
      %p326 = scmp.ne.s32.totalorder %s312, %s313
      %p327 = scmp.eq.s32.totalorder %s27, 1
      %p328 = por %p326, %p327
      %p330 = scmp.ne.s32.totalorder %s313, %s329
      %p331 = scmp.eq.s32.totalorder %s27, 0
      %p332 = por %p330, %p331
      %p333 = scmp.le.s32.totalorder 1, %s21
      %p334 = scmp.lt.s32.totalorder %s21, 3
      %p335 = pnand %p333, %p334
      %p336 = pneg %p335
      // Predicated region
      $region9: #{tpu_custom_call.1} parent=5 // pred_check
        _
      $region10: #{tpu_custom_call.1} parent=5 // pred_check_branch
        %338 = sbr.rel (%p335) target = $region12
      $region11: #{tpu_custom_call.1} parent=5 // pred_region
        %s339 = ssub.s32 %s21, 1
        // Predicated region
        $region13: #{tpu_custom_call.1} parent=11 // pred_check
          %p340 = pneg %p68
        $region14: #{tpu_custom_call.1} parent=11 // pred_check_branch
          %342 = sbr.rel (%p340) target = $region16
        $region15: #{tpu_custom_call.1} parent=11 // pred_region
          _
        $region16: #{tpu_custom_call.1} parent=11 // pred_fallthru
          _
        // Predicated region
        $region17: #{tpu_custom_call.1} parent=11 // pred_check
          %p343 = pneg %p89
        $region18: #{tpu_custom_call.1} parent=11 // pred_check_branch
          %345 = sbr.rel (%p343) target = $region20
        $region19: #{tpu_custom_call.1} parent=11 // pred_region
          _
        $region20: #{tpu_custom_call.1} parent=11 // pred_fallthru
          _
        // Predicated region
        $region21: #{tpu_custom_call.1} parent=11 // pred_check
          %p346 = pneg %p110
        $region22: #{tpu_custom_call.1} parent=11 // pred_check_branch
          %348 = sbr.rel (%p346) target = $region24
        $region23: #{tpu_custom_call.1} parent=11 // pred_region
          %s350 = ssub.s32 6144, 6144
          %351 = vsyncadd [#allocation3], %s350
          %s352 = sshll.u32 [#allocation2], 4
          %s353 = int_to_ptr.vmem [resolvable:$true] %s352
          %358 = dma.hbm_to_vmem [thread:$0]  %s3, 6144, %s353, [#allocation3], 384, 384, 24
        $region24: #{tpu_custom_call.1} parent=11 // pred_fallthru
          _
        // Predicated region
        $region25: #{tpu_custom_call.1} parent=11 // pred_check
          %p359 = pneg %p131
        $region26: #{tpu_custom_call.1} parent=11 // pred_check_branch
          %361 = sbr.rel (%p359) target = $region28
        $region27: #{tpu_custom_call.1} parent=11 // pred_region
          _
        $region28: #{tpu_custom_call.1} parent=11 // pred_fallthru
          _
        // Predicated region
        $region29: #{tpu_custom_call.1} parent=11 // pred_check
          %p362 = pneg %p152
        $region30: #{tpu_custom_call.1} parent=11 // pred_check_branch
          %364 = sbr.rel (%p362) target = $region32
        $region31: #{tpu_custom_call.1} parent=11 // pred_region
          _
        $region32: #{tpu_custom_call.1} parent=11 // pred_fallthru
          _
        // Predicated region
        $region33: #{tpu_custom_call.1} parent=11 // pred_check
          %p365 = pneg %p173
        $region34: #{tpu_custom_call.1} parent=11 // pred_check_branch
          %367 = sbr.rel (%p365) target = $region36
        $region35: #{tpu_custom_call.1} parent=11 // pred_region
          _
        $region36: #{tpu_custom_call.1} parent=11 // pred_fallthru
          _
        // Predicated region
        $region37: #{tpu_custom_call.1} parent=11 // pred_check
          %p368 = pneg %p194
        $region38: #{tpu_custom_call.1} parent=11 // pred_check_branch
          %370 = sbr.rel (%p368) target = $region40
        $region39: #{tpu_custom_call.1} parent=11 // pred_region
          _
        $region40: #{tpu_custom_call.1} parent=11 // pred_fallthru
          _
        // Predicated region
        $region41: #{tpu_custom_call.1} parent=11 // pred_check
          %p371 = pneg %p215
        $region42: #{tpu_custom_call.1} parent=11 // pred_check_branch
          %373 = sbr.rel (%p371) target = $region44
        $region43: #{tpu_custom_call.1} parent=11 // pred_region
          _
        $region44: #{tpu_custom_call.1} parent=11 // pred_fallthru
          _
        // Predicated region
        $region45: #{tpu_custom_call.1} parent=11 // pred_check
          %p374 = pneg %p236
        $region46: #{tpu_custom_call.1} parent=11 // pred_check_branch
          %376 = sbr.rel (%p374) target = $region48
        $region47: #{tpu_custom_call.1} parent=11 // pred_region
          %s378 = ssub.s32 8192, 8192
          %379 = vsyncadd [#allocation5], %s378
          %s380 = sshll.u32 [#allocation4], 4
          %s381 = int_to_ptr.vmem [resolvable:$true] %s380
          %386 = dma.hbm_to_vmem [thread:$0]  %s9, 8192, %s381, [#allocation5], 512, 512, 32
        $region48: #{tpu_custom_call.1} parent=11 // pred_fallthru
          _
        // Predicated region
        $region49: #{tpu_custom_call.1} parent=11 // pred_check
          %p387 = pneg %p257
        $region50: #{tpu_custom_call.1} parent=11 // pred_check_branch
          %389 = sbr.rel (%p387) target = $region52
        $region51: #{tpu_custom_call.1} parent=11 // pred_region
          _
        $region52: #{tpu_custom_call.1} parent=11 // pred_fallthru
          _
        // Predicated region
        $region53: #{tpu_custom_call.1} parent=11 // pred_check
          %p390 = pneg %p278
        $region54: #{tpu_custom_call.1} parent=11 // pred_check_branch
          %392 = sbr.rel (%p390) target = $region56
        $region55: #{tpu_custom_call.1} parent=11 // pred_region
          %s394 = ssub.s32 8192, 8192
          %395 = vsyncadd [#allocation5], %s394
          %s396 = sshll.u32 [#allocation6], 4
          %s397 = int_to_ptr.vmem [resolvable:$true] %s396
          %402 = dma.hbm_to_vmem [thread:$0]  %s11, 8192, %s397, [#allocation5], 128, 128, 8
        $region56: #{tpu_custom_call.1} parent=11 // pred_fallthru
          _
        // Predicated region
        $region57: #{tpu_custom_call.1} parent=11 // pred_check
          %p403 = pneg %p299
        $region58: #{tpu_custom_call.1} parent=11 // pred_check_branch
          %405 = sbr.rel (%p403) target = $region60
        $region59: #{tpu_custom_call.1} parent=11 // pred_region
          _
        $region60: #{tpu_custom_call.1} parent=11 // pred_fallthru
          _
      $region12: #{tpu_custom_call.1} parent=5 // pred_fallthru
        _
      %p406 = scmp.lt.s32.totalorder %s21, 2
      // Predicated region
      $region61: #{tpu_custom_call.1} parent=5 // pred_check
        %p407 = pneg %p406
      $region62: #{tpu_custom_call.1} parent=5 // pred_check_branch
        %409 = sbr.rel (%p407) target = $region64
      $region63: #{tpu_custom_call.1} parent=5 // pred_region
        // Predicated region
        $region65: #{tpu_custom_call.1} parent=63 // pred_check
          %p410 = pneg %p41
        $region66: #{tpu_custom_call.1} parent=63 // pred_check_branch
          %412 = sbr.rel (%p410) target = $region68
        $region67: #{tpu_custom_call.1} parent=63 // pred_region
          %p413 = scmp.lt.s32.totalorder %s21, 1
          %s414 = scalar_select %p413, %s21, 1
          %s415 = smul.addr %s414, 4
          %s416 = smul.addr %s415, 8
          %s417 = scalar_lea.vmem %s0, %s416
        $region68: #{tpu_custom_call.1} parent=63 // pred_fallthru
          _
      $region64: #{tpu_custom_call.1} parent=5 // pred_fallthru
        _
      %p418 = scmp.le.s32.totalorder 1, %s21
      %p419 = scmp.lt.s32.totalorder %s21, 3
      %p420 = pnand %p418, %p419
      %p421 = pneg %p420
      // Predicated region
      $region69: #{tpu_custom_call.1} parent=5 // pred_check
        _
      $region70: #{tpu_custom_call.1} parent=5 // pred_check_branch
        %423 = sbr.rel (%p420) target = $region72
      $region71: #{tpu_custom_call.1} parent=5 // pred_region
        %s424 = ssub.s32 %s21, 1
        // Predicated region
        $region73: #{tpu_custom_call.1} parent=71 // pred_check
          %p425 = pneg %p110
        $region74: #{tpu_custom_call.1} parent=71 // pred_check_branch
          %427 = sbr.rel (%p425) target = $region76
        $region75: #{tpu_custom_call.1} parent=71 // pred_region
          %428 = dma.done [#allocation3], 6144
        $region76: #{tpu_custom_call.1} parent=71 // pred_fallthru
          _
        // Predicated region
        $region77: #{tpu_custom_call.1} parent=71 // pred_check
          %p429 = pneg %p236
        $region78: #{tpu_custom_call.1} parent=71 // pred_check_branch
          %431 = sbr.rel (%p429) target = $region80
        $region79: #{tpu_custom_call.1} parent=71 // pred_region
          %432 = dma.done [#allocation5], 8192
        $region80: #{tpu_custom_call.1} parent=71 // pred_fallthru
          _
        // Predicated region
        $region81: #{tpu_custom_call.1} parent=71 // pred_check
          %p433 = pneg %p278
        $region82: #{tpu_custom_call.1} parent=71 // pred_check_branch
          %435 = sbr.rel (%p433) target = $region84
        $region83: #{tpu_custom_call.1} parent=71 // pred_region
          %436 = dma.done [#allocation5], 8192
        $region84: #{tpu_custom_call.1} parent=71 // pred_fallthru
          _
        %p437 = scmp.lt.s32.totalorder %s26, 1
        %s438 = scalar_select %p437, %s26, 1
        %s439 = smul.addr %s438, 4
        %s440 = smul.addr %s439, 8
        %s441 = scalar_lea.vmem %s0, %s440
        %p442 = pneg %p47
        %p443 = pneg %p44
        %p444 = pneg %p68
        %p445 = pneg %p65
        %p446 = pneg %p89
        %p447 = pneg %p86
        %p448 = pneg %p110
        %p449 = pneg %p107
        %p450 = pneg %p131
        %p451 = pneg %p128
        %p452 = pneg %p152
        %p453 = pneg %p149
        %p454 = pneg %p173
        %p455 = pneg %p170
        %p456 = pneg %p194
        %p457 = pneg %p191
        %p458 = pneg %p215
        %p459 = pneg %p212
        %p460 = pneg %p236
        %p461 = pneg %p233
        %p462 = pneg %p257
        %p463 = pneg %p254
        %p464 = pneg %p278
        %p465 = pneg %p275
        %p466 = pneg %p299
        %p467 = pneg %p296
        %p468 = pneg %p325
        %p469 = pneg %p322
        %p470 = scmp.lt.s32.totalorder %s26, 1
        %s471 = scalar_select %p470, %s26, 1
        %s472 = smul.addr %s471, 4
        %s473 = smul.addr %s472, 8
        %s474 = scalar_lea.vmem %s13, %s473
        %p475 = scmp.lt.s32.totalorder %s26, 1
        %s476 = scalar_select %p475, %s26, 1
        %s477 = smul.addr %s476, 4
        %s478 = smul.addr %s477, 8
        %s479 = scalar_lea.vmem %s0, %s478
        %p480 = scmp.lt.s32.totalorder %s26, 1
        %s481 = scalar_select %p480, %s26, 1
        %s482 = smul.addr %s481, 4
        %s483 = smul.addr %s482, 8
        %s484 = scalar_lea.vmem %s13, %s483
        %v485 = vld [vmem:[%s479] sm:$0xff]
        %v486 = vld [vmem:[%s479 + $0x8] sm:$0xff]
        %v487 = vld [vmem:[%s479 + $0x10] sm:$0xff]
        %v488 = vld [vmem:[%s479 + $0x18] sm:$0x7f]
        %v489 = vld [vmem:[%s1] sm:$0x1]
        %v490 = vld [vmem:[%s2] sm:$0x1]
        %491 = vadd.xlane.f32.xlu0 %v485
        %v492 = vpop.xlane.xlu0 %491
        %493 = vadd.xlane.f32.xlu0 %v486
        %v494 = vpop.xlane.xlu0 %493
        %495 = vadd.xlane.f32.xlu0 %v487
        %v496 = vpop.xlane.xlu0 %495
        %vm497 = vcmask 1046528
        %v498 = vsel %vm497, %v488, 0.0
        %499 = vadd.xlane.f32.xlu0 %v498
        %v500 = vpop.xlane.xlu0 %499
        %v501 = vrcp.pop 128.0
        %v502 = vmul.f32 %v492, %v501
        %v503 = vmul.f32 %v494, %v501
        %v504 = vmul.f32 %v496, %v501
        %v505 = vmul.f32 %v500, %v501
        %v506 = vsub.f32 %v485, %v502
        %v507 = vsub.f32 %v486, %v503
        %v508 = vsub.f32 %v487, %v504
        %v509 = vsub.f32 %v488, %v505
        %v510 = vmul.f32 %v506, %v506
        %v511 = vmul.f32 %v507, %v507
        %v512 = vmul.f32 %v508, %v508
        %v513 = vmul.f32 %v509, %v509
        %514 = vadd.xlane.f32.xlu0 %v510
        %v515 = vpop.xlane.xlu0 %514
        %516 = vadd.xlane.f32.xlu0 %v511
        %v517 = vpop.xlane.xlu0 %516
        %518 = vadd.xlane.f32.xlu0 %v512
        %v519 = vpop.xlane.xlu0 %518
        %v520 = vsel %vm497, %v513, 0.0
        %521 = vadd.xlane.f32.xlu0 %v520
        %v522 = vpop.xlane.xlu0 %521
        %v523 = vmul.f32 %v515, %v501
        %v524 = vmul.f32 %v517, %v501
        %v525 = vmul.f32 %v519, %v501
        %v526 = vmul.f32 %v522, %v501
        %v527 = vadd.f32 %v523, 1e-05
        %v528 = vadd.f32 %v524, 1e-05
        %v529 = vadd.f32 %v525, 1e-05
        %v530 = vadd.f32 %v526, 1e-05
        %v531 = vrsqrt.pop %v527
        %v532 = vrsqrt.pop %v528
        %v533 = vrsqrt.pop %v529
        %v534 = vrsqrt.pop %v530
        %v535 = vmul.f32 %v506, %v531
        %v536 = vmul.f32 %v507, %v532
        %v537 = vmul.f32 %v508, %v533
        %v538 = vmul.f32 %v509, %v534
        %v540 = vlaneseq
        %v541 = vshrl.u32 %v540, 7
        %v542 = vsub.s32 0, %v541
        %v543 = vrot.slane %v489, %v542
        %v545 = vmul.f32 %v535, %v543
        %v546 = vmul.f32 %v536, %v543
        %v547 = vmul.f32 %v537, %v543
        %v548 = vmul.f32 %v538, %v543
        %v550 = vlaneseq
        %v551 = vshrl.u32 %v550, 7
        %v552 = vsub.s32 0, %v551
        %v553 = vrot.slane %v490, %v552
        %v555 = vadd.f32 %v545, %v553
        %v556 = vadd.f32 %v546, %v553
        %v557 = vadd.f32 %v547, %v553
        %v558 = vadd.f32 %v548, %v553
        %v559 = vld [vmem:[#allocation2] sm:$0xff]
        %v560 = vld [vmem:[#allocation2 + $0x8] sm:$0xff]
        %v561 = vld [vmem:[#allocation2 + $0x10] sm:$0xff]
        %v562 = vld [vmem:[#allocation2 + $0x18] sm:$0xff]
        %v563 = vld [vmem:[#allocation2 + $0x20] sm:$0xff]
        %v564 = vld [vmem:[#allocation2 + $0x28] sm:$0xff]
        %v565 = vld [vmem:[#allocation2 + $0x30] sm:$0xff]
        %v566 = vld [vmem:[#allocation2 + $0x38] sm:$0xff]
        %v567 = vld [vmem:[#allocation2 + $0x40] sm:$0xff]
        %v568 = vld [vmem:[#allocation2 + $0x48] sm:$0xff]
        %v569 = vld [vmem:[#allocation2 + $0x50] sm:$0xff]
        %v570 = vld [vmem:[#allocation2 + $0x58] sm:$0xff]
        %v571 = vld [vmem:[#allocation2 + $0x60] sm:$0xff]
        %v572 = vld [vmem:[#allocation2 + $0x68] sm:$0xff]
        %v573 = vld [vmem:[#allocation2 + $0x70] sm:$0xff]
        %v574 = vld [vmem:[#allocation2 + $0x78] sm:$0xff]
        %v575 = vld [vmem:[#allocation2 + $0x80] sm:$0xff]
        %v576 = vld [vmem:[#allocation2 + $0x88] sm:$0xff]
        %v577 = vld [vmem:[#allocation2 + $0x90] sm:$0xff]
        %v578 = vld [vmem:[#allocation2 + $0x98] sm:$0xff]
        %v579 = vld [vmem:[#allocation2 + $0xa0] sm:$0xff]
        %v580 = vld [vmem:[#allocation2 + $0xa8] sm:$0xff]
        %v581 = vld [vmem:[#allocation2 + $0xb0] sm:$0xff]
        %v582 = vld [vmem:[#allocation2 + $0xb8] sm:$0xff]
        %v583 = vld [vmem:[#allocation2 + $0xc0] sm:$0xff]
        %v584 = vld [vmem:[#allocation2 + $0xc8] sm:$0xff]
        %v585 = vld [vmem:[#allocation2 + $0xd0] sm:$0xff]
        %v586 = vld [vmem:[#allocation2 + $0xd8] sm:$0xff]
        %v587 = vld [vmem:[#allocation2 + $0xe0] sm:$0xff]
        %v588 = vld [vmem:[#allocation2 + $0xe8] sm:$0xff]
        %v589 = vld [vmem:[#allocation2 + $0xf0] sm:$0xff]
        %v590 = vld [vmem:[#allocation2 + $0xf8] sm:$0xff]
        %v591 = vld [vmem:[#allocation2 + $0x100] sm:$0xff]
        %v592 = vld [vmem:[#allocation2 + $0x108] sm:$0xff]
        %v593 = vld [vmem:[#allocation2 + $0x110] sm:$0xff]
        %v594 = vld [vmem:[#allocation2 + $0x118] sm:$0xff]
        %v595 = vld [vmem:[#allocation2 + $0x120] sm:$0xff]
        %v596 = vld [vmem:[#allocation2 + $0x128] sm:$0xff]
        %v597 = vld [vmem:[#allocation2 + $0x130] sm:$0xff]
        %v598 = vld [vmem:[#allocation2 + $0x138] sm:$0xff]
        %v599 = vld [vmem:[#allocation2 + $0x140] sm:$0xff]
        %v600 = vld [vmem:[#allocation2 + $0x148] sm:$0xff]
        %v601 = vld [vmem:[#allocation2 + $0x150] sm:$0xff]
        %v602 = vld [vmem:[#allocation2 + $0x158] sm:$0xff]
        %v603 = vld [vmem:[#allocation2 + $0x160] sm:$0xff]
        %v604 = vld [vmem:[#allocation2 + $0x168] sm:$0xff]
        %v605 = vld [vmem:[#allocation2 + $0x170] sm:$0xff]
        %v606 = vld [vmem:[#allocation2 + $0x178] sm:$0xff]
        %607 = vmatprep.subr.mxu0 %v560
        %608 = vmatpush1.msra.mxu0 %v559
        %609 = vmatprep.subr.mxu0 %v563
        %610 = vmatpush1.msra.mxu0 %v562
        %611 = vmatprep.subr.mxu0 %v566
        %612 = vmatpush1.msra.mxu0 %v565
        %613 = vmatprep.subr.mxu0 %v569
        %614 = vmatpush1.msra.mxu0 %v568
        %615 = vmatprep.subr.mxu0 %v572
        %616 = vmatpush1.msra.mxu0 %v571
        %617 = vmatprep.subr.mxu0 %v575
        %618 = vmatpush1.msra.mxu0 %v574
        %619 = vmatprep.subr.mxu0 %v578
        %620 = vmatpush1.msra.mxu0 %v577
        %621 = vmatprep.subr.mxu0 %v581
        %622 = vmatpush1.msra.mxu0 %v580
        %623 = vmatprep.subr.mxu0 %v584
        %624 = vmatpush1.msra.mxu0 %v583
        %625 = vmatprep.subr.mxu0 %v587
        %626 = vmatpush1.msra.mxu0 %v586
        %627 = vmatprep.subr.mxu0 %v590
        %628 = vmatpush1.msra.mxu0 %v589
        %629 = vmatprep.subr.mxu0 %v593
        %630 = vmatpush1.msra.mxu0 %v592
        %631 = vmatprep.subr.mxu0 %v596
        %632 = vmatpush1.msra.mxu0 %v595
        %633 = vmatprep.subr.mxu0 %v599
        %634 = vmatpush1.msra.mxu0 %v598
        %635 = vmatprep.subr.mxu0 %v602
        %636 = vmatpush1.msra.mxu0 %v601
        %637 = vmatprep.subr.mxu0 %v605
        %638 = vmatpush1.msra.mxu0 %v604
        %639 = vmatprep.subr.mxu0 0.0
        %640 = vmatpush1.msra.mxu0 0.0
        %641 = vmatprep.subr.mxu0 0.0
        %642 = vmatpush1.msra.mxu0 0.0
        %643 = vmatprep.subr.mxu0 0.0
        %644 = vmatpush1.msra.mxu0 0.0
        %645 = vmatprep.subr.mxu0 0.0
        %646 = vmatpush1.msra.mxu0 0.0
        %647 = vmatprep.subr.mxu0 0.0
        %648 = vmatpush1.msra.mxu0 0.0
        %649 = vmatprep.subr.mxu0 0.0
        %650 = vmatpush1.msra.mxu0 0.0
        %651 = vmatprep.subr.mxu0 0.0
        %652 = vmatpush1.msra.mxu0 0.0
        %653 = vmatprep.subr.mxu0 0.0
        %654 = vmatpush1.msra.mxu0 0.0
        %655 = vmatprep.subr.mxu0 0.0
        %656 = vmatpush1.msra.mxu0 0.0
        %657 = vmatprep.subr.mxu0 0.0
        %658 = vmatpush1.msra.mxu0 0.0
        %659 = vmatprep.subr.mxu0 0.0
        %660 = vmatpush1.msra.mxu0 0.0
        %661 = vmatprep.subr.mxu0 0.0
        %662 = vmatpush1.msra.mxu0 0.0
        %663 = vmatprep.subr.mxu0 0.0
        %664 = vmatpush1.msra.mxu0 0.0
        %665 = vmatprep.subr.mxu0 0.0
        %666 = vmatpush1.msra.mxu0 0.0
        %667 = vmatprep.subr.mxu0 0.0
        %668 = vmatpush1.msra.mxu0 0.0
        %669 = vmatprep.subr.mxu0 0.0
        %670 = vmatpush1.msra.mxu0 0.0
        %671 = vmatprep.mubr.f32.mxu0 0.0
        %672 = vmatmul.mubr.f32.gmra.mrb[0].mxu0 %v555
        %v673 = vpop.f32.mrb[0].mxu0
        %v674 = vadd.f32 0.0, %v673
        %v675 = vpop.f32.mrb[0].mxu0
        %v676 = vadd.f32 0.0, %v675
        %677 = vmatprep.mubr.f32.mxu0 0.0
        %678 = vmatmul.mubr.f32.gmra.mrb[0].mxu0 %v556
        %v679 = vpop.f32.mrb[0].mxu0
        %v680 = vadd.f32 0.0, %v679
        %v681 = vpop.f32.mrb[0].mxu0
        %v682 = vadd.f32 0.0, %v681
        %683 = vmatprep.mubr.f32.mxu0 0.0
        %684 = vmatmul.mubr.f32.gmra.mrb[0].mxu0 %v557
        %v685 = vpop.f32.mrb[0].mxu0
        %v686 = vadd.f32 0.0, %v685
        %v687 = vpop.f32.mrb[0].mxu0
        %v688 = vadd.f32 0.0, %v687
        %689 = vmatprep.mubr.f32.mxu0 0.0
        %690 = vmatmul.mubr.f32.gmra.mrb[0].mxu0 %v558
        %v691 = vpop.f32.mrb[0].mxu0
        %v692 = vadd.f32 0.0, %v691
        %v693 = vpop.f32.mrb[0].mxu0
        %v694 = vadd.f32 0.0, %v693
        %695 = vdwg.mxu0
        %696 = vmatprep.subr.mxu0 0.0
        %697 = vmatpush1.msra.mxu0 %v561
        %698 = vmatprep.subr.mxu0 0.0
        %699 = vmatpush1.msra.mxu0 %v564
        %700 = vmatprep.subr.mxu0 0.0
        %701 = vmatpush1.msra.mxu0 %v567
        %702 = vmatprep.subr.mxu0 0.0
        %703 = vmatpush1.msra.mxu0 %v570
        %704 = vmatprep.subr.mxu0 0.0
        %705 = vmatpush1.msra.mxu0 %v573
        %706 = vmatprep.subr.mxu0 0.0
        %707 = vmatpush1.msra.mxu0 %v576
        %708 = vmatprep.subr.mxu0 0.0
        %709 = vmatpush1.msra.mxu0 %v579
        %710 = vmatprep.subr.mxu0 0.0
        %711 = vmatpush1.msra.mxu0 %v582
        %712 = vmatprep.subr.mxu0 0.0
        %713 = vmatpush1.msra.mxu0 %v585
        %714 = vmatprep.subr.mxu0 0.0
        %715 = vmatpush1.msra.mxu0 %v588
        %716 = vmatprep.subr.mxu0 0.0
        %717 = vmatpush1.msra.mxu0 %v591
        %718 = vmatprep.subr.mxu0 0.0
        %719 = vmatpush1.msra.mxu0 %v594
        %720 = vmatprep.subr.mxu0 0.0
        %721 = vmatpush1.msra.mxu0 %v597
        %722 = vmatprep.subr.mxu0 0.0
        %723 = vmatpush1.msra.mxu0 %v600
        %724 = vmatprep.subr.mxu0 0.0
        %725 = vmatpush1.msra.mxu0 %v603
        %726 = vmatprep.subr.mxu0 0.0
        %727 = vmatpush1.msra.mxu0 %v606
        %728 = vmatprep.subr.mxu0 0.0
        %729 = vmatpush1.msra.mxu0 0.0
        %730 = vmatprep.subr.mxu0 0.0
        %731 = vmatpush1.msra.mxu0 0.0
        %732 = vmatprep.subr.mxu0 0.0
        %733 = vmatpush1.msra.mxu0 0.0
        %734 = vmatprep.subr.mxu0 0.0
        %735 = vmatpush1.msra.mxu0 0.0
        %736 = vmatprep.subr.mxu0 0.0
        %737 = vmatpush1.msra.mxu0 0.0
        %738 = vmatprep.subr.mxu0 0.0
        %739 = vmatpush1.msra.mxu0 0.0
        %740 = vmatprep.subr.mxu0 0.0
        %741 = vmatpush1.msra.mxu0 0.0
        %742 = vmatprep.subr.mxu0 0.0
        %743 = vmatpush1.msra.mxu0 0.0
        %744 = vmatprep.subr.mxu0 0.0
        %745 = vmatpush1.msra.mxu0 0.0
        %746 = vmatprep.subr.mxu0 0.0
        %747 = vmatpush1.msra.mxu0 0.0
        %748 = vmatprep.subr.mxu0 0.0
        %749 = vmatpush1.msra.mxu0 0.0
        %750 = vmatprep.subr.mxu0 0.0
        %751 = vmatpush1.msra.mxu0 0.0
        %752 = vmatprep.subr.mxu0 0.0
        %753 = vmatpush1.msra.mxu0 0.0
        %754 = vmatprep.subr.mxu0 0.0
        %755 = vmatpush1.msra.mxu0 0.0
        %756 = vmatprep.subr.mxu0 0.0
        %757 = vmatpush1.msra.mxu0 0.0
        %758 = vmatprep.subr.mxu0 0.0
        %759 = vmatpush1.msra.mxu0 0.0
        %760 = vmatprep.mubr.f32.mxu0 0.0
        %761 = vmatmul.mubr.f32.gmra.mrb[0].mxu0 %v555
        %v762 = vpop.f32.mrb[0].mxu0
        %v763 = vadd.f32 0.0, %v762
        %v764 = vpop.f32.mrb[0].mxu0
        %765 = vmatprep.mubr.f32.mxu0 0.0
        %766 = vmatmul.mubr.f32.gmra.mrb[0].mxu0 %v556
        %v767 = vpop.f32.mrb[0].mxu0
        %v768 = vadd.f32 0.0, %v767
        %v769 = vpop.f32.mrb[0].mxu0
        %770 = vmatprep.mubr.f32.mxu0 0.0
        %771 = vmatmul.mubr.f32.gmra.mrb[0].mxu0 %v557
        %v772 = vpop.f32.mrb[0].mxu0
        %v773 = vadd.f32 0.0, %v772
        %v774 = vpop.f32.mrb[0].mxu0
        %775 = vmatprep.mubr.f32.mxu0 0.0
        %776 = vmatmul.mubr.f32.gmra.mrb[0].mxu0 %v558
        %v777 = vpop.f32.mrb[0].mxu0
        %v778 = vadd.f32 0.0, %v777
        %v779 = vpop.f32.mrb[0].mxu0
        %780 = vdwg.mxu0
        %v781 = vld [vmem:[%s4] sm:$0x1]
        %v783 = vlaneseq
        %v784 = vshrl.u32 %v783, 7
        %v785 = vsub.s32 0, %v784
        %v786 = vrot.slane %v781, %v785
        %v788 = vmul.f32 %v674, %v786
        %v789 = vmul.f32 %v680, %v786
        %v790 = vmul.f32 %v686, %v786
        %v791 = vmul.f32 %v692, %v786
        %v792 = vlaneseq
        %v793 = vshrl.u32 %v792, 7
        %v794 = vadd.s32 %v793, 8
        %v795 = vadd.s32 %v793, 16
        %v796 = vadd.s32 %v793, 24
        %v797 = vlaneseq
        %v798 = vand.u32 %v797, 127
        %vm799 = vcmp.eq.s32.totalorder %v793, %v798
        %vm800 = vcmp.eq.s32.totalorder %v794, %v798
        %vm801 = vcmp.eq.s32.totalorder %v795, %v798
        %vm802 = vcmp.eq.s32.totalorder %v796, %v798
        %vm803 = vcmask 261120
        %v805 = vsel %vm803, %v788, 0
        %v808 = vsel %vm803, %v789, 0
        %v811 = vsel %vm803, %v790, 0
        %v814 = vsel %vm803, %v791, 0
        %v817 = vsel %vm803, %v676, 0
        %v820 = vsel %vm803, %v682, 0
        %v823 = vsel %vm803, %v688, 0
        %v826 = vsel %vm803, %v694, 0
        %828 = vmatprep.subr.mxu0 0.0
        %829 = vmatpush1.xpose.msra.mxu0 %v817
        %830 = vmatprep.subr.mxu0 0.0
        %831 = vmatpush1.xpose.msra.mxu0 %v820
        %832 = vmatprep.subr.mxu0 0.0
        %833 = vmatpush1.xpose.msra.mxu0 %v823
        %834 = vmatprep.subr.mxu0 0.0
        %835 = vmatpush1.xpose.msra.mxu0 %v826
        %836 = vmatprep.subr.mxu0 0.0
        %837 = vmatpush1.xpose.msra.mxu0 0.0
        %838 = vmatprep.subr.mxu0 0.0
        %839 = vmatpush1.xpose.msra.mxu0 0.0
        %840 = vmatprep.subr.mxu0 0.0
        %841 = vmatpush1.xpose.msra.mxu0 0.0
        %842 = vmatprep.subr.mxu0 0.0
        %843 = vmatpush1.xpose.msra.mxu0 0.0
        %844 = vmatprep.subr.mxu0 0.0
        %845 = vmatpush1.xpose.msra.mxu0 0.0
        %846 = vmatprep.subr.mxu0 0.0
        %847 = vmatpush1.xpose.msra.mxu0 0.0
        %848 = vmatprep.subr.mxu0 0.0
        %849 = vmatpush1.xpose.msra.mxu0 0.0
        %850 = vmatprep.subr.mxu0 0.0
        %851 = vmatpush1.xpose.msra.mxu0 0.0
        %852 = vmatprep.subr.mxu0 0.0
        %853 = vmatpush1.xpose.msra.mxu0 0.0
        %854 = vmatprep.subr.mxu0 0.0
        %855 = vmatpush1.xpose.msra.mxu0 0.0
        %856 = vmatprep.subr.mxu0 0.0
        %857 = vmatpush1.xpose.msra.mxu0 0.0
        %858 = vmatprep.subr.mxu0 0.0
        %859 = vmatpush1.xpose.msra.mxu0 0.0
        %860 = vmatprep.subr.mxu0 0.0
        %861 = vmatpush1.xpose.msra.mxu0 0.0
        %862 = vmatprep.subr.mxu0 0.0
        %863 = vmatpush1.xpose.msra.mxu0 0.0
        %864 = vmatprep.subr.mxu0 0.0
        %865 = vmatpush1.xpose.msra.mxu0 0.0
        %866 = vmatprep.subr.mxu0 0.0
        %867 = vmatpush1.xpose.msra.mxu0 0.0
        %868 = vmatprep.subr.mxu0 0.0
        %869 = vmatpush1.xpose.msra.mxu0 0.0
        %870 = vmatprep.subr.mxu0 0.0
        %871 = vmatpush1.xpose.msra.mxu0 0.0
        %872 = vmatprep.subr.mxu0 0.0
        %873 = vmatpush1.xpose.msra.mxu0 0.0
        %874 = vmatprep.subr.mxu0 0.0
        %875 = vmatpush1.xpose.msra.mxu0 0.0
        %876 = vmatprep.subr.mxu0 0.0
        %877 = vmatpush1.xpose.msra.mxu0 0.0
        %878 = vmatprep.subr.mxu0 0.0
        %879 = vmatpush1.xpose.msra.mxu0 0.0
        %880 = vmatprep.subr.mxu0 0.0
        %881 = vmatpush1.xpose.msra.mxu0 0.0
        %882 = vmatprep.subr.mxu0 0.0
        %883 = vmatpush1.xpose.msra.mxu0 0.0
        %884 = vmatprep.subr.mxu0 0.0
        %885 = vmatpush1.xpose.msra.mxu0 0.0
        %886 = vmatprep.subr.mxu0 0.0
        %887 = vmatpush1.xpose.msra.mxu0 0.0
        %888 = vmatprep.subr.mxu0 0.0
        %889 = vmatpush1.xpose.msra.mxu0 0.0
        %890 = vmatprep.subr.mxu0 0.0
        %891 = vmatpush1.xpose.msra.mxu0 0.0
        %892 = vmatprep.mubr.f32.mxu0 0.0
        %893 = vmatmul.mubr.f32.gmra.mrb[0].mxu0 %v805
        %v894 = vpop.f32.mrb[0].mxu0
        %v895 = vadd.f32 0.0, %v894
        %v896 = vpop.f32.mrb[0].mxu0
        %897 = vmatprep.mubr.f32.mxu0 0.0
        %898 = vmatmul.mubr.f32.gmra.mrb[0].mxu0 %v808
        %v899 = vpop.f32.mrb[0].mxu0
        %v900 = vadd.f32 0.0, %v899
        %v901 = vpop.f32.mrb[0].mxu0
        %902 = vmatprep.mubr.f32.mxu0 0.0
        %903 = vmatmul.mubr.f32.gmra.mrb[0].mxu0 %v811
        %v904 = vpop.f32.mrb[0].mxu0
        %v905 = vadd.f32 0.0, %v904
        %v906 = vpop.f32.mrb[0].mxu0
        %907 = vmatprep.mubr.f32.mxu0 0.0
        %908 = vmatmul.mubr.f32.gmra.mrb[0].mxu0 %v814
        %v909 = vpop.f32.mrb[0].mxu0
        %v910 = vadd.f32 0.0, %v909
        %v911 = vpop.f32.mrb[0].mxu0
        %912 = vdwg.mxu0
        %v913 = vsel %vm799, -9.8765434e+08, %v895
        %v914 = vsel %vm800, -9.8765434e+08, %v900
        %v915 = vsel %vm801, -9.8765434e+08, %v905
        %v916 = vsel %vm802, -9.8765434e+08, %v910
        %vm917 = vcmask 252928
        %v918 = vsel %vm917, %v913, -inf
        %919 = vmax.xlane.f32.xlu0 %v918
        %v920 = vpop.xlane.xlu0 %919
        %v921 = vsel %vm917, %v914, -inf
        %922 = vmax.xlane.f32.xlu0 %v921
        %v923 = vpop.xlane.xlu0 %922
        %v924 = vsel %vm917, %v915, -inf
        %925 = vmax.xlane.f32.xlu0 %v924
        %v926 = vpop.xlane.xlu0 %925
        %vm927 = vcmask 251904
        %v928 = vsel %vm927, %v916, -inf
        %929 = vmax.xlane.f32.xlu0 %v928
        %v930 = vpop.xlane.xlu0 %929
        %v931 = vsub.f32 %v913, %v920
        %v932 = vsub.f32 %v914, %v923
        %v933 = vsub.f32 %v915, %v926
        %v934 = vsub.f32 %v916, %v930
        %v935 = vmul.f32 %v931, 1.442695
        %v936 = vpow.pop %v935
        %v937 = vmul.f32 %v932, 1.442695
        %v938 = vpow.pop %v937
        %v939 = vmul.f32 %v933, 1.442695
        %v940 = vpow.pop %v939
        %v941 = vmul.f32 %v934, 1.442695
        %v942 = vpow.pop %v941
        %v943 = vsel %vm917, %v936, 0.0
        %944 = vadd.xlane.f32.xlu0 %v943
        %v945 = vpop.xlane.xlu0 %944
        %v946 = vsel %vm917, %v938, 0.0
        %947 = vadd.xlane.f32.xlu0 %v946
        %v948 = vpop.xlane.xlu0 %947
        %v949 = vsel %vm917, %v940, 0.0
        %950 = vadd.xlane.f32.xlu0 %v949
        %v951 = vpop.xlane.xlu0 %950
        %v952 = vsel %vm927, %v942, 0.0
        %953 = vadd.xlane.f32.xlu0 %v952
        %v954 = vpop.xlane.xlu0 %953
        %v955 = vrcp.pop %v945
        %v956 = vmul.f32 %v936, %v955
        %v957 = vrcp.pop %v948
        %v958 = vmul.f32 %v938, %v957
        %v959 = vrcp.pop %v951
        %v960 = vmul.f32 %v940, %v959
        %v961 = vrcp.pop %v954
        %v962 = vmul.f32 %v942, %v961
        %v964 = vsel %vm917, %v956, 0
        %v967 = vsel %vm917, %v958, 0
        %v970 = vsel %vm917, %v960, 0
        %v973 = vsel %vm917, %v962, 0
        %v976 = vsel %vm497, %v778, 0
        %978 = vmatprep.subr.mxu0 0.0
        %979 = vmatpush1.msra.mxu0 %v763
        %980 = vmatprep.subr.mxu0 0.0
        %981 = vmatpush1.msra.mxu0 %v768
        %982 = vmatprep.subr.mxu0 0.0
        %983 = vmatpush1.msra.mxu0 %v773
        %984 = vmatprep.subr.mxu0 0.0
        %985 = vmatpush1.msra.mxu0 %v976
        %986 = vmatprep.subr.mxu0 0.0
        %987 = vmatpush1.msra.mxu0 0.0
        %988 = vmatprep.subr.mxu0 0.0
        %989 = vmatpush1.msra.mxu0 0.0
        %990 = vmatprep.subr.mxu0 0.0
        %991 = vmatpush1.msra.mxu0 0.0
        %992 = vmatprep.subr.mxu0 0.0
        %993 = vmatpush1.msra.mxu0 0.0
        %994 = vmatprep.subr.mxu0 0.0
        %995 = vmatpush1.msra.mxu0 0.0
        %996 = vmatprep.subr.mxu0 0.0
        %997 = vmatpush1.msra.mxu0 0.0
        %998 = vmatprep.subr.mxu0 0.0
        %999 = vmatpush1.msra.mxu0 0.0
        %1000 = vmatprep.subr.mxu0 0.0
        %1001 = vmatpush1.msra.mxu0 0.0
        %1002 = vmatprep.subr.mxu0 0.0
        %1003 = vmatpush1.msra.mxu0 0.0
        %1004 = vmatprep.subr.mxu0 0.0
        %1005 = vmatpush1.msra.mxu0 0.0
        %1006 = vmatprep.subr.mxu0 0.0
        %1007 = vmatpush1.msra.mxu0 0.0
        %1008 = vmatprep.subr.mxu0 0.0
        %1009 = vmatpush1.msra.mxu0 0.0
        %1010 = vmatprep.subr.mxu0 0.0
        %1011 = vmatpush1.msra.mxu0 0.0
        %1012 = vmatprep.subr.mxu0 0.0
        %1013 = vmatpush1.msra.mxu0 0.0
        %1014 = vmatprep.subr.mxu0 0.0
        %1015 = vmatpush1.msra.mxu0 0.0
        %1016 = vmatprep.subr.mxu0 0.0
        %1017 = vmatpush1.msra.mxu0 0.0
        %1018 = vmatprep.subr.mxu0 0.0
        %1019 = vmatpush1.msra.mxu0 0.0
        %1020 = vmatprep.subr.mxu0 0.0
        %1021 = vmatpush1.msra.mxu0 0.0
        %1022 = vmatprep.subr.mxu0 0.0
        %1023 = vmatpush1.msra.mxu0 0.0
        %1024 = vmatprep.subr.mxu0 0.0
        %1025 = vmatpush1.msra.mxu0 0.0
        %1026 = vmatprep.subr.mxu0 0.0
        %1027 = vmatpush1.msra.mxu0 0.0
        %1028 = vmatprep.subr.mxu0 0.0
        %1029 = vmatpush1.msra.mxu0 0.0
        %1030 = vmatprep.subr.mxu0 0.0
        %1031 = vmatpush1.msra.mxu0 0.0
        %1032 = vmatprep.subr.mxu0 0.0
        %1033 = vmatpush1.msra.mxu0 0.0
        %1034 = vmatprep.subr.mxu0 0.0
        %1035 = vmatpush1.msra.mxu0 0.0
        %1036 = vmatprep.subr.mxu0 0.0
        %1037 = vmatpush1.msra.mxu0 0.0
        %1038 = vmatprep.subr.mxu0 0.0
        %1039 = vmatpush1.msra.mxu0 0.0
        %1040 = vmatprep.subr.mxu0 0.0
        %1041 = vmatpush1.msra.mxu0 0.0
        %1042 = vmatprep.mubr.f32.mxu0 0.0
        %1043 = vmatmul.mubr.f32.gmra.mrb[0].mxu0 %v964
        %v1044 = vpop.f32.mrb[0].mxu0
        %v1045 = vadd.f32 0.0, %v1044
        %v1046 = vpop.f32.mrb[0].mxu0
        %1047 = vmatprep.mubr.f32.mxu0 0.0
        %1048 = vmatmul.mubr.f32.gmra.mrb[0].mxu0 %v967
        %v1049 = vpop.f32.mrb[0].mxu0
        %v1050 = vadd.f32 0.0, %v1049
        %v1051 = vpop.f32.mrb[0].mxu0
        %1052 = vmatprep.mubr.f32.mxu0 0.0
        %1053 = vmatmul.mubr.f32.gmra.mrb[0].mxu0 %v970
        %v1054 = vpop.f32.mrb[0].mxu0
        %v1055 = vadd.f32 0.0, %v1054
        %v1056 = vpop.f32.mrb[0].mxu0
        %1057 = vmatprep.mubr.f32.mxu0 0.0
        %1058 = vmatmul.mubr.f32.gmra.mrb[0].mxu0 %v973
        %v1059 = vpop.f32.mrb[0].mxu0
        %v1060 = vadd.f32 0.0, %v1059
        %v1061 = vpop.f32.mrb[0].mxu0
        %1062 = vdwg.mxu0
        %v1063 = vld [vmem:[%s5] sm:$0xff]
        %v1064 = vld [vmem:[%s5 + $0x8] sm:$0xff]
        %v1065 = vld [vmem:[%s5 + $0x10] sm:$0xff]
        %v1066 = vld [vmem:[%s5 + $0x18] sm:$0xff]
        %1067 = vrot.lane.b32.xlu0 %v788, 96
        %v1068 = vpop.permute.xlu0 %1067
        %1069 = vrot.lane.b32.xlu0 %v789, 96
        %v1070 = vpop.permute.xlu0 %1069
        %1071 = vrot.lane.b32.xlu0 %v790, 96
        %v1072 = vpop.permute.xlu0 %1071
        %1073 = vrot.lane.b32.xlu0 %v791, 96
        %v1074 = vpop.permute.xlu0 %1073
        %1075 = vrot.lane.b32.xlu0 %v676, 96
        %v1076 = vpop.permute.xlu0 %1075
        %1077 = vrot.lane.b32.xlu0 %v682, 96
        %v1078 = vpop.permute.xlu0 %1077
        %1079 = vrot.lane.b32.xlu0 %v688, 96
        %v1080 = vpop.permute.xlu0 %1079
        %1081 = vrot.lane.b32.xlu0 %v694, 96
        %v1082 = vpop.permute.xlu0 %1081
        %v1083 = vsel %vm803, %v1068, 0
        %v1085 = vsel %vm803, %v1070, 0
        %v1087 = vsel %vm803, %v1072, 0
        %v1089 = vsel %vm803, %v1074, 0
        %v1091 = vsel %vm803, %v1076, 0
        %v1093 = vsel %vm803, %v1078, 0
        %v1095 = vsel %vm803, %v1080, 0
        %v1097 = vsel %vm803, %v1082, 0
        %1099 = vmatprep.subr.mxu0 0.0
        %1100 = vmatpush1.xpose.msra.mxu0 %v1091
        %1101 = vmatprep.subr.mxu0 0.0
        %1102 = vmatpush1.xpose.msra.mxu0 %v1093
        %1103 = vmatprep.subr.mxu0 0.0
        %1104 = vmatpush1.xpose.msra.mxu0 %v1095
        %1105 = vmatprep.subr.mxu0 0.0
        %1106 = vmatpush1.xpose.msra.mxu0 %v1097
        %1107 = vmatprep.subr.mxu0 0.0
        %1108 = vmatpush1.xpose.msra.mxu0 0.0
        %1109 = vmatprep.subr.mxu0 0.0
        %1110 = vmatpush1.xpose.msra.mxu0 0.0
        %1111 = vmatprep.subr.mxu0 0.0
        %1112 = vmatpush1.xpose.msra.mxu0 0.0
        %1113 = vmatprep.subr.mxu0 0.0
        %1114 = vmatpush1.xpose.msra.mxu0 0.0
        %1115 = vmatprep.subr.mxu0 0.0
        %1116 = vmatpush1.xpose.msra.mxu0 0.0
        %1117 = vmatprep.subr.mxu0 0.0
        %1118 = vmatpush1.xpose.msra.mxu0 0.0
        %1119 = vmatprep.subr.mxu0 0.0
        %1120 = vmatpush1.xpose.msra.mxu0 0.0
        %1121 = vmatprep.subr.mxu0 0.0
        %1122 = vmatpush1.xpose.msra.mxu0 0.0
        %1123 = vmatprep.subr.mxu0 0.0
        %1124 = vmatpush1.xpose.msra.mxu0 0.0
        %1125 = vmatprep.subr.mxu0 0.0
        %1126 = vmatpush1.xpose.msra.mxu0 0.0
        %1127 = vmatprep.subr.mxu0 0.0
        %1128 = vmatpush1.xpose.msra.mxu0 0.0
        %1129 = vmatprep.subr.mxu0 0.0
        %1130 = vmatpush1.xpose.msra.mxu0 0.0
        %1131 = vmatprep.subr.mxu0 0.0
        %1132 = vmatpush1.xpose.msra.mxu0 0.0
        %1133 = vmatprep.subr.mxu0 0.0
        %1134 = vmatpush1.xpose.msra.mxu0 0.0
        %1135 = vmatprep.subr.mxu0 0.0
        %1136 = vmatpush1.xpose.msra.mxu0 0.0
        %1137 = vmatprep.subr.mxu0 0.0
        %1138 = vmatpush1.xpose.msra.mxu0 0.0
        %1139 = vmatprep.subr.mxu0 0.0
        %1140 = vmatpush1.xpose.msra.mxu0 0.0
        %1141 = vmatprep.subr.mxu0 0.0
        %1142 = vmatpush1.xpose.msra.mxu0 0.0
        %1143 = vmatprep.subr.mxu0 0.0
        %1144 = vmatpush1.xpose.msra.mxu0 0.0
        %1145 = vmatprep.subr.mxu0 0.0
        %1146 = vmatpush1.xpose.msra.mxu0 0.0
        %1147 = vmatprep.subr.mxu0 0.0
        %1148 = vmatpush1.xpose.msra.mxu0 0.0
        %1149 = vmatprep.subr.mxu0 0.0
        %1150 = vmatpush1.xpose.msra.mxu0 0.0
        %1151 = vmatprep.subr.mxu0 0.0
        %1152 = vmatpush1.xpose.msra.mxu0 0.0
        %1153 = vmatprep.subr.mxu0 0.0
        %1154 = vmatpush1.xpose.msra.mxu0 0.0
        %1155 = vmatprep.subr.mxu0 0.0
        %1156 = vmatpush1.xpose.msra.mxu0 0.0
        %1157 = vmatprep.subr.mxu0 0.0
        %1158 = vmatpush1.xpose.msra.mxu0 0.0
        %1159 = vmatprep.subr.mxu0 0.0
        %1160 = vmatpush1.xpose.msra.mxu0 0.0
        %1161 = vmatprep.subr.mxu0 0.0
        %1162 = vmatpush1.xpose.msra.mxu0 0.0
        %1163 = vmatprep.mubr.f32.mxu0 0.0
        %1164 = vmatmul.mubr.f32.gmra.mrb[0].mxu0 %v1083
        %v1165 = vpop.f32.mrb[0].mxu0
        %v1166 = vadd.f32 0.0, %v1165
        %v1167 = vpop.f32.mrb[0].mxu0
        %1168 = vmatprep.mubr.f32.mxu0 0.0
        %1169 = vmatmul.mubr.f32.gmra.mrb[0].mxu0 %v1085
        %v1170 = vpop.f32.mrb[0].mxu0
        %v1171 = vadd.f32 0.0, %v1170
        %v1172 = vpop.f32.mrb[0].mxu0
        %1173 = vmatprep.mubr.f32.mxu0 0.0
        %1174 = vmatmul.mubr.f32.gmra.mrb[0].mxu0 %v1087
        %v1175 = vpop.f32.mrb[0].mxu0
        %v1176 = vadd.f32 0.0, %v1175
        %v1177 = vpop.f32.mrb[0].mxu0
        %1178 = vmatprep.mubr.f32.mxu0 0.0
        %1179 = vmatmul.mubr.f32.gmra.mrb[0].mxu0 %v1089
        %v1180 = vpop.f32.mrb[0].mxu0
        %v1181 = vadd.f32 0.0, %v1180
        %v1182 = vpop.f32.mrb[0].mxu0
        %1183 = vdwg.mxu0
        %v1184 = vsel %vm799, -9.8765434e+08, %v1166
        %v1185 = vsel %vm800, -9.8765434e+08, %v1171
        %v1186 = vsel %vm801, -9.8765434e+08, %v1176
        %v1187 = vsel %vm802, -9.8765434e+08, %v1181
        %v1188 = vsel %vm917, %v1184, -inf
        %1189 = vmax.xlane.f32.xlu0 %v1188
        %v1190 = vpop.xlane.xlu0 %1189
        %v1191 = vsel %vm917, %v1185, -inf
        %1192 = vmax.xlane.f32.xlu0 %v1191
        %v1193 = vpop.xlane.xlu0 %1192
        %v1194 = vsel %vm917, %v1186, -inf
        %1195 = vmax.xlane.f32.xlu0 %v1194
        %v1196 = vpop.xlane.xlu0 %1195
        %v1197 = vsel %vm927, %v1187, -inf
        %1198 = vmax.xlane.f32.xlu0 %v1197
        %v1199 = vpop.xlane.xlu0 %1198
        %v1200 = vsub.f32 %v1184, %v1190
        %v1201 = vsub.f32 %v1185, %v1193
        %v1202 = vsub.f32 %v1186, %v1196
        %v1203 = vsub.f32 %v1187, %v1199
        %v1204 = vmul.f32 %v1200, 1.442695
        %v1205 = vpow.pop %v1204
        %v1206 = vmul.f32 %v1201, 1.442695
        %v1207 = vpow.pop %v1206
        %v1208 = vmul.f32 %v1202, 1.442695
        %v1209 = vpow.pop %v1208
        %v1210 = vmul.f32 %v1203, 1.442695
        %v1211 = vpow.pop %v1210
        %v1212 = vsel %vm917, %v1205, 0.0
        %1213 = vadd.xlane.f32.xlu0 %v1212
        %v1214 = vpop.xlane.xlu0 %1213
        %v1215 = vsel %vm917, %v1207, 0.0
        %1216 = vadd.xlane.f32.xlu0 %v1215
        %v1217 = vpop.xlane.xlu0 %1216
        %v1218 = vsel %vm917, %v1209, 0.0
        %1219 = vadd.xlane.f32.xlu0 %v1218
        %v1220 = vpop.xlane.xlu0 %1219
        %v1221 = vsel %vm927, %v1211, 0.0
        %1222 = vadd.xlane.f32.xlu0 %v1221
        %v1223 = vpop.xlane.xlu0 %1222
        %v1224 = vrcp.pop %v1214
        %v1225 = vmul.f32 %v1205, %v1224
        %v1226 = vrcp.pop %v1217
        %v1227 = vmul.f32 %v1207, %v1226
        %v1228 = vrcp.pop %v1220
        %v1229 = vmul.f32 %v1209, %v1228
        %v1230 = vrcp.pop %v1223
        %v1231 = vmul.f32 %v1211, %v1230
        %1235 = vrot.lane.b32.xlu0 %v763, 96
        %v1236 = vpop.permute.xlu0 %1235
        %1237 = vrot.lane.b32.xlu0 %v768, 96
        %v1238 = vpop.permute.xlu0 %1237
        %1239 = vrot.lane.b32.xlu0 %v773, 96
        %v1240 = vpop.permute.xlu0 %1239
        %1241 = vrot.lane.b32.xlu0 %v778, 96
        %v1242 = vpop.permute.xlu0 %1241
        %v1247 = vsel %vm917, %v1225, 0
        %v1250 = vsel %vm917, %v1227, 0
        %v1253 = vsel %vm917, %v1229, 0
        %v1256 = vsel %vm917, %v1231, 0
        %v1258 = vsel %vm497, %v1242, 0
        %1260 = vmatprep.subr.mxu0 0.0
        %1261 = vmatpush1.msra.mxu0 %v1236
        %1262 = vmatprep.subr.mxu0 0.0
        %1263 = vmatpush1.msra.mxu0 %v1238
        %1264 = vmatprep.subr.mxu0 0.0
        %1265 = vmatpush1.msra.mxu0 %v1240
        %1266 = vmatprep.subr.mxu0 0.0
        %1267 = vmatpush1.msra.mxu0 %v1258
        %1268 = vmatprep.subr.mxu0 0.0
        %1269 = vmatpush1.msra.mxu0 0.0
        %1270 = vmatprep.subr.mxu0 0.0
        %1271 = vmatpush1.msra.mxu0 0.0
        %1272 = vmatprep.subr.mxu0 0.0
        %1273 = vmatpush1.msra.mxu0 0.0
        %1274 = vmatprep.subr.mxu0 0.0
        %1275 = vmatpush1.msra.mxu0 0.0
        %1276 = vmatprep.subr.mxu0 0.0
        %1277 = vmatpush1.msra.mxu0 0.0
        %1278 = vmatprep.subr.mxu0 0.0
        %1279 = vmatpush1.msra.mxu0 0.0
        %1280 = vmatprep.subr.mxu0 0.0
        %1281 = vmatpush1.msra.mxu0 0.0
        %1282 = vmatprep.subr.mxu0 0.0
        %1283 = vmatpush1.msra.mxu0 0.0
        %1284 = vmatprep.subr.mxu0 0.0
        %1285 = vmatpush1.msra.mxu0 0.0
        %1286 = vmatprep.subr.mxu0 0.0
        %1287 = vmatpush1.msra.mxu0 0.0
        %1288 = vmatprep.subr.mxu0 0.0
        %1289 = vmatpush1.msra.mxu0 0.0
        %1290 = vmatprep.subr.mxu0 0.0
        %1291 = vmatpush1.msra.mxu0 0.0
        %1292 = vmatprep.subr.mxu0 0.0
        %1293 = vmatpush1.msra.mxu0 0.0
        %1294 = vmatprep.subr.mxu0 0.0
        %1295 = vmatpush1.msra.mxu0 0.0
        %1296 = vmatprep.subr.mxu0 0.0
        %1297 = vmatpush1.msra.mxu0 0.0
        %1298 = vmatprep.subr.mxu0 0.0
        %1299 = vmatpush1.msra.mxu0 0.0
        %1300 = vmatprep.subr.mxu0 0.0
        %1301 = vmatpush1.msra.mxu0 0.0
        %1302 = vmatprep.subr.mxu0 0.0
        %1303 = vmatpush1.msra.mxu0 0.0
        %1304 = vmatprep.subr.mxu0 0.0
        %1305 = vmatpush1.msra.mxu0 0.0
        %1306 = vmatprep.subr.mxu0 0.0
        %1307 = vmatpush1.msra.mxu0 0.0
        %1308 = vmatprep.subr.mxu0 0.0
        %1309 = vmatpush1.msra.mxu0 0.0
        %1310 = vmatprep.subr.mxu0 0.0
        %1311 = vmatpush1.msra.mxu0 0.0
        %1312 = vmatprep.subr.mxu0 0.0
        %1313 = vmatpush1.msra.mxu0 0.0
        %1314 = vmatprep.subr.mxu0 0.0
        %1315 = vmatpush1.msra.mxu0 0.0
        %1316 = vmatprep.subr.mxu0 0.0
        %1317 = vmatpush1.msra.mxu0 0.0
        %1318 = vmatprep.subr.mxu0 0.0
        %1319 = vmatpush1.msra.mxu0 0.0
        %1320 = vmatprep.subr.mxu0 0.0
        %1321 = vmatpush1.msra.mxu0 0.0
        %1322 = vmatprep.subr.mxu0 0.0
        %1323 = vmatpush1.msra.mxu0 0.0
        %1324 = vmatprep.mubr.f32.mxu0 0.0
        %1325 = vmatmul.mubr.f32.gmra.mrb[0].mxu0 %v1247
        %v1326 = vpop.f32.mrb[0].mxu0
        %v1327 = vadd.f32 0.0, %v1326
        %v1328 = vpop.f32.mrb[0].mxu0
        %1329 = vmatprep.mubr.f32.mxu0 0.0
        %1330 = vmatmul.mubr.f32.gmra.mrb[0].mxu0 %v1250
        %v1331 = vpop.f32.mrb[0].mxu0
        %v1332 = vadd.f32 0.0, %v1331
        %v1333 = vpop.f32.mrb[0].mxu0
        %1334 = vmatprep.mubr.f32.mxu0 0.0
        %1335 = vmatmul.mubr.f32.gmra.mrb[0].mxu0 %v1253
        %v1336 = vpop.f32.mrb[0].mxu0
        %v1337 = vadd.f32 0.0, %v1336
        %v1338 = vpop.f32.mrb[0].mxu0
        %1339 = vmatprep.mubr.f32.mxu0 0.0
        %1340 = vmatmul.mubr.f32.gmra.mrb[0].mxu0 %v1256
        %v1341 = vpop.f32.mrb[0].mxu0
        %v1342 = vadd.f32 0.0, %v1341
        %v1343 = vpop.f32.mrb[0].mxu0
        %1344 = vdwg.mxu0
        %v1345 = vld [vmem:[%s5 + $0x20] sm:$0xff]
        %v1346 = vld [vmem:[%s5 + $0x28] sm:$0xff]
        %v1347 = vld [vmem:[%s5 + $0x30] sm:$0xff]
        %v1348 = vld [vmem:[%s5 + $0x38] sm:$0xff]
        %v1350 = vsel %vm803, %v1327, 0
        %v1353 = vsel %vm803, %v1332, 0
        %v1356 = vsel %vm803, %v1337, 0
        %v1359 = vsel %vm803, %v1342, 0
        %1361 = vmatprep.subr.mxu0 0.0
        %1362 = vmatpush1.msra.mxu0 %v1345
        %1363 = vmatprep.subr.mxu0 0.0
        %1364 = vmatpush1.msra.mxu0 %v1346
        %1365 = vmatprep.subr.mxu0 0.0
        %1366 = vmatpush1.msra.mxu0 %v1347
        %1367 = vmatprep.subr.mxu0 0.0
        %1368 = vmatpush1.msra.mxu0 %v1348
        %1369 = vmatprep.subr.mxu0 0.0
        %1370 = vmatpush1.msra.mxu0 0.0
        %1371 = vmatprep.subr.mxu0 0.0
        %1372 = vmatpush1.msra.mxu0 0.0
        %1373 = vmatprep.subr.mxu0 0.0
        %1374 = vmatpush1.msra.mxu0 0.0
        %1375 = vmatprep.subr.mxu0 0.0
        %1376 = vmatpush1.msra.mxu0 0.0
        %1377 = vmatprep.subr.mxu0 0.0
        %1378 = vmatpush1.msra.mxu0 0.0
        %1379 = vmatprep.subr.mxu0 0.0
        %1380 = vmatpush1.msra.mxu0 0.0
        %1381 = vmatprep.subr.mxu0 0.0
        %1382 = vmatpush1.msra.mxu0 0.0
        %1383 = vmatprep.subr.mxu0 0.0
        %1384 = vmatpush1.msra.mxu0 0.0
        %1385 = vmatprep.subr.mxu0 0.0
        %1386 = vmatpush1.msra.mxu0 0.0
        %1387 = vmatprep.subr.mxu0 0.0
        %1388 = vmatpush1.msra.mxu0 0.0
        %1389 = vmatprep.subr.mxu0 0.0
        %1390 = vmatpush1.msra.mxu0 0.0
        %1391 = vmatprep.subr.mxu0 0.0
        %1392 = vmatpush1.msra.mxu0 0.0
        %1393 = vmatprep.subr.mxu0 0.0
        %1394 = vmatpush1.msra.mxu0 0.0
        %1395 = vmatprep.subr.mxu0 0.0
        %1396 = vmatpush1.msra.mxu0 0.0
        %1397 = vmatprep.subr.mxu0 0.0
        %1398 = vmatpush1.msra.mxu0 0.0
        %1399 = vmatprep.subr.mxu0 0.0
        %1400 = vmatpush1.msra.mxu0 0.0
        %1401 = vmatprep.subr.mxu0 0.0
        %1402 = vmatpush1.msra.mxu0 0.0
        %1403 = vmatprep.subr.mxu0 0.0
        %1404 = vmatpush1.msra.mxu0 0.0
        %1405 = vmatprep.subr.mxu0 0.0
        %1406 = vmatpush1.msra.mxu0 0.0
        %1407 = vmatprep.subr.mxu0 0.0
        %1408 = vmatpush1.msra.mxu0 0.0
        %1409 = vmatprep.subr.mxu0 0.0
        %1410 = vmatpush1.msra.mxu0 0.0
        %1411 = vmatprep.subr.mxu0 0.0
        %1412 = vmatpush1.msra.mxu0 0.0
        %1413 = vmatprep.subr.mxu0 0.0
        %1414 = vmatpush1.msra.mxu0 0.0
        %1415 = vmatprep.subr.mxu0 0.0
        %1416 = vmatpush1.msra.mxu0 0.0
        %1417 = vmatprep.subr.mxu0 0.0
        %1418 = vmatpush1.msra.mxu0 0.0
        %1419 = vmatprep.subr.mxu0 0.0
        %1420 = vmatpush1.msra.mxu0 0.0
        %1421 = vmatprep.subr.mxu0 0.0
        %1422 = vmatpush1.msra.mxu0 0.0
        %1423 = vmatprep.subr.mxu0 0.0
        %1424 = vmatpush1.msra.mxu0 0.0
        %1425 = vmatprep.mubr.f32.mxu0 0.0
        %1426 = vmatmul.mubr.f32.gmra.mrb[0].mxu0 %v1350
        %v1427 = vpop.f32.mrb[0].mxu0
        %v1428 = vadd.f32 0.0, %v1427
        %v1429 = vpop.f32.mrb[0].mxu0
        %1430 = vmatprep.mubr.f32.mxu0 0.0
        %1431 = vmatmul.mubr.f32.gmra.mrb[0].mxu0 %v1353
        %v1432 = vpop.f32.mrb[0].mxu0
        %v1433 = vadd.f32 0.0, %v1432
        %v1434 = vpop.f32.mrb[0].mxu0
        %1435 = vmatprep.mubr.f32.mxu0 0.0
        %1436 = vmatmul.mubr.f32.gmra.mrb[0].mxu0 %v1356
        %v1437 = vpop.f32.mrb[0].mxu0
        %v1438 = vadd.f32 0.0, %v1437
        %v1439 = vpop.f32.mrb[0].mxu0
        %1440 = vmatprep.mubr.f32.mxu0 0.0
        %1441 = vmatmul.mubr.f32.gmra.mrb[0].mxu0 %v1359
        %v1442 = vpop.f32.mrb[0].mxu0
        %v1443 = vadd.f32 0.0, %v1442
        %v1444 = vpop.f32.mrb[0].mxu0
        %1445 = vdwg.mxu0
        %v1447 = vsel %vm803, %v1045, 0
        %v1450 = vsel %vm803, %v1050, 0
        %v1453 = vsel %vm803, %v1055, 0
        %v1456 = vsel %vm803, %v1060, 0
        %1458 = vmatprep.subr.mxu0 0.0
        %1459 = vmatpush1.msra.mxu0 %v1063
        %1460 = vmatprep.subr.mxu0 0.0
        %1461 = vmatpush1.msra.mxu0 %v1064
        %1462 = vmatprep.subr.mxu0 0.0
        %1463 = vmatpush1.msra.mxu0 %v1065
        %1464 = vmatprep.subr.mxu0 0.0
        %1465 = vmatpush1.msra.mxu0 %v1066
        %1466 = vmatprep.subr.mxu0 0.0
        %1467 = vmatpush1.msra.mxu0 0.0
        %1468 = vmatprep.subr.mxu0 0.0
        %1469 = vmatpush1.msra.mxu0 0.0
        %1470 = vmatprep.subr.mxu0 0.0
        %1471 = vmatpush1.msra.mxu0 0.0
        %1472 = vmatprep.subr.mxu0 0.0
        %1473 = vmatpush1.msra.mxu0 0.0
        %1474 = vmatprep.subr.mxu0 0.0
        %1475 = vmatpush1.msra.mxu0 0.0
        %1476 = vmatprep.subr.mxu0 0.0
        %1477 = vmatpush1.msra.mxu0 0.0
        %1478 = vmatprep.subr.mxu0 0.0
        %1479 = vmatpush1.msra.mxu0 0.0
        %1480 = vmatprep.subr.mxu0 0.0
        %1481 = vmatpush1.msra.mxu0 0.0
        %1482 = vmatprep.subr.mxu0 0.0
        %1483 = vmatpush1.msra.mxu0 0.0
        %1484 = vmatprep.subr.mxu0 0.0
        %1485 = vmatpush1.msra.mxu0 0.0
        %1486 = vmatprep.subr.mxu0 0.0
        %1487 = vmatpush1.msra.mxu0 0.0
        %1488 = vmatprep.subr.mxu0 0.0
        %1489 = vmatpush1.msra.mxu0 0.0
        %1490 = vmatprep.subr.mxu0 0.0
        %1491 = vmatpush1.msra.mxu0 0.0
        %1492 = vmatprep.subr.mxu0 0.0
        %1493 = vmatpush1.msra.mxu0 0.0
        %1494 = vmatprep.subr.mxu0 0.0
        %1495 = vmatpush1.msra.mxu0 0.0
        %1496 = vmatprep.subr.mxu0 0.0
        %1497 = vmatpush1.msra.mxu0 0.0
        %1498 = vmatprep.subr.mxu0 0.0
        %1499 = vmatpush1.msra.mxu0 0.0
        %1500 = vmatprep.subr.mxu0 0.0
        %1501 = vmatpush1.msra.mxu0 0.0
        %1502 = vmatprep.subr.mxu0 0.0
        %1503 = vmatpush1.msra.mxu0 0.0
        %1504 = vmatprep.subr.mxu0 0.0
        %1505 = vmatpush1.msra.mxu0 0.0
        %1506 = vmatprep.subr.mxu0 0.0
        %1507 = vmatpush1.msra.mxu0 0.0
        %1508 = vmatprep.subr.mxu0 0.0
        %1509 = vmatpush1.msra.mxu0 0.0
        %1510 = vmatprep.subr.mxu0 0.0
        %1511 = vmatpush1.msra.mxu0 0.0
        %1512 = vmatprep.subr.mxu0 0.0
        %1513 = vmatpush1.msra.mxu0 0.0
        %1514 = vmatprep.subr.mxu0 0.0
        %1515 = vmatpush1.msra.mxu0 0.0
        %1516 = vmatprep.subr.mxu0 0.0
        %1517 = vmatpush1.msra.mxu0 0.0
        %1518 = vmatprep.subr.mxu0 0.0
        %1519 = vmatpush1.msra.mxu0 0.0
        %1520 = vmatprep.subr.mxu0 0.0
        %1521 = vmatpush1.msra.mxu0 0.0
        %1522 = vmatprep.mubr.f32.mxu0 0.0
        %1523 = vmatmul.mubr.f32.gmra.mrb[0].mxu0 %v1447
        %v1524 = vpop.f32.mrb[0].mxu0
        %v1525 = vadd.f32 %v1428, %v1524
        %v1526 = vpop.f32.mrb[0].mxu0
        %1527 = vmatprep.mubr.f32.mxu0 0.0
        %1528 = vmatmul.mubr.f32.gmra.mrb[0].mxu0 %v1450
        %v1529 = vpop.f32.mrb[0].mxu0
        %v1530 = vadd.f32 %v1433, %v1529
        %v1531 = vpop.f32.mrb[0].mxu0
        %1532 = vmatprep.mubr.f32.mxu0 0.0
        %1533 = vmatmul.mubr.f32.gmra.mrb[0].mxu0 %v1453
        %v1534 = vpop.f32.mrb[0].mxu0
        %v1535 = vadd.f32 %v1438, %v1534
        %v1536 = vpop.f32.mrb[0].mxu0
        %1537 = vmatprep.mubr.f32.mxu0 0.0
        %1538 = vmatmul.mubr.f32.gmra.mrb[0].mxu0 %v1456
        %v1539 = vpop.f32.mrb[0].mxu0
        %v1540 = vadd.f32 %v1443, %v1539
        %v1541 = vpop.f32.mrb[0].mxu0
        %1542 = vdwg.mxu0
        %1543 = vrot.lane.b32.xlu0 %v788, 64
        %v1544 = vpop.permute.xlu0 %1543
        %1545 = vrot.lane.b32.xlu0 %v789, 64
        %v1546 = vpop.permute.xlu0 %1545
        %1547 = vrot.lane.b32.xlu0 %v790, 64
        %v1548 = vpop.permute.xlu0 %1547
        %1549 = vrot.lane.b32.xlu0 %v791, 64
        %v1550 = vpop.permute.xlu0 %1549
        %1551 = vrot.lane.b32.xlu0 %v676, 64
        %v1552 = vpop.permute.xlu0 %1551
        %1553 = vrot.lane.b32.xlu0 %v682, 64
        %v1554 = vpop.permute.xlu0 %1553
        %1555 = vrot.lane.b32.xlu0 %v688, 64
        %v1556 = vpop.permute.xlu0 %1555
        %1557 = vrot.lane.b32.xlu0 %v694, 64
        %v1558 = vpop.permute.xlu0 %1557
        %v1559 = vsel %vm803, %v1544, 0
        %v1561 = vsel %vm803, %v1546, 0
        %v1563 = vsel %vm803, %v1548, 0
        %v1565 = vsel %vm803, %v1550, 0
        %v1567 = vsel %vm803, %v1552, 0
        %v1569 = vsel %vm803, %v1554, 0
        %v1571 = vsel %vm803, %v1556, 0
        %v1573 = vsel %vm803, %v1558, 0
        %1575 = vmatprep.subr.mxu0 0.0
        %1576 = vmatpush1.xpose.msra.mxu0 %v1567
        %1577 = vmatprep.subr.mxu0 0.0
        %1578 = vmatpush1.xpose.msra.mxu0 %v1569
        %1579 = vmatprep.subr.mxu0 0.0
        %1580 = vmatpush1.xpose.msra.mxu0 %v1571
        %1581 = vmatprep.subr.mxu0 0.0
        %1582 = vmatpush1.xpose.msra.mxu0 %v1573
        %1583 = vmatprep.subr.mxu0 0.0
        %1584 = vmatpush1.xpose.msra.mxu0 0.0
        %1585 = vmatprep.subr.mxu0 0.0
        %1586 = vmatpush1.xpose.msra.mxu0 0.0
        %1587 = vmatprep.subr.mxu0 0.0
        %1588 = vmatpush1.xpose.msra.mxu0 0.0
        %1589 = vmatprep.subr.mxu0 0.0
        %1590 = vmatpush1.xpose.msra.mxu0 0.0
        %1591 = vmatprep.subr.mxu0 0.0
        %1592 = vmatpush1.xpose.msra.mxu0 0.0
        %1593 = vmatprep.subr.mxu0 0.0
        %1594 = vmatpush1.xpose.msra.mxu0 0.0
        %1595 = vmatprep.subr.mxu0 0.0
        %1596 = vmatpush1.xpose.msra.mxu0 0.0
        %1597 = vmatprep.subr.mxu0 0.0
        %1598 = vmatpush1.xpose.msra.mxu0 0.0
        %1599 = vmatprep.subr.mxu0 0.0
        %1600 = vmatpush1.xpose.msra.mxu0 0.0
        %1601 = vmatprep.subr.mxu0 0.0
        %1602 = vmatpush1.xpose.msra.mxu0 0.0
        %1603 = vmatprep.subr.mxu0 0.0
        %1604 = vmatpush1.xpose.msra.mxu0 0.0
        %1605 = vmatprep.subr.mxu0 0.0
        %1606 = vmatpush1.xpose.msra.mxu0 0.0
        %1607 = vmatprep.subr.mxu0 0.0
        %1608 = vmatpush1.xpose.msra.mxu0 0.0
        %1609 = vmatprep.subr.mxu0 0.0
        %1610 = vmatpush1.xpose.msra.mxu0 0.0
        %1611 = vmatprep.subr.mxu0 0.0
        %1612 = vmatpush1.xpose.msra.mxu0 0.0
        %1613 = vmatprep.subr.mxu0 0.0
        %1614 = vmatpush1.xpose.msra.mxu0 0.0
        %1615 = vmatprep.subr.mxu0 0.0
        %1616 = vmatpush1.xpose.msra.mxu0 0.0
        %1617 = vmatprep.subr.mxu0 0.0
        %1618 = vmatpush1.xpose.msra.mxu0 0.0
        %1619 = vmatprep.subr.mxu0 0.0
        %1620 = vmatpush1.xpose.msra.mxu0 0.0
        %1621 = vmatprep.subr.mxu0 0.0
        %1622 = vmatpush1.xpose.msra.mxu0 0.0
        %1623 = vmatprep.subr.mxu0 0.0
        %1624 = vmatpush1.xpose.msra.mxu0 0.0
        %1625 = vmatprep.subr.mxu0 0.0
        %1626 = vmatpush1.xpose.msra.mxu0 0.0
        %1627 = vmatprep.subr.mxu0 0.0
        %1628 = vmatpush1.xpose.msra.mxu0 0.0
        %1629 = vmatprep.subr.mxu0 0.0
        %1630 = vmatpush1.xpose.msra.mxu0 0.0
        %1631 = vmatprep.subr.mxu0 0.0
        %1632 = vmatpush1.xpose.msra.mxu0 0.0
        %1633 = vmatprep.subr.mxu0 0.0
        %1634 = vmatpush1.xpose.msra.mxu0 0.0
        %1635 = vmatprep.subr.mxu0 0.0
        %1636 = vmatpush1.xpose.msra.mxu0 0.0
        %1637 = vmatprep.subr.mxu0 0.0
        %1638 = vmatpush1.xpose.msra.mxu0 0.0
        %1639 = vmatprep.mubr.f32.mxu0 0.0
        %1640 = vmatmul.mubr.f32.gmra.mrb[0].mxu0 %v1559
        %v1641 = vpop.f32.mrb[0].mxu0
        %v1642 = vadd.f32 0.0, %v1641
        %v1643 = vpop.f32.mrb[0].mxu0
        %1644 = vmatprep.mubr.f32.mxu0 0.0
        %1645 = vmatmul.mubr.f32.gmra.mrb[0].mxu0 %v1561
        %v1646 = vpop.f32.mrb[0].mxu0
        %v1647 = vadd.f32 0.0, %v1646
        %v1648 = vpop.f32.mrb[0].mxu0
        %1649 = vmatprep.mubr.f32.mxu0 0.0
        %1650 = vmatmul.mubr.f32.gmra.mrb[0].mxu0 %v1563
        %v1651 = vpop.f32.mrb[0].mxu0
        %v1652 = vadd.f32 0.0, %v1651
        %v1653 = vpop.f32.mrb[0].mxu0
        %1654 = vmatprep.mubr.f32.mxu0 0.0
        %1655 = vmatmul.mubr.f32.gmra.mrb[0].mxu0 %v1565
        %v1656 = vpop.f32.mrb[0].mxu0
        %v1657 = vadd.f32 0.0, %v1656
        %v1658 = vpop.f32.mrb[0].mxu0
        %1659 = vdwg.mxu0
        %v1660 = vsel %vm799, -9.8765434e+08, %v1642
        %v1661 = vsel %vm800, -9.8765434e+08, %v1647
        %v1662 = vsel %vm801, -9.8765434e+08, %v1652
        %v1663 = vsel %vm802, -9.8765434e+08, %v1657
        %v1664 = vsel %vm917, %v1660, -inf
        %1665 = vmax.xlane.f32.xlu0 %v1664
        %v1666 = vpop.xlane.xlu0 %1665
        %v1667 = vsel %vm917, %v1661, -inf
        %1668 = vmax.xlane.f32.xlu0 %v1667
        %v1669 = vpop.xlane.xlu0 %1668
        %v1670 = vsel %vm917, %v1662, -inf
        %1671 = vmax.xlane.f32.xlu0 %v1670
        %v1672 = vpop.xlane.xlu0 %1671
        %v1673 = vsel %vm927, %v1663, -inf
        %1674 = vmax.xlane.f32.xlu0 %v1673
        %v1675 = vpop.xlane.xlu0 %1674
        %v1676 = vsub.f32 %v1660, %v1666
        %v1677 = vsub.f32 %v1661, %v1669
        %v1678 = vsub.f32 %v1662, %v1672
        %v1679 = vsub.f32 %v1663, %v1675
        %v1680 = vmul.f32 %v1676, 1.442695
        %v1681 = vpow.pop %v1680
        %v1682 = vmul.f32 %v1677, 1.442695
        %v1683 = vpow.pop %v1682
        %v1684 = vmul.f32 %v1678, 1.442695
        %v1685 = vpow.pop %v1684
        %v1686 = vmul.f32 %v1679, 1.442695
        %v1687 = vpow.pop %v1686
        %v1688 = vsel %vm917, %v1681, 0.0
        %1689 = vadd.xlane.f32.xlu0 %v1688
        %v1690 = vpop.xlane.xlu0 %1689
        %v1691 = vsel %vm917, %v1683, 0.0
        %1692 = vadd.xlane.f32.xlu0 %v1691
        %v1693 = vpop.xlane.xlu0 %1692
        %v1694 = vsel %vm917, %v1685, 0.0
        %1695 = vadd.xlane.f32.xlu0 %v1694
        %v1696 = vpop.xlane.xlu0 %1695
        %v1697 = vsel %vm927, %v1687, 0.0
        %1698 = vadd.xlane.f32.xlu0 %v1697
        %v1699 = vpop.xlane.xlu0 %1698
        %v1700 = vrcp.pop %v1690
        %v1701 = vmul.f32 %v1681, %v1700
        %v1702 = vrcp.pop %v1693
        %v1703 = vmul.f32 %v1683, %v1702
        %v1704 = vrcp.pop %v1696
        %v1705 = vmul.f32 %v1685, %v1704
        %v1706 = vrcp.pop %v1699
        %v1707 = vmul.f32 %v1687, %v1706
        %1708 = vrot.lane.b32.xlu0 %v763, 64
        %v1709 = vpop.permute.xlu0 %1708
        %1710 = vrot.lane.b32.xlu0 %v768, 64
        %v1711 = vpop.permute.xlu0 %1710
        %1712 = vrot.lane.b32.xlu0 %v773, 64
        %v1713 = vpop.permute.xlu0 %1712
        %1714 = vrot.lane.b32.xlu0 %v778, 64
        %v1715 = vpop.permute.xlu0 %1714
        %v1720 = vsel %vm917, %v1701, 0
        %v1723 = vsel %vm917, %v1703, 0
        %v1726 = vsel %vm917, %v1705, 0
        %v1729 = vsel %vm917, %v1707, 0
        %v1731 = vsel %vm497, %v1715, 0
        %1733 = vmatprep.subr.mxu0 0.0
        %1734 = vmatpush1.msra.mxu0 %v1709
        %1735 = vmatprep.subr.mxu0 0.0
        %1736 = vmatpush1.msra.mxu0 %v1711
        %1737 = vmatprep.subr.mxu0 0.0
        %1738 = vmatpush1.msra.mxu0 %v1713
        %1739 = vmatprep.subr.mxu0 0.0
        %1740 = vmatpush1.msra.mxu0 %v1731
        %1741 = vmatprep.subr.mxu0 0.0
        %1742 = vmatpush1.msra.mxu0 0.0
        %1743 = vmatprep.subr.mxu0 0.0
        %1744 = vmatpush1.msra.mxu0 0.0
        %1745 = vmatprep.subr.mxu0 0.0
        %1746 = vmatpush1.msra.mxu0 0.0
        %1747 = vmatprep.subr.mxu0 0.0
        %1748 = vmatpush1.msra.mxu0 0.0
        %1749 = vmatprep.subr.mxu0 0.0
        %1750 = vmatpush1.msra.mxu0 0.0
        %1751 = vmatprep.subr.mxu0 0.0
        %1752 = vmatpush1.msra.mxu0 0.0
        %1753 = vmatprep.subr.mxu0 0.0
        %1754 = vmatpush1.msra.mxu0 0.0
        %1755 = vmatprep.subr.mxu0 0.0
        %1756 = vmatpush1.msra.mxu0 0.0
        %1757 = vmatprep.subr.mxu0 0.0
        %1758 = vmatpush1.msra.mxu0 0.0
        %1759 = vmatprep.subr.mxu0 0.0
        %1760 = vmatpush1.msra.mxu0 0.0
        %1761 = vmatprep.subr.mxu0 0.0
        %1762 = vmatpush1.msra.mxu0 0.0
        %1763 = vmatprep.subr.mxu0 0.0
        %1764 = vmatpush1.msra.mxu0 0.0
        %1765 = vmatprep.subr.mxu0 0.0
        %1766 = vmatpush1.msra.mxu0 0.0
        %1767 = vmatprep.subr.mxu0 0.0
        %1768 = vmatpush1.msra.mxu0 0.0
        %1769 = vmatprep.subr.mxu0 0.0
        %1770 = vmatpush1.msra.mxu0 0.0
        %1771 = vmatprep.subr.mxu0 0.0
        %1772 = vmatpush1.msra.mxu0 0.0
        %1773 = vmatprep.subr.mxu0 0.0
        %1774 = vmatpush1.msra.mxu0 0.0
        %1775 = vmatprep.subr.mxu0 0.0
        %1776 = vmatpush1.msra.mxu0 0.0
        %1777 = vmatprep.subr.mxu0 0.0
        %1778 = vmatpush1.msra.mxu0 0.0
        %1779 = vmatprep.subr.mxu0 0.0
        %1780 = vmatpush1.msra.mxu0 0.0
        %1781 = vmatprep.subr.mxu0 0.0
        %1782 = vmatpush1.msra.mxu0 0.0
        %1783 = vmatprep.subr.mxu0 0.0
        %1784 = vmatpush1.msra.mxu0 0.0
        %1785 = vmatprep.subr.mxu0 0.0
        %1786 = vmatpush1.msra.mxu0 0.0
        %1787 = vmatprep.subr.mxu0 0.0
        %1788 = vmatpush1.msra.mxu0 0.0
        %1789 = vmatprep.subr.mxu0 0.0
        %1790 = vmatpush1.msra.mxu0 0.0
        %1791 = vmatprep.subr.mxu0 0.0
        %1792 = vmatpush1.msra.mxu0 0.0
        %1793 = vmatprep.subr.mxu0 0.0
        %1794 = vmatpush1.msra.mxu0 0.0
        %1795 = vmatprep.subr.mxu0 0.0
        %1796 = vmatpush1.msra.mxu0 0.0
        %1797 = vmatprep.mubr.f32.mxu0 0.0
        %1798 = vmatmul.mubr.f32.gmra.mrb[0].mxu0 %v1720
        %v1799 = vpop.f32.mrb[0].mxu0
        %v1800 = vadd.f32 0.0, %v1799
        %v1801 = vpop.f32.mrb[0].mxu0
        %1802 = vmatprep.mubr.f32.mxu0 0.0
        %1803 = vmatmul.mubr.f32.gmra.mrb[0].mxu0 %v1723
        %v1804 = vpop.f32.mrb[0].mxu0
        %v1805 = vadd.f32 0.0, %v1804
        %v1806 = vpop.f32.mrb[0].mxu0
        %1807 = vmatprep.mubr.f32.mxu0 0.0
        %1808 = vmatmul.mubr.f32.gmra.mrb[0].mxu0 %v1726
        %v1809 = vpop.f32.mrb[0].mxu0
        %v1810 = vadd.f32 0.0, %v1809
        %v1811 = vpop.f32.mrb[0].mxu0
        %1812 = vmatprep.mubr.f32.mxu0 0.0
        %1813 = vmatmul.mubr.f32.gmra.mrb[0].mxu0 %v1729
        %v1814 = vpop.f32.mrb[0].mxu0
        %v1815 = vadd.f32 0.0, %v1814
        %v1816 = vpop.f32.mrb[0].mxu0
        %1817 = vdwg.mxu0
        %v1818 = vld [vmem:[%s5 + $0x40] sm:$0xff]
        %v1819 = vld [vmem:[%s5 + $0x48] sm:$0xff]
        %v1820 = vld [vmem:[%s5 + $0x50] sm:$0xff]
        %v1821 = vld [vmem:[%s5 + $0x58] sm:$0xff]
        %v1823 = vsel %vm803, %v1800, 0
        %v1826 = vsel %vm803, %v1805, 0
        %v1829 = vsel %vm803, %v1810, 0
        %v1832 = vsel %vm803, %v1815, 0
        %1834 = vmatprep.subr.mxu0 0.0
        %1835 = vmatpush1.msra.mxu0 %v1818
        %1836 = vmatprep.subr.mxu0 0.0
        %1837 = vmatpush1.msra.mxu0 %v1819
        %1838 = vmatprep.subr.mxu0 0.0
        %1839 = vmatpush1.msra.mxu0 %v1820
        %1840 = vmatprep.subr.mxu0 0.0
        %1841 = vmatpush1.msra.mxu0 %v1821
        %1842 = vmatprep.subr.mxu0 0.0
        %1843 = vmatpush1.msra.mxu0 0.0
        %1844 = vmatprep.subr.mxu0 0.0
        %1845 = vmatpush1.msra.mxu0 0.0
        %1846 = vmatprep.subr.mxu0 0.0
        %1847 = vmatpush1.msra.mxu0 0.0
        %1848 = vmatprep.subr.mxu0 0.0
        %1849 = vmatpush1.msra.mxu0 0.0
        %1850 = vmatprep.subr.mxu0 0.0
        %1851 = vmatpush1.msra.mxu0 0.0
        %1852 = vmatprep.subr.mxu0 0.0
        %1853 = vmatpush1.msra.mxu0 0.0
        %1854 = vmatprep.subr.mxu0 0.0
        %1855 = vmatpush1.msra.mxu0 0.0
        %1856 = vmatprep.subr.mxu0 0.0
        %1857 = vmatpush1.msra.mxu0 0.0
        %1858 = vmatprep.subr.mxu0 0.0
        %1859 = vmatpush1.msra.mxu0 0.0
        %1860 = vmatprep.subr.mxu0 0.0
        %1861 = vmatpush1.msra.mxu0 0.0
        %1862 = vmatprep.subr.mxu0 0.0
        %1863 = vmatpush1.msra.mxu0 0.0
        %1864 = vmatprep.subr.mxu0 0.0
        %1865 = vmatpush1.msra.mxu0 0.0
        %1866 = vmatprep.subr.mxu0 0.0
        %1867 = vmatpush1.msra.mxu0 0.0
        %1868 = vmatprep.subr.mxu0 0.0
        %1869 = vmatpush1.msra.mxu0 0.0
        %1870 = vmatprep.subr.mxu0 0.0
        %1871 = vmatpush1.msra.mxu0 0.0
        %1872 = vmatprep.subr.mxu0 0.0
        %1873 = vmatpush1.msra.mxu0 0.0
        %1874 = vmatprep.subr.mxu0 0.0
        %1875 = vmatpush1.msra.mxu0 0.0
        %1876 = vmatprep.subr.mxu0 0.0
        %1877 = vmatpush1.msra.mxu0 0.0
        %1878 = vmatprep.subr.mxu0 0.0
        %1879 = vmatpush1.msra.mxu0 0.0
        %1880 = vmatprep.subr.mxu0 0.0
        %1881 = vmatpush1.msra.mxu0 0.0
        %1882 = vmatprep.subr.mxu0 0.0
        %1883 = vmatpush1.msra.mxu0 0.0
        %1884 = vmatprep.subr.mxu0 0.0
        %1885 = vmatpush1.msra.mxu0 0.0
        %1886 = vmatprep.subr.mxu0 0.0
        %1887 = vmatpush1.msra.mxu0 0.0
        %1888 = vmatprep.subr.mxu0 0.0
        %1889 = vmatpush1.msra.mxu0 0.0
        %1890 = vmatprep.subr.mxu0 0.0
        %1891 = vmatpush1.msra.mxu0 0.0
        %1892 = vmatprep.subr.mxu0 0.0
        %1893 = vmatpush1.msra.mxu0 0.0
        %1894 = vmatprep.subr.mxu0 0.0
        %1895 = vmatpush1.msra.mxu0 0.0
        %1896 = vmatprep.subr.mxu0 0.0
        %1897 = vmatpush1.msra.mxu0 0.0
        %1898 = vmatprep.mubr.f32.mxu0 0.0
        %1899 = vmatmul.mubr.f32.gmra.mrb[0].mxu0 %v1823
        %v1900 = vpop.f32.mrb[0].mxu0
        %v1901 = vadd.f32 0.0, %v1900
        %v1902 = vpop.f32.mrb[0].mxu0
        %1903 = vmatprep.mubr.f32.mxu0 0.0
        %1904 = vmatmul.mubr.f32.gmra.mrb[0].mxu0 %v1826
        %v1905 = vpop.f32.mrb[0].mxu0
        %v1906 = vadd.f32 0.0, %v1905
        %v1907 = vpop.f32.mrb[0].mxu0
        %1908 = vmatprep.mubr.f32.mxu0 0.0
        %1909 = vmatmul.mubr.f32.gmra.mrb[0].mxu0 %v1829
        %v1910 = vpop.f32.mrb[0].mxu0
        %v1911 = vadd.f32 0.0, %v1910
        %v1912 = vpop.f32.mrb[0].mxu0
        %1913 = vmatprep.mubr.f32.mxu0 0.0
        %1914 = vmatmul.mubr.f32.gmra.mrb[0].mxu0 %v1832
        %v1915 = vpop.f32.mrb[0].mxu0
        %v1916 = vadd.f32 0.0, %v1915
        %v1917 = vpop.f32.mrb[0].mxu0
        %1918 = vdwg.mxu0
        %v1919 = vadd.f32 %v1525, %v1901
        %v1920 = vadd.f32 %v1530, %v1906
        %v1921 = vadd.f32 %v1535, %v1911
        %v1922 = vadd.f32 %v1540, %v1916
        %1923 = vrot.lane.b32.xlu0 %v788, 32
        %v1924 = vpop.permute.xlu0 %1923
        %1925 = vrot.lane.b32.xlu0 %v789, 32
        %v1926 = vpop.permute.xlu0 %1925
        %1927 = vrot.lane.b32.xlu0 %v790, 32
        %v1928 = vpop.permute.xlu0 %1927
        %1929 = vrot.lane.b32.xlu0 %v791, 32
        %v1930 = vpop.permute.xlu0 %1929
        %1931 = vrot.lane.b32.xlu0 %v676, 32
        %v1932 = vpop.permute.xlu0 %1931
        %1933 = vrot.lane.b32.xlu0 %v682, 32
        %v1934 = vpop.permute.xlu0 %1933
        %1935 = vrot.lane.b32.xlu0 %v688, 32
        %v1936 = vpop.permute.xlu0 %1935
        %1937 = vrot.lane.b32.xlu0 %v694, 32
        %v1938 = vpop.permute.xlu0 %1937
        %v1939 = vsel %vm803, %v1924, 0
        %v1941 = vsel %vm803, %v1926, 0
        %v1943 = vsel %vm803, %v1928, 0
        %v1945 = vsel %vm803, %v1930, 0
        %v1947 = vsel %vm803, %v1932, 0
        %v1949 = vsel %vm803, %v1934, 0
        %v1951 = vsel %vm803, %v1936, 0
        %v1953 = vsel %vm803, %v1938, 0
        %1955 = vmatprep.subr.mxu0 0.0
        %1956 = vmatpush1.xpose.msra.mxu0 %v1947
        %1957 = vmatprep.subr.mxu0 0.0
        %1958 = vmatpush1.xpose.msra.mxu0 %v1949
        %1959 = vmatprep.subr.mxu0 0.0
        %1960 = vmatpush1.xpose.msra.mxu0 %v1951
        %1961 = vmatprep.subr.mxu0 0.0
        %1962 = vmatpush1.xpose.msra.mxu0 %v1953
        %1963 = vmatprep.subr.mxu0 0.0
        %1964 = vmatpush1.xpose.msra.mxu0 0.0
        %1965 = vmatprep.subr.mxu0 0.0
        %1966 = vmatpush1.xpose.msra.mxu0 0.0
        %1967 = vmatprep.subr.mxu0 0.0
        %1968 = vmatpush1.xpose.msra.mxu0 0.0
        %1969 = vmatprep.subr.mxu0 0.0
        %1970 = vmatpush1.xpose.msra.mxu0 0.0
        %1971 = vmatprep.subr.mxu0 0.0
        %1972 = vmatpush1.xpose.msra.mxu0 0.0
        %1973 = vmatprep.subr.mxu0 0.0
        %1974 = vmatpush1.xpose.msra.mxu0 0.0
        %1975 = vmatprep.subr.mxu0 0.0
        %1976 = vmatpush1.xpose.msra.mxu0 0.0
        %1977 = vmatprep.subr.mxu0 0.0
        %1978 = vmatpush1.xpose.msra.mxu0 0.0
        %1979 = vmatprep.subr.mxu0 0.0
        %1980 = vmatpush1.xpose.msra.mxu0 0.0
        %1981 = vmatprep.subr.mxu0 0.0
        %1982 = vmatpush1.xpose.msra.mxu0 0.0
        %1983 = vmatprep.subr.mxu0 0.0
        %1984 = vmatpush1.xpose.msra.mxu0 0.0
        %1985 = vmatprep.subr.mxu0 0.0
        %1986 = vmatpush1.xpose.msra.mxu0 0.0
        %1987 = vmatprep.subr.mxu0 0.0
        %1988 = vmatpush1.xpose.msra.mxu0 0.0
        %1989 = vmatprep.subr.mxu0 0.0
        %1990 = vmatpush1.xpose.msra.mxu0 0.0
        %1991 = vmatprep.subr.mxu0 0.0
        %1992 = vmatpush1.xpose.msra.mxu0 0.0
        %1993 = vmatprep.subr.mxu0 0.0
        %1994 = vmatpush1.xpose.msra.mxu0 0.0
        %1995 = vmatprep.subr.mxu0 0.0
        %1996 = vmatpush1.xpose.msra.mxu0 0.0
        %1997 = vmatprep.subr.mxu0 0.0
        %1998 = vmatpush1.xpose.msra.mxu0 0.0
        %1999 = vmatprep.subr.mxu0 0.0
        %2000 = vmatpush1.xpose.msra.mxu0 0.0
        %2001 = vmatprep.subr.mxu0 0.0
        %2002 = vmatpush1.xpose.msra.mxu0 0.0
        %2003 = vmatprep.subr.mxu0 0.0
        %2004 = vmatpush1.xpose.msra.mxu0 0.0
        %2005 = vmatprep.subr.mxu0 0.0
        %2006 = vmatpush1.xpose.msra.mxu0 0.0
        %2007 = vmatprep.subr.mxu0 0.0
        %2008 = vmatpush1.xpose.msra.mxu0 0.0
        %2009 = vmatprep.subr.mxu0 0.0
        %2010 = vmatpush1.xpose.msra.mxu0 0.0
        %2011 = vmatprep.subr.mxu0 0.0
        %2012 = vmatpush1.xpose.msra.mxu0 0.0
        %2013 = vmatprep.subr.mxu0 0.0
        %2014 = vmatpush1.xpose.msra.mxu0 0.0
        %2015 = vmatprep.subr.mxu0 0.0
        %2016 = vmatpush1.xpose.msra.mxu0 0.0
        %2017 = vmatprep.subr.mxu0 0.0
        %2018 = vmatpush1.xpose.msra.mxu0 0.0
        %2019 = vmatprep.mubr.f32.mxu0 0.0
        %2020 = vmatmul.mubr.f32.gmra.mrb[0].mxu0 %v1939
        %v2021 = vpop.f32.mrb[0].mxu0
        %v2022 = vadd.f32 0.0, %v2021
        %v2023 = vpop.f32.mrb[0].mxu0
        %2024 = vmatprep.mubr.f32.mxu0 0.0
        %2025 = vmatmul.mubr.f32.gmra.mrb[0].mxu0 %v1941
        %v2026 = vpop.f32.mrb[0].mxu0
        %v2027 = vadd.f32 0.0, %v2026
        %v2028 = vpop.f32.mrb[0].mxu0
        %2029 = vmatprep.mubr.f32.mxu0 0.0
        %2030 = vmatmul.mubr.f32.gmra.mrb[0].mxu0 %v1943
        %v2031 = vpop.f32.mrb[0].mxu0
        %v2032 = vadd.f32 0.0, %v2031
        %v2033 = vpop.f32.mrb[0].mxu0
        %2034 = vmatprep.mubr.f32.mxu0 0.0
        %2035 = vmatmul.mubr.f32.gmra.mrb[0].mxu0 %v1945
        %v2036 = vpop.f32.mrb[0].mxu0
        %v2037 = vadd.f32 0.0, %v2036
        %v2038 = vpop.f32.mrb[0].mxu0
        %2039 = vdwg.mxu0
        %v2040 = vsel %vm799, -9.8765434e+08, %v2022
        %v2041 = vsel %vm800, -9.8765434e+08, %v2027
        %v2042 = vsel %vm801, -9.8765434e+08, %v2032
        %v2043 = vsel %vm802, -9.8765434e+08, %v2037
        %v2044 = vsel %vm917, %v2040, -inf
        %2045 = vmax.xlane.f32.xlu0 %v2044
        %v2046 = vpop.xlane.xlu0 %2045
        %v2047 = vsel %vm917, %v2041, -inf
        %2048 = vmax.xlane.f32.xlu0 %v2047
        %v2049 = vpop.xlane.xlu0 %2048
        %v2050 = vsel %vm917, %v2042, -inf
        %2051 = vmax.xlane.f32.xlu0 %v2050
        %v2052 = vpop.xlane.xlu0 %2051
        %v2053 = vsel %vm927, %v2043, -inf
        %2054 = vmax.xlane.f32.xlu0 %v2053
        %v2055 = vpop.xlane.xlu0 %2054
        %v2056 = vsub.f32 %v2040, %v2046
        %v2057 = vsub.f32 %v2041, %v2049
        %v2058 = vsub.f32 %v2042, %v2052
        %v2059 = vsub.f32 %v2043, %v2055
        %v2060 = vmul.f32 %v2056, 1.442695
        %v2061 = vpow.pop %v2060
        %v2062 = vmul.f32 %v2057, 1.442695
        %v2063 = vpow.pop %v2062
        %v2064 = vmul.f32 %v2058, 1.442695
        %v2065 = vpow.pop %v2064
        %v2066 = vmul.f32 %v2059, 1.442695
        %v2067 = vpow.pop %v2066
        %v2068 = vsel %vm917, %v2061, 0.0
        %2069 = vadd.xlane.f32.xlu0 %v2068
        %v2070 = vpop.xlane.xlu0 %2069
        %v2071 = vsel %vm917, %v2063, 0.0
        %2072 = vadd.xlane.f32.xlu0 %v2071
        %v2073 = vpop.xlane.xlu0 %2072
        %v2074 = vsel %vm917, %v2065, 0.0
        %2075 = vadd.xlane.f32.xlu0 %v2074
        %v2076 = vpop.xlane.xlu0 %2075
        %v2077 = vsel %vm927, %v2067, 0.0
        %2078 = vadd.xlane.f32.xlu0 %v2077
        %v2079 = vpop.xlane.xlu0 %2078
        %v2080 = vrcp.pop %v2070
        %v2081 = vmul.f32 %v2061, %v2080
        %v2082 = vrcp.pop %v2073
        %v2083 = vmul.f32 %v2063, %v2082
        %v2084 = vrcp.pop %v2076
        %v2085 = vmul.f32 %v2065, %v2084
        %v2086 = vrcp.pop %v2079
        %v2087 = vmul.f32 %v2067, %v2086
        %2088 = vrot.lane.b32.xlu0 %v763, 32
        %v2089 = vpop.permute.xlu0 %2088
        %2090 = vrot.lane.b32.xlu0 %v768, 32
        %v2091 = vpop.permute.xlu0 %2090
        %2092 = vrot.lane.b32.xlu0 %v773, 32
        %v2093 = vpop.permute.xlu0 %2092
        %2094 = vrot.lane.b32.xlu0 %v778, 32
        %v2095 = vpop.permute.xlu0 %2094
        %v2100 = vsel %vm917, %v2081, 0
        %v2103 = vsel %vm917, %v2083, 0
        %v2106 = vsel %vm917, %v2085, 0
        %v2109 = vsel %vm917, %v2087, 0
        %v2111 = vsel %vm497, %v2095, 0
        %2113 = vmatprep.subr.mxu0 0.0
        %2114 = vmatpush1.msra.mxu0 %v2089
        %2115 = vmatprep.subr.mxu0 0.0
        %2116 = vmatpush1.msra.mxu0 %v2091
        %2117 = vmatprep.subr.mxu0 0.0
        %2118 = vmatpush1.msra.mxu0 %v2093
        %2119 = vmatprep.subr.mxu0 0.0
        %2120 = vmatpush1.msra.mxu0 %v2111
        %2121 = vmatprep.subr.mxu0 0.0
        %2122 = vmatpush1.msra.mxu0 0.0
        %2123 = vmatprep.subr.mxu0 0.0
        %2124 = vmatpush1.msra.mxu0 0.0
        %2125 = vmatprep.subr.mxu0 0.0
        %2126 = vmatpush1.msra.mxu0 0.0
        %2127 = vmatprep.subr.mxu0 0.0
        %2128 = vmatpush1.msra.mxu0 0.0
        %2129 = vmatprep.subr.mxu0 0.0
        %2130 = vmatpush1.msra.mxu0 0.0
        %2131 = vmatprep.subr.mxu0 0.0
        %2132 = vmatpush1.msra.mxu0 0.0
        %2133 = vmatprep.subr.mxu0 0.0
        %2134 = vmatpush1.msra.mxu0 0.0
        %2135 = vmatprep.subr.mxu0 0.0
        %2136 = vmatpush1.msra.mxu0 0.0
        %2137 = vmatprep.subr.mxu0 0.0
        %2138 = vmatpush1.msra.mxu0 0.0
        %2139 = vmatprep.subr.mxu0 0.0
        %2140 = vmatpush1.msra.mxu0 0.0
        %2141 = vmatprep.subr.mxu0 0.0
        %2142 = vmatpush1.msra.mxu0 0.0
        %2143 = vmatprep.subr.mxu0 0.0
        %2144 = vmatpush1.msra.mxu0 0.0
        %2145 = vmatprep.subr.mxu0 0.0
        %2146 = vmatpush1.msra.mxu0 0.0
        %2147 = vmatprep.subr.mxu0 0.0
        %2148 = vmatpush1.msra.mxu0 0.0
        %2149 = vmatprep.subr.mxu0 0.0
        %2150 = vmatpush1.msra.mxu0 0.0
        %2151 = vmatprep.subr.mxu0 0.0
        %2152 = vmatpush1.msra.mxu0 0.0
        %2153 = vmatprep.subr.mxu0 0.0
        %2154 = vmatpush1.msra.mxu0 0.0
        %2155 = vmatprep.subr.mxu0 0.0
        %2156 = vmatpush1.msra.mxu0 0.0
        %2157 = vmatprep.subr.mxu0 0.0
        %2158 = vmatpush1.msra.mxu0 0.0
        %2159 = vmatprep.subr.mxu0 0.0
        %2160 = vmatpush1.msra.mxu0 0.0
        %2161 = vmatprep.subr.mxu0 0.0
        %2162 = vmatpush1.msra.mxu0 0.0
        %2163 = vmatprep.subr.mxu0 0.0
        %2164 = vmatpush1.msra.mxu0 0.0
        %2165 = vmatprep.subr.mxu0 0.0
        %2166 = vmatpush1.msra.mxu0 0.0
        %2167 = vmatprep.subr.mxu0 0.0
        %2168 = vmatpush1.msra.mxu0 0.0
        %2169 = vmatprep.subr.mxu0 0.0
        %2170 = vmatpush1.msra.mxu0 0.0
        %2171 = vmatprep.subr.mxu0 0.0
        %2172 = vmatpush1.msra.mxu0 0.0
        %2173 = vmatprep.subr.mxu0 0.0
        %2174 = vmatpush1.msra.mxu0 0.0
        %2175 = vmatprep.subr.mxu0 0.0
        %2176 = vmatpush1.msra.mxu0 0.0
        %2177 = vmatprep.mubr.f32.mxu0 0.0
        %2178 = vmatmul.mubr.f32.gmra.mrb[0].mxu0 %v2100
        %v2179 = vpop.f32.mrb[0].mxu0
        %v2180 = vadd.f32 0.0, %v2179
        %v2181 = vpop.f32.mrb[0].mxu0
        %2182 = vmatprep.mubr.f32.mxu0 0.0
        %2183 = vmatmul.mubr.f32.gmra.mrb[0].mxu0 %v2103
        %v2184 = vpop.f32.mrb[0].mxu0
        %v2185 = vadd.f32 0.0, %v2184
        %v2186 = vpop.f32.mrb[0].mxu0
        %2187 = vmatprep.mubr.f32.mxu0 0.0
        %2188 = vmatmul.mubr.f32.gmra.mrb[0].mxu0 %v2106
        %v2189 = vpop.f32.mrb[0].mxu0
        %v2190 = vadd.f32 0.0, %v2189
        %v2191 = vpop.f32.mrb[0].mxu0
        %2192 = vmatprep.mubr.f32.mxu0 0.0
        %2193 = vmatmul.mubr.f32.gmra.mrb[0].mxu0 %v2109
        %v2194 = vpop.f32.mrb[0].mxu0
        %v2195 = vadd.f32 0.0, %v2194
        %v2196 = vpop.f32.mrb[0].mxu0
        %2197 = vdwg.mxu0
        %v2198 = vld [vmem:[%s5 + $0x60] sm:$0xff]
        %v2199 = vld [vmem:[%s5 + $0x68] sm:$0xff]
        %v2200 = vld [vmem:[%s5 + $0x70] sm:$0xff]
        %v2201 = vld [vmem:[%s5 + $0x78] sm:$0xff]
        %v2203 = vsel %vm803, %v2180, 0
        %v2206 = vsel %vm803, %v2185, 0
        %v2209 = vsel %vm803, %v2190, 0
        %v2212 = vsel %vm803, %v2195, 0
        %2214 = vmatprep.subr.mxu0 0.0
        %2215 = vmatpush1.msra.mxu0 %v2198
        %2216 = vmatprep.subr.mxu0 0.0
        %2217 = vmatpush1.msra.mxu0 %v2199
        %2218 = vmatprep.subr.mxu0 0.0
        %2219 = vmatpush1.msra.mxu0 %v2200
        %2220 = vmatprep.subr.mxu0 0.0
        %2221 = vmatpush1.msra.mxu0 %v2201
        %2222 = vmatprep.subr.mxu0 0.0
        %2223 = vmatpush1.msra.mxu0 0.0
        %2224 = vmatprep.subr.mxu0 0.0
        %2225 = vmatpush1.msra.mxu0 0.0
        %2226 = vmatprep.subr.mxu0 0.0
        %2227 = vmatpush1.msra.mxu0 0.0
        %2228 = vmatprep.subr.mxu0 0.0
        %2229 = vmatpush1.msra.mxu0 0.0
        %2230 = vmatprep.subr.mxu0 0.0
        %2231 = vmatpush1.msra.mxu0 0.0
        %2232 = vmatprep.subr.mxu0 0.0
        %2233 = vmatpush1.msra.mxu0 0.0
        %2234 = vmatprep.subr.mxu0 0.0
        %2235 = vmatpush1.msra.mxu0 0.0
        %2236 = vmatprep.subr.mxu0 0.0
        %2237 = vmatpush1.msra.mxu0 0.0
        %2238 = vmatprep.subr.mxu0 0.0
        %2239 = vmatpush1.msra.mxu0 0.0
        %2240 = vmatprep.subr.mxu0 0.0
        %2241 = vmatpush1.msra.mxu0 0.0
        %2242 = vmatprep.subr.mxu0 0.0
        %2243 = vmatpush1.msra.mxu0 0.0
        %2244 = vmatprep.subr.mxu0 0.0
        %2245 = vmatpush1.msra.mxu0 0.0
        %2246 = vmatprep.subr.mxu0 0.0
        %2247 = vmatpush1.msra.mxu0 0.0
        %2248 = vmatprep.subr.mxu0 0.0
        %2249 = vmatpush1.msra.mxu0 0.0
        %2250 = vmatprep.subr.mxu0 0.0
        %2251 = vmatpush1.msra.mxu0 0.0
        %2252 = vmatprep.subr.mxu0 0.0
        %2253 = vmatpush1.msra.mxu0 0.0
        %2254 = vmatprep.subr.mxu0 0.0
        %2255 = vmatpush1.msra.mxu0 0.0
        %2256 = vmatprep.subr.mxu0 0.0
        %2257 = vmatpush1.msra.mxu0 0.0
        %2258 = vmatprep.subr.mxu0 0.0
        %2259 = vmatpush1.msra.mxu0 0.0
        %2260 = vmatprep.subr.mxu0 0.0
        %2261 = vmatpush1.msra.mxu0 0.0
        %2262 = vmatprep.subr.mxu0 0.0
        %2263 = vmatpush1.msra.mxu0 0.0
        %2264 = vmatprep.subr.mxu0 0.0
        %2265 = vmatpush1.msra.mxu0 0.0
        %2266 = vmatprep.subr.mxu0 0.0
        %2267 = vmatpush1.msra.mxu0 0.0
        %2268 = vmatprep.subr.mxu0 0.0
        %2269 = vmatpush1.msra.mxu0 0.0
        %2270 = vmatprep.subr.mxu0 0.0
        %2271 = vmatpush1.msra.mxu0 0.0
        %2272 = vmatprep.subr.mxu0 0.0
        %2273 = vmatpush1.msra.mxu0 0.0
        %2274 = vmatprep.subr.mxu0 0.0
        %2275 = vmatpush1.msra.mxu0 0.0
        %2276 = vmatprep.subr.mxu0 0.0
        %2277 = vmatpush1.msra.mxu0 0.0
        %2278 = vmatprep.mubr.f32.mxu0 0.0
        %2279 = vmatmul.mubr.f32.gmra.mrb[0].mxu0 %v2203
        %v2280 = vpop.f32.mrb[0].mxu0
        %v2281 = vadd.f32 0.0, %v2280
        %v2282 = vpop.f32.mrb[0].mxu0
        %2283 = vmatprep.mubr.f32.mxu0 0.0
        %2284 = vmatmul.mubr.f32.gmra.mrb[0].mxu0 %v2206
        %v2285 = vpop.f32.mrb[0].mxu0
        %v2286 = vadd.f32 0.0, %v2285
        %v2287 = vpop.f32.mrb[0].mxu0
        %2288 = vmatprep.mubr.f32.mxu0 0.0
        %2289 = vmatmul.mubr.f32.gmra.mrb[0].mxu0 %v2209
        %v2290 = vpop.f32.mrb[0].mxu0
        %v2291 = vadd.f32 0.0, %v2290
        %v2292 = vpop.f32.mrb[0].mxu0
        %2293 = vmatprep.mubr.f32.mxu0 0.0
        %2294 = vmatmul.mubr.f32.gmra.mrb[0].mxu0 %v2212
        %v2295 = vpop.f32.mrb[0].mxu0
        %v2296 = vadd.f32 0.0, %v2295
        %v2297 = vpop.f32.mrb[0].mxu0
        %2298 = vdwg.mxu0
        %v2299 = vadd.f32 %v1919, %v2281
        %v2300 = vadd.f32 %v1920, %v2286
        %v2301 = vadd.f32 %v1921, %v2291
        %v2302 = vadd.f32 %v1922, %v2296
        %v2303 = vld [vmem:[%s6] sm:$0x1]
        %v2305 = vlaneseq
        %v2306 = vshrl.u32 %v2305, 7
        %v2307 = vsub.s32 0, %v2306
        %v2308 = vrot.slane %v2303, %v2307
        %v2310 = vadd.f32 %v2299, %v2308
        %v2311 = vadd.f32 %v2300, %v2308
        %v2312 = vadd.f32 %v2301, %v2308
        %v2313 = vadd.f32 %v2302, %v2308
        %v2314 = vadd.f32 %v485, %v2310
        %v2315 = vadd.f32 %v486, %v2311
        %v2316 = vadd.f32 %v487, %v2312
        %v2317 = vadd.f32 %v488, %v2313
        %v2318 = vld [vmem:[%s7] sm:$0x1]
        %v2319 = vld [vmem:[%s8] sm:$0x1]
        %2320 = vadd.xlane.f32.xlu0 %v2314
        %v2321 = vpop.xlane.xlu0 %2320
        %2322 = vadd.xlane.f32.xlu0 %v2315
        %v2323 = vpop.xlane.xlu0 %2322
        %2324 = vadd.xlane.f32.xlu0 %v2316
        %v2325 = vpop.xlane.xlu0 %2324
        %v2326 = vsel %vm497, %v2317, 0.0
        %2327 = vadd.xlane.f32.xlu0 %v2326
        %v2328 = vpop.xlane.xlu0 %2327
        %v2329 = vmul.f32 %v2321, %v501
        %v2330 = vmul.f32 %v2323, %v501
        %v2331 = vmul.f32 %v2325, %v501
        %v2332 = vmul.f32 %v2328, %v501
        %v2333 = vsub.f32 %v2314, %v2329
        %v2334 = vsub.f32 %v2315, %v2330
        %v2335 = vsub.f32 %v2316, %v2331
        %v2336 = vsub.f32 %v2317, %v2332
        %v2337 = vmul.f32 %v2333, %v2333
        %v2338 = vmul.f32 %v2334, %v2334
        %v2339 = vmul.f32 %v2335, %v2335
        %v2340 = vmul.f32 %v2336, %v2336
        %2341 = vadd.xlane.f32.xlu0 %v2337
        %v2342 = vpop.xlane.xlu0 %2341
        %2343 = vadd.xlane.f32.xlu0 %v2338
        %v2344 = vpop.xlane.xlu0 %2343
        %2345 = vadd.xlane.f32.xlu0 %v2339
        %v2346 = vpop.xlane.xlu0 %2345
        %v2347 = vsel %vm497, %v2340, 0.0
        %2348 = vadd.xlane.f32.xlu0 %v2347
        %v2349 = vpop.xlane.xlu0 %2348
        %v2350 = vmul.f32 %v2342, %v501
        %v2351 = vmul.f32 %v2344, %v501
        %v2352 = vmul.f32 %v2346, %v501
        %v2353 = vmul.f32 %v2349, %v501
        %v2354 = vadd.f32 %v2350, 1e-05
        %v2355 = vadd.f32 %v2351, 1e-05
        %v2356 = vadd.f32 %v2352, 1e-05
        %v2357 = vadd.f32 %v2353, 1e-05
        %v2358 = vrsqrt.pop %v2354
        %v2359 = vrsqrt.pop %v2355
        %v2360 = vrsqrt.pop %v2356
        %v2361 = vrsqrt.pop %v2357
        %v2362 = vmul.f32 %v2333, %v2358
        %v2363 = vmul.f32 %v2334, %v2359
        %v2364 = vmul.f32 %v2335, %v2360
        %v2365 = vmul.f32 %v2336, %v2361
        %v2367 = vlaneseq
        %v2368 = vshrl.u32 %v2367, 7
        %v2369 = vsub.s32 0, %v2368
        %v2370 = vrot.slane %v2318, %v2369
        %v2372 = vmul.f32 %v2362, %v2370
        %v2373 = vmul.f32 %v2363, %v2370
        %v2374 = vmul.f32 %v2364, %v2370
        %v2375 = vmul.f32 %v2365, %v2370
        %v2377 = vlaneseq
        %v2378 = vshrl.u32 %v2377, 7
        %v2379 = vsub.s32 0, %v2378
        %v2380 = vrot.slane %v2319, %v2379
        %v2382 = vadd.f32 %v2372, %v2380
        %v2383 = vadd.f32 %v2373, %v2380
        %v2384 = vadd.f32 %v2374, %v2380
        %v2385 = vadd.f32 %v2375, %v2380
        %v2386 = vld [vmem:[#allocation4] sm:$0xff]
        %v2387 = vld [vmem:[#allocation4 + $0x8] sm:$0xff]
        %v2388 = vld [vmem:[#allocation4 + $0x10] sm:$0xff]
        %v2389 = vld [vmem:[#allocation4 + $0x18] sm:$0xff]
        %v2390 = vld [vmem:[#allocation4 + $0x20] sm:$0xff]
        %v2391 = vld [vmem:[#allocation4 + $0x28] sm:$0xff]
        %v2392 = vld [vmem:[#allocation4 + $0x30] sm:$0xff]
        %v2393 = vld [vmem:[#allocation4 + $0x38] sm:$0xff]
        %v2394 = vld [vmem:[#allocation4 + $0x40] sm:$0xff]
        %v2395 = vld [vmem:[#allocation4 + $0x48] sm:$0xff]
        %v2396 = vld [vmem:[#allocation4 + $0x50] sm:$0xff]
        %v2397 = vld [vmem:[#allocation4 + $0x58] sm:$0xff]
        %v2398 = vld [vmem:[#allocation4 + $0x60] sm:$0xff]
        %v2399 = vld [vmem:[#allocation4 + $0x68] sm:$0xff]
        %v2400 = vld [vmem:[#allocation4 + $0x70] sm:$0xff]
        %v2401 = vld [vmem:[#allocation4 + $0x78] sm:$0xff]
        %v2402 = vld [vmem:[#allocation4 + $0x80] sm:$0xff]
        %v2403 = vld [vmem:[#allocation4 + $0x88] sm:$0xff]
        %v2404 = vld [vmem:[#allocation4 + $0x90] sm:$0xff]
        %v2405 = vld [vmem:[#allocation4 + $0x98] sm:$0xff]
        %v2406 = vld [vmem:[#allocation4 + $0xa0] sm:$0xff]
        %v2407 = vld [vmem:[#allocation4 + $0xa8] sm:$0xff]
        %v2408 = vld [vmem:[#allocation4 + $0xb0] sm:$0xff]
        %v2409 = vld [vmem:[#allocation4 + $0xb8] sm:$0xff]
        %v2410 = vld [vmem:[#allocation4 + $0xc0] sm:$0xff]
        %v2411 = vld [vmem:[#allocation4 + $0xc8] sm:$0xff]
        %v2412 = vld [vmem:[#allocation4 + $0xd0] sm:$0xff]
        %v2413 = vld [vmem:[#allocation4 + $0xd8] sm:$0xff]
        %v2414 = vld [vmem:[#allocation4 + $0xe0] sm:$0xff]
        %v2415 = vld [vmem:[#allocation4 + $0xe8] sm:$0xff]
        %v2416 = vld [vmem:[#allocation4 + $0xf0] sm:$0xff]
        %v2417 = vld [vmem:[#allocation4 + $0xf8] sm:$0xff]
        %v2418 = vld [vmem:[#allocation4 + $0x100] sm:$0xff]
        %v2419 = vld [vmem:[#allocation4 + $0x108] sm:$0xff]
        %v2420 = vld [vmem:[#allocation4 + $0x110] sm:$0xff]
        %v2421 = vld [vmem:[#allocation4 + $0x118] sm:$0xff]
        %v2422 = vld [vmem:[#allocation4 + $0x120] sm:$0xff]
        %v2423 = vld [vmem:[#allocation4 + $0x128] sm:$0xff]
        %v2424 = vld [vmem:[#allocation4 + $0x130] sm:$0xff]
        %v2425 = vld [vmem:[#allocation4 + $0x138] sm:$0xff]
        %v2426 = vld [vmem:[#allocation4 + $0x140] sm:$0xff]
        %v2427 = vld [vmem:[#allocation4 + $0x148] sm:$0xff]
        %v2428 = vld [vmem:[#allocation4 + $0x150] sm:$0xff]
        %v2429 = vld [vmem:[#allocation4 + $0x158] sm:$0xff]
        %v2430 = vld [vmem:[#allocation4 + $0x160] sm:$0xff]
        %v2431 = vld [vmem:[#allocation4 + $0x168] sm:$0xff]
        %v2432 = vld [vmem:[#allocation4 + $0x170] sm:$0xff]
        %v2433 = vld [vmem:[#allocation4 + $0x178] sm:$0xff]
        %v2434 = vld [vmem:[#allocation4 + $0x180] sm:$0xff]
        %v2435 = vld [vmem:[#allocation4 + $0x188] sm:$0xff]
        %v2436 = vld [vmem:[#allocation4 + $0x190] sm:$0xff]
        %v2437 = vld [vmem:[#allocation4 + $0x198] sm:$0xff]
        %v2438 = vld [vmem:[#allocation4 + $0x1a0] sm:$0xff]
        %v2439 = vld [vmem:[#allocation4 + $0x1a8] sm:$0xff]
        %v2440 = vld [vmem:[#allocation4 + $0x1b0] sm:$0xff]
        %v2441 = vld [vmem:[#allocation4 + $0x1b8] sm:$0xff]
        %v2442 = vld [vmem:[#allocation4 + $0x1c0] sm:$0xff]
        %v2443 = vld [vmem:[#allocation4 + $0x1c8] sm:$0xff]
        %v2444 = vld [vmem:[#allocation4 + $0x1d0] sm:$0xff]
        %v2445 = vld [vmem:[#allocation4 + $0x1d8] sm:$0xff]
        %v2446 = vld [vmem:[#allocation4 + $0x1e0] sm:$0xff]
        %v2447 = vld [vmem:[#allocation4 + $0x1e8] sm:$0xff]
        %v2448 = vld [vmem:[#allocation4 + $0x1f0] sm:$0xff]
        %v2449 = vld [vmem:[#allocation4 + $0x1f8] sm:$0xff]
        %v2450 = vld [vmem:[%s10] sm:$0xf]
        %v2452 = vlaneseq
        %v2453 = vshrl.u32 %v2452, 7
        %v2454 = vsub.s32 0, %v2453
        %v2455 = vrot.slane %v2450, %v2454
        %v2456 = vlaneseq
        %v2457 = vshrl.u32 %v2456, 7
        %v2458 = vsub.s32 1, %v2457
        %v2459 = vrot.slane %v2450, %v2458
        %v2460 = vlaneseq
        %v2461 = vshrl.u32 %v2460, 7
        %v2462 = vsub.s32 2, %v2461
        %v2463 = vrot.slane %v2450, %v2462
        %v2464 = vlaneseq
        %v2465 = vshrl.u32 %v2464, 7
        %v2466 = vsub.s32 3, %v2465
        %v2467 = vrot.slane %v2450, %v2466
        %2472 = vmatprep.subr.mxu0 %v2387
        %2473 = vmatpush1.msra.mxu0 %v2386
        %2474 = vmatprep.subr.mxu0 %v2391
        %2475 = vmatpush1.msra.mxu0 %v2390
        %2476 = vmatprep.subr.mxu0 %v2395
        %2477 = vmatpush1.msra.mxu0 %v2394
        %2478 = vmatprep.subr.mxu0 %v2399
        %2479 = vmatpush1.msra.mxu0 %v2398
        %2480 = vmatprep.subr.mxu0 %v2403
        %2481 = vmatpush1.msra.mxu0 %v2402
        %2482 = vmatprep.subr.mxu0 %v2407
        %2483 = vmatpush1.msra.mxu0 %v2406
        %2484 = vmatprep.subr.mxu0 %v2411
        %2485 = vmatpush1.msra.mxu0 %v2410
        %2486 = vmatprep.subr.mxu0 %v2415
        %2487 = vmatpush1.msra.mxu0 %v2414
        %2488 = vmatprep.subr.mxu0 %v2419
        %2489 = vmatpush1.msra.mxu0 %v2418
        %2490 = vmatprep.subr.mxu0 %v2423
        %2491 = vmatpush1.msra.mxu0 %v2422
        %2492 = vmatprep.subr.mxu0 %v2427
        %2493 = vmatpush1.msra.mxu0 %v2426
        %2494 = vmatprep.subr.mxu0 %v2431
        %2495 = vmatpush1.msra.mxu0 %v2430
        %2496 = vmatprep.subr.mxu0 %v2435
        %2497 = vmatpush1.msra.mxu0 %v2434
        %2498 = vmatprep.subr.mxu0 %v2439
        %2499 = vmatpush1.msra.mxu0 %v2438
        %2500 = vmatprep.subr.mxu0 %v2443
        %2501 = vmatpush1.msra.mxu0 %v2442
        %2502 = vmatprep.subr.mxu0 %v2447
        %2503 = vmatpush1.msra.mxu0 %v2446
        %2504 = vmatprep.subr.mxu0 0.0
        %2505 = vmatpush1.msra.mxu0 0.0
        %2506 = vmatprep.subr.mxu0 0.0
        %2507 = vmatpush1.msra.mxu0 0.0
        %2508 = vmatprep.subr.mxu0 0.0
        %2509 = vmatpush1.msra.mxu0 0.0
        %2510 = vmatprep.subr.mxu0 0.0
        %2511 = vmatpush1.msra.mxu0 0.0
        %2512 = vmatprep.subr.mxu0 0.0
        %2513 = vmatpush1.msra.mxu0 0.0
        %2514 = vmatprep.subr.mxu0 0.0
        %2515 = vmatpush1.msra.mxu0 0.0
        %2516 = vmatprep.subr.mxu0 0.0
        %2517 = vmatpush1.msra.mxu0 0.0
        %2518 = vmatprep.subr.mxu0 0.0
        %2519 = vmatpush1.msra.mxu0 0.0
        %2520 = vmatprep.subr.mxu0 0.0
        %2521 = vmatpush1.msra.mxu0 0.0
        %2522 = vmatprep.subr.mxu0 0.0
        %2523 = vmatpush1.msra.mxu0 0.0
        %2524 = vmatprep.subr.mxu0 0.0
        %2525 = vmatpush1.msra.mxu0 0.0
        %2526 = vmatprep.subr.mxu0 0.0
        %2527 = vmatpush1.msra.mxu0 0.0
        %2528 = vmatprep.subr.mxu0 0.0
        %2529 = vmatpush1.msra.mxu0 0.0
        %2530 = vmatprep.subr.mxu0 0.0
        %2531 = vmatpush1.msra.mxu0 0.0
        %2532 = vmatprep.subr.mxu0 0.0
        %2533 = vmatpush1.msra.mxu0 0.0
        %2534 = vmatprep.subr.mxu0 0.0
        %2535 = vmatpush1.msra.mxu0 0.0
        %2536 = vmatprep.mubr.f32.mxu0 0.0
        %2537 = vmatmul.mubr.f32.gmra.mrb[0].mxu0 %v2382
        %v2538 = vpop.f32.mrb[0].mxu0
        %v2539 = vadd.f32 %v2455, %v2538
        %v2540 = vpop.f32.mrb[0].mxu0
        %v2541 = vadd.f32 %v2459, %v2540
        %2542 = vmatprep.mubr.f32.mxu0 0.0
        %2543 = vmatmul.mubr.f32.gmra.mrb[0].mxu0 %v2383
        %v2544 = vpop.f32.mrb[0].mxu0
        %v2545 = vadd.f32 %v2455, %v2544
        %v2546 = vpop.f32.mrb[0].mxu0
        %v2547 = vadd.f32 %v2459, %v2546
        %2548 = vmatprep.mubr.f32.mxu0 0.0
        %2549 = vmatmul.mubr.f32.gmra.mrb[0].mxu0 %v2384
        %v2550 = vpop.f32.mrb[0].mxu0
        %v2551 = vadd.f32 %v2455, %v2550
        %v2552 = vpop.f32.mrb[0].mxu0
        %v2553 = vadd.f32 %v2459, %v2552
        %2554 = vmatprep.mubr.f32.mxu0 0.0
        %2555 = vmatmul.mubr.f32.gmra.mrb[0].mxu0 %v2385
        %v2556 = vpop.f32.mrb[0].mxu0
        %v2557 = vadd.f32 %v2455, %v2556
        %v2558 = vpop.f32.mrb[0].mxu0
        %v2559 = vadd.f32 %v2459, %v2558
        %2560 = vdwg.mxu0
        %2561 = vmatprep.subr.mxu0 %v2389
        %2562 = vmatpush1.msra.mxu0 %v2388
        %2563 = vmatprep.subr.mxu0 %v2393
        %2564 = vmatpush1.msra.mxu0 %v2392
        %2565 = vmatprep.subr.mxu0 %v2397
        %2566 = vmatpush1.msra.mxu0 %v2396
        %2567 = vmatprep.subr.mxu0 %v2401
        %2568 = vmatpush1.msra.mxu0 %v2400
        %2569 = vmatprep.subr.mxu0 %v2405
        %2570 = vmatpush1.msra.mxu0 %v2404
        %2571 = vmatprep.subr.mxu0 %v2409
        %2572 = vmatpush1.msra.mxu0 %v2408
        %2573 = vmatprep.subr.mxu0 %v2413
        %2574 = vmatpush1.msra.mxu0 %v2412
        %2575 = vmatprep.subr.mxu0 %v2417
        %2576 = vmatpush1.msra.mxu0 %v2416
        %2577 = vmatprep.subr.mxu0 %v2421
        %2578 = vmatpush1.msra.mxu0 %v2420
        %2579 = vmatprep.subr.mxu0 %v2425
        %2580 = vmatpush1.msra.mxu0 %v2424
        %2581 = vmatprep.subr.mxu0 %v2429
        %2582 = vmatpush1.msra.mxu0 %v2428
        %2583 = vmatprep.subr.mxu0 %v2433
        %2584 = vmatpush1.msra.mxu0 %v2432
        %2585 = vmatprep.subr.mxu0 %v2437
        %2586 = vmatpush1.msra.mxu0 %v2436
        %2587 = vmatprep.subr.mxu0 %v2441
        %2588 = vmatpush1.msra.mxu0 %v2440
        %2589 = vmatprep.subr.mxu0 %v2445
        %2590 = vmatpush1.msra.mxu0 %v2444
        %2591 = vmatprep.subr.mxu0 %v2449
        %2592 = vmatpush1.msra.mxu0 %v2448
        %2593 = vmatprep.subr.mxu0 0.0
        %2594 = vmatpush1.msra.mxu0 0.0
        %2595 = vmatprep.subr.mxu0 0.0
        %2596 = vmatpush1.msra.mxu0 0.0
        %2597 = vmatprep.subr.mxu0 0.0
        %2598 = vmatpush1.msra.mxu0 0.0
        %2599 = vmatprep.subr.mxu0 0.0
        %2600 = vmatpush1.msra.mxu0 0.0
        %2601 = vmatprep.subr.mxu0 0.0
        %2602 = vmatpush1.msra.mxu0 0.0
        %2603 = vmatprep.subr.mxu0 0.0
        %2604 = vmatpush1.msra.mxu0 0.0
        %2605 = vmatprep.subr.mxu0 0.0
        %2606 = vmatpush1.msra.mxu0 0.0
        %2607 = vmatprep.subr.mxu0 0.0
        %2608 = vmatpush1.msra.mxu0 0.0
        %2609 = vmatprep.subr.mxu0 0.0
        %2610 = vmatpush1.msra.mxu0 0.0
        %2611 = vmatprep.subr.mxu0 0.0
        %2612 = vmatpush1.msra.mxu0 0.0
        %2613 = vmatprep.subr.mxu0 0.0
        %2614 = vmatpush1.msra.mxu0 0.0
        %2615 = vmatprep.subr.mxu0 0.0
        %2616 = vmatpush1.msra.mxu0 0.0
        %2617 = vmatprep.subr.mxu0 0.0
        %2618 = vmatpush1.msra.mxu0 0.0
        %2619 = vmatprep.subr.mxu0 0.0
        %2620 = vmatpush1.msra.mxu0 0.0
        %2621 = vmatprep.subr.mxu0 0.0
        %2622 = vmatpush1.msra.mxu0 0.0
        %2623 = vmatprep.subr.mxu0 0.0
        %2624 = vmatpush1.msra.mxu0 0.0
        %2625 = vmatprep.mubr.f32.mxu0 0.0
        %2626 = vmatmul.mubr.f32.gmra.mrb[0].mxu0 %v2382
        %v2627 = vpop.f32.mrb[0].mxu0
        %v2628 = vadd.f32 %v2463, %v2627
        %v2629 = vpop.f32.mrb[0].mxu0
        %v2630 = vadd.f32 %v2467, %v2629
        %2631 = vmatprep.mubr.f32.mxu0 0.0
        %2632 = vmatmul.mubr.f32.gmra.mrb[0].mxu0 %v2383
        %v2633 = vpop.f32.mrb[0].mxu0
        %v2634 = vadd.f32 %v2463, %v2633
        %v2635 = vpop.f32.mrb[0].mxu0
        %v2636 = vadd.f32 %v2467, %v2635
        %2637 = vmatprep.mubr.f32.mxu0 0.0
        %2638 = vmatmul.mubr.f32.gmra.mrb[0].mxu0 %v2384
        %v2639 = vpop.f32.mrb[0].mxu0
        %v2640 = vadd.f32 %v2463, %v2639
        %v2641 = vpop.f32.mrb[0].mxu0
        %v2642 = vadd.f32 %v2467, %v2641
        %2643 = vmatprep.mubr.f32.mxu0 0.0
        %2644 = vmatmul.mubr.f32.gmra.mrb[0].mxu0 %v2385
        %v2645 = vpop.f32.mrb[0].mxu0
        %v2646 = vadd.f32 %v2463, %v2645
        %v2647 = vpop.f32.mrb[0].mxu0
        %v2648 = vadd.f32 %v2467, %v2647
        %2649 = vdwg.mxu0
        %v2650 = vmul.f32 %v2539, %v2539
        %v2651 = vmul.f32 %v2541, %v2541
        %v2652 = vmul.f32 %v2628, %v2628
        %v2653 = vmul.f32 %v2630, %v2630
        %v2654 = vmul.f32 %v2545, %v2545
        %v2655 = vmul.f32 %v2547, %v2547
        %v2656 = vmul.f32 %v2634, %v2634
        %v2657 = vmul.f32 %v2636, %v2636
        %v2658 = vmul.f32 %v2551, %v2551
        %v2659 = vmul.f32 %v2553, %v2553
        %v2660 = vmul.f32 %v2640, %v2640
        %v2661 = vmul.f32 %v2642, %v2642
        %v2662 = vmul.f32 %v2557, %v2557
        %v2663 = vmul.f32 %v2559, %v2559
        %v2664 = vmul.f32 %v2646, %v2646
        %v2665 = vmul.f32 %v2648, %v2648
        %v2666 = vmul.f32 %v2539, %v2650
        %v2667 = vmul.f32 %v2541, %v2651
        %v2668 = vmul.f32 %v2628, %v2652
        %v2669 = vmul.f32 %v2630, %v2653
        %v2670 = vmul.f32 %v2545, %v2654
        %v2671 = vmul.f32 %v2547, %v2655
        %v2672 = vmul.f32 %v2634, %v2656
        %v2673 = vmul.f32 %v2636, %v2657
        %v2674 = vmul.f32 %v2551, %v2658
        %v2675 = vmul.f32 %v2553, %v2659
        %v2676 = vmul.f32 %v2640, %v2660
        %v2677 = vmul.f32 %v2642, %v2661
        %v2678 = vmul.f32 %v2557, %v2662
        %v2679 = vmul.f32 %v2559, %v2663
        %v2680 = vmul.f32 %v2646, %v2664
        %v2681 = vmul.f32 %v2648, %v2665
        %v2682 = vmul.f32 %v2666, 0.044715
        %v2683 = vmul.f32 %v2667, 0.044715
        %v2684 = vmul.f32 %v2668, 0.044715
        %v2685 = vmul.f32 %v2669, 0.044715
        %v2686 = vmul.f32 %v2670, 0.044715
        %v2687 = vmul.f32 %v2671, 0.044715
        %v2688 = vmul.f32 %v2672, 0.044715
        %v2689 = vmul.f32 %v2673, 0.044715
        %v2690 = vmul.f32 %v2674, 0.044715
        %v2691 = vmul.f32 %v2675, 0.044715
        %v2692 = vmul.f32 %v2676, 0.044715
        %v2693 = vmul.f32 %v2677, 0.044715
        %v2694 = vmul.f32 %v2678, 0.044715
        %v2695 = vmul.f32 %v2679, 0.044715
        %v2696 = vmul.f32 %v2680, 0.044715
        %v2697 = vmul.f32 %v2681, 0.044715
        %v2698 = vadd.f32 %v2539, %v2682
        %v2699 = vadd.f32 %v2541, %v2683
        %v2700 = vadd.f32 %v2628, %v2684
        %v2701 = vadd.f32 %v2630, %v2685
        %v2702 = vadd.f32 %v2545, %v2686
        %v2703 = vadd.f32 %v2547, %v2687
        %v2704 = vadd.f32 %v2634, %v2688
        %v2705 = vadd.f32 %v2636, %v2689
        %v2706 = vadd.f32 %v2551, %v2690
        %v2707 = vadd.f32 %v2553, %v2691
        %v2708 = vadd.f32 %v2640, %v2692
        %v2709 = vadd.f32 %v2642, %v2693
        %v2710 = vadd.f32 %v2557, %v2694
        %v2711 = vadd.f32 %v2559, %v2695
        %v2712 = vadd.f32 %v2646, %v2696
        %v2713 = vadd.f32 %v2648, %v2697
        %v2714 = vmul.f32 %v2698, 0.7978846
        %v2715 = vmul.f32 %v2699, 0.7978846
        %v2716 = vmul.f32 %v2700, 0.7978846
        %v2717 = vmul.f32 %v2701, 0.7978846
        %v2718 = vmul.f32 %v2702, 0.7978846
        %v2719 = vmul.f32 %v2703, 0.7978846
        %v2720 = vmul.f32 %v2704, 0.7978846
        %v2721 = vmul.f32 %v2705, 0.7978846
        %v2722 = vmul.f32 %v2706, 0.7978846
        %v2723 = vmul.f32 %v2707, 0.7978846
        %v2724 = vmul.f32 %v2708, 0.7978846
        %v2725 = vmul.f32 %v2709, 0.7978846
        %v2726 = vmul.f32 %v2710, 0.7978846
        %v2727 = vmul.f32 %v2711, 0.7978846
        %v2728 = vmul.f32 %v2712, 0.7978846
        %v2729 = vmul.f32 %v2713, 0.7978846
        %v2730 = vtanh.pop %v2714
        %v2731 = vtanh.pop %v2715
        %v2732 = vtanh.pop %v2716
        %v2733 = vtanh.pop %v2717
        %v2734 = vtanh.pop %v2718
        %v2735 = vtanh.pop %v2719
        %v2736 = vtanh.pop %v2720
        %v2737 = vtanh.pop %v2721
        %v2738 = vtanh.pop %v2722
        %v2739 = vtanh.pop %v2723
        %v2740 = vtanh.pop %v2724
        %v2741 = vtanh.pop %v2725
        %v2742 = vtanh.pop %v2726
        %v2743 = vtanh.pop %v2727
        %v2744 = vtanh.pop %v2728
        %v2745 = vtanh.pop %v2729
        %v2746 = vadd.f32 %v2730, 1.0
        %v2747 = vadd.f32 %v2731, 1.0
        %v2748 = vadd.f32 %v2732, 1.0
        %v2749 = vadd.f32 %v2733, 1.0
        %v2750 = vadd.f32 %v2734, 1.0
        %v2751 = vadd.f32 %v2735, 1.0
        %v2752 = vadd.f32 %v2736, 1.0
        %v2753 = vadd.f32 %v2737, 1.0
        %v2754 = vadd.f32 %v2738, 1.0
        %v2755 = vadd.f32 %v2739, 1.0
        %v2756 = vadd.f32 %v2740, 1.0
        %v2757 = vadd.f32 %v2741, 1.0
        %v2758 = vadd.f32 %v2742, 1.0
        %v2759 = vadd.f32 %v2743, 1.0
        %v2760 = vadd.f32 %v2744, 1.0
        %v2761 = vadd.f32 %v2745, 1.0
        %v2762 = vmul.f32 %v2746, 0.5
        %v2763 = vmul.f32 %v2747, 0.5
        %v2764 = vmul.f32 %v2748, 0.5
        %v2765 = vmul.f32 %v2749, 0.5
        %v2766 = vmul.f32 %v2750, 0.5
        %v2767 = vmul.f32 %v2751, 0.5
        %v2768 = vmul.f32 %v2752, 0.5
        %v2769 = vmul.f32 %v2753, 0.5
        %v2770 = vmul.f32 %v2754, 0.5
        %v2771 = vmul.f32 %v2755, 0.5
        %v2772 = vmul.f32 %v2756, 0.5
        %v2773 = vmul.f32 %v2757, 0.5
        %v2774 = vmul.f32 %v2758, 0.5
        %v2775 = vmul.f32 %v2759, 0.5
        %v2776 = vmul.f32 %v2760, 0.5
        %v2777 = vmul.f32 %v2761, 0.5
        %v2778 = vmul.f32 %v2539, %v2762
        %v2779 = vmul.f32 %v2541, %v2763
        %v2780 = vmul.f32 %v2628, %v2764
        %v2781 = vmul.f32 %v2630, %v2765
        %v2782 = vmul.f32 %v2545, %v2766
        %v2783 = vmul.f32 %v2547, %v2767
        %v2784 = vmul.f32 %v2634, %v2768
        %v2785 = vmul.f32 %v2636, %v2769
        %v2786 = vmul.f32 %v2551, %v2770
        %v2787 = vmul.f32 %v2553, %v2771
        %v2788 = vmul.f32 %v2640, %v2772
        %v2789 = vmul.f32 %v2642, %v2773
        %v2790 = vmul.f32 %v2557, %v2774
        %v2791 = vmul.f32 %v2559, %v2775
        %v2792 = vmul.f32 %v2646, %v2776
        %v2793 = vmul.f32 %v2648, %v2777
        %v2794 = vld [vmem:[#allocation6] sm:$0xff]
        %v2795 = vld [vmem:[#allocation6 + $0x8] sm:$0xff]
        %v2796 = vld [vmem:[#allocation6 + $0x10] sm:$0xff]
        %v2797 = vld [vmem:[#allocation6 + $0x18] sm:$0xff]
        %v2798 = vld [vmem:[#allocation6 + $0x20] sm:$0xff]
        %v2799 = vld [vmem:[#allocation6 + $0x28] sm:$0xff]
        %v2800 = vld [vmem:[#allocation6 + $0x30] sm:$0xff]
        %v2801 = vld [vmem:[#allocation6 + $0x38] sm:$0xff]
        %v2802 = vld [vmem:[#allocation6 + $0x40] sm:$0xff]
        %v2803 = vld [vmem:[#allocation6 + $0x48] sm:$0xff]
        %v2804 = vld [vmem:[#allocation6 + $0x50] sm:$0xff]
        %v2805 = vld [vmem:[#allocation6 + $0x58] sm:$0xff]
        %v2806 = vld [vmem:[#allocation6 + $0x60] sm:$0xff]
        %v2807 = vld [vmem:[#allocation6 + $0x68] sm:$0xff]
        %v2808 = vld [vmem:[#allocation6 + $0x70] sm:$0xff]
        %v2809 = vld [vmem:[#allocation6 + $0x78] sm:$0xff]
        %v2810 = vld [vmem:[#allocation6 + $0x80] sm:$0xff]
        %v2811 = vld [vmem:[#allocation6 + $0x88] sm:$0xff]
        %v2812 = vld [vmem:[#allocation6 + $0x90] sm:$0xff]
        %v2813 = vld [vmem:[#allocation6 + $0x98] sm:$0xff]
        %v2814 = vld [vmem:[#allocation6 + $0xa0] sm:$0xff]
        %v2815 = vld [vmem:[#allocation6 + $0xa8] sm:$0xff]
        %v2816 = vld [vmem:[#allocation6 + $0xb0] sm:$0xff]
        %v2817 = vld [vmem:[#allocation6 + $0xb8] sm:$0xff]
        %v2818 = vld [vmem:[#allocation6 + $0xc0] sm:$0xff]
        %v2819 = vld [vmem:[#allocation6 + $0xc8] sm:$0xff]
        %v2820 = vld [vmem:[#allocation6 + $0xd0] sm:$0xff]
        %v2821 = vld [vmem:[#allocation6 + $0xd8] sm:$0xff]
        %v2822 = vld [vmem:[#allocation6 + $0xe0] sm:$0xff]
        %v2823 = vld [vmem:[#allocation6 + $0xe8] sm:$0xff]
        %v2824 = vld [vmem:[#allocation6 + $0xf0] sm:$0xff]
        %v2825 = vld [vmem:[#allocation6 + $0xf8] sm:$0xff]
        %v2826 = vld [vmem:[#allocation6 + $0x100] sm:$0xff]
        %v2827 = vld [vmem:[#allocation6 + $0x108] sm:$0xff]
        %v2828 = vld [vmem:[#allocation6 + $0x110] sm:$0xff]
        %v2829 = vld [vmem:[#allocation6 + $0x118] sm:$0xff]
        %v2830 = vld [vmem:[#allocation6 + $0x120] sm:$0xff]
        %v2831 = vld [vmem:[#allocation6 + $0x128] sm:$0xff]
        %v2832 = vld [vmem:[#allocation6 + $0x130] sm:$0xff]
        %v2833 = vld [vmem:[#allocation6 + $0x138] sm:$0xff]
        %v2834 = vld [vmem:[#allocation6 + $0x140] sm:$0xff]
        %v2835 = vld [vmem:[#allocation6 + $0x148] sm:$0xff]
        %v2836 = vld [vmem:[#allocation6 + $0x150] sm:$0xff]
        %v2837 = vld [vmem:[#allocation6 + $0x158] sm:$0xff]
        %v2838 = vld [vmem:[#allocation6 + $0x160] sm:$0xff]
        %v2839 = vld [vmem:[#allocation6 + $0x168] sm:$0xff]
        %v2840 = vld [vmem:[#allocation6 + $0x170] sm:$0xff]
        %v2841 = vld [vmem:[#allocation6 + $0x178] sm:$0xff]
        %v2842 = vld [vmem:[#allocation6 + $0x180] sm:$0xff]
        %v2843 = vld [vmem:[#allocation6 + $0x188] sm:$0xff]
        %v2844 = vld [vmem:[#allocation6 + $0x190] sm:$0xff]
        %v2845 = vld [vmem:[#allocation6 + $0x198] sm:$0xff]
        %v2846 = vld [vmem:[#allocation6 + $0x1a0] sm:$0xff]
        %v2847 = vld [vmem:[#allocation6 + $0x1a8] sm:$0xff]
        %v2848 = vld [vmem:[#allocation6 + $0x1b0] sm:$0xff]
        %v2849 = vld [vmem:[#allocation6 + $0x1b8] sm:$0xff]
        %v2850 = vld [vmem:[#allocation6 + $0x1c0] sm:$0xff]
        %v2851 = vld [vmem:[#allocation6 + $0x1c8] sm:$0xff]
        %v2852 = vld [vmem:[#allocation6 + $0x1d0] sm:$0xff]
        %v2853 = vld [vmem:[#allocation6 + $0x1d8] sm:$0xff]
        %v2854 = vld [vmem:[#allocation6 + $0x1e0] sm:$0xff]
        %v2855 = vld [vmem:[#allocation6 + $0x1e8] sm:$0xff]
        %v2856 = vld [vmem:[#allocation6 + $0x1f0] sm:$0xff]
        %v2857 = vld [vmem:[#allocation6 + $0x1f8] sm:$0xff]
        %v2858 = vld [vmem:[%s12] sm:$0x1]
        %v2860 = vlaneseq
        %v2861 = vshrl.u32 %v2860, 7
        %v2862 = vsub.s32 0, %v2861
        %v2863 = vrot.slane %v2858, %v2862
        %2865 = vmatprep.subr.mxu0 0.0
        %2866 = vmatpush1.msra.mxu0 %v2794
        %2867 = vmatprep.subr.mxu0 0.0
        %2868 = vmatpush1.msra.mxu0 %v2795
        %2869 = vmatprep.subr.mxu0 0.0
        %2870 = vmatpush1.msra.mxu0 %v2796
        %2871 = vmatprep.subr.mxu0 0.0
        %2872 = vmatpush1.msra.mxu0 %v2797
        %2873 = vmatprep.subr.mxu0 0.0
        %2874 = vmatpush1.msra.mxu0 %v2798
        %2875 = vmatprep.subr.mxu0 0.0
        %2876 = vmatpush1.msra.mxu0 %v2799
        %2877 = vmatprep.subr.mxu0 0.0
        %2878 = vmatpush1.msra.mxu0 %v2800
        %2879 = vmatprep.subr.mxu0 0.0
        %2880 = vmatpush1.msra.mxu0 %v2801
        %2881 = vmatprep.subr.mxu0 0.0
        %2882 = vmatpush1.msra.mxu0 %v2802
        %2883 = vmatprep.subr.mxu0 0.0
        %2884 = vmatpush1.msra.mxu0 %v2803
        %2885 = vmatprep.subr.mxu0 0.0
        %2886 = vmatpush1.msra.mxu0 %v2804
        %2887 = vmatprep.subr.mxu0 0.0
        %2888 = vmatpush1.msra.mxu0 %v2805
        %2889 = vmatprep.subr.mxu0 0.0
        %2890 = vmatpush1.msra.mxu0 %v2806
        %2891 = vmatprep.subr.mxu0 0.0
        %2892 = vmatpush1.msra.mxu0 %v2807
        %2893 = vmatprep.subr.mxu0 0.0
        %2894 = vmatpush1.msra.mxu0 %v2808
        %2895 = vmatprep.subr.mxu0 0.0
        %2896 = vmatpush1.msra.mxu0 %v2809
        %2897 = vmatprep.subr.mxu0 0.0
        %2898 = vmatpush1.msra.mxu0 %v2810
        %2899 = vmatprep.subr.mxu0 0.0
        %2900 = vmatpush1.msra.mxu0 %v2811
        %2901 = vmatprep.subr.mxu0 0.0
        %2902 = vmatpush1.msra.mxu0 %v2812
        %2903 = vmatprep.subr.mxu0 0.0
        %2904 = vmatpush1.msra.mxu0 %v2813
        %2905 = vmatprep.subr.mxu0 0.0
        %2906 = vmatpush1.msra.mxu0 %v2814
        %2907 = vmatprep.subr.mxu0 0.0
        %2908 = vmatpush1.msra.mxu0 %v2815
        %2909 = vmatprep.subr.mxu0 0.0
        %2910 = vmatpush1.msra.mxu0 %v2816
        %2911 = vmatprep.subr.mxu0 0.0
        %2912 = vmatpush1.msra.mxu0 %v2817
        %2913 = vmatprep.subr.mxu0 0.0
        %2914 = vmatpush1.msra.mxu0 %v2818
        %2915 = vmatprep.subr.mxu0 0.0
        %2916 = vmatpush1.msra.mxu0 %v2819
        %2917 = vmatprep.subr.mxu0 0.0
        %2918 = vmatpush1.msra.mxu0 %v2820
        %2919 = vmatprep.subr.mxu0 0.0
        %2920 = vmatpush1.msra.mxu0 %v2821
        %2921 = vmatprep.subr.mxu0 0.0
        %2922 = vmatpush1.msra.mxu0 %v2822
        %2923 = vmatprep.subr.mxu0 0.0
        %2924 = vmatpush1.msra.mxu0 %v2823
        %2925 = vmatprep.subr.mxu0 0.0
        %2926 = vmatpush1.msra.mxu0 %v2824
        %2927 = vmatprep.subr.mxu0 0.0
        %2928 = vmatpush1.msra.mxu0 %v2825
        %2929 = vmatprep.mubr.f32.mxu0 %v2779
        %2930 = vmatmul.mubr.f32.gmra.mrb[0].mxu0 %v2778
        %v2931 = vpop.f32.mrb[0].mxu0
        %v2932 = vadd.f32 %v2863, %v2931
        %v2933 = vpop.f32.mrb[0].mxu0
        %2934 = vmatprep.mubr.f32.mxu0 %v2783
        %2935 = vmatmul.mubr.f32.gmra.mrb[0].mxu0 %v2782
        %v2936 = vpop.f32.mrb[0].mxu0
        %v2937 = vadd.f32 %v2863, %v2936
        %v2938 = vpop.f32.mrb[0].mxu0
        %2939 = vmatprep.mubr.f32.mxu0 %v2787
        %2940 = vmatmul.mubr.f32.gmra.mrb[0].mxu0 %v2786
        %v2941 = vpop.f32.mrb[0].mxu0
        %v2942 = vadd.f32 %v2863, %v2941
        %v2943 = vpop.f32.mrb[0].mxu0
        %2944 = vmatprep.mubr.f32.mxu0 %v2791
        %2945 = vmatmul.mubr.f32.gmra.mrb[0].mxu0 %v2790
        %v2946 = vpop.f32.mrb[0].mxu0
        %v2947 = vadd.f32 %v2863, %v2946
        %v2948 = vpop.f32.mrb[0].mxu0
        %2949 = vdwg.mxu0
        %2950 = vmatprep.subr.mxu0 0.0
        %2951 = vmatpush1.msra.mxu0 %v2826
        %2952 = vmatprep.subr.mxu0 0.0
        %2953 = vmatpush1.msra.mxu0 %v2827
        %2954 = vmatprep.subr.mxu0 0.0
        %2955 = vmatpush1.msra.mxu0 %v2828
        %2956 = vmatprep.subr.mxu0 0.0
        %2957 = vmatpush1.msra.mxu0 %v2829
        %2958 = vmatprep.subr.mxu0 0.0
        %2959 = vmatpush1.msra.mxu0 %v2830
        %2960 = vmatprep.subr.mxu0 0.0
        %2961 = vmatpush1.msra.mxu0 %v2831
        %2962 = vmatprep.subr.mxu0 0.0
        %2963 = vmatpush1.msra.mxu0 %v2832
        %2964 = vmatprep.subr.mxu0 0.0
        %2965 = vmatpush1.msra.mxu0 %v2833
        %2966 = vmatprep.subr.mxu0 0.0
        %2967 = vmatpush1.msra.mxu0 %v2834
        %2968 = vmatprep.subr.mxu0 0.0
        %2969 = vmatpush1.msra.mxu0 %v2835
        %2970 = vmatprep.subr.mxu0 0.0
        %2971 = vmatpush1.msra.mxu0 %v2836
        %2972 = vmatprep.subr.mxu0 0.0
        %2973 = vmatpush1.msra.mxu0 %v2837
        %2974 = vmatprep.subr.mxu0 0.0
        %2975 = vmatpush1.msra.mxu0 %v2838
        %2976 = vmatprep.subr.mxu0 0.0
        %2977 = vmatpush1.msra.mxu0 %v2839
        %2978 = vmatprep.subr.mxu0 0.0
        %2979 = vmatpush1.msra.mxu0 %v2840
        %2980 = vmatprep.subr.mxu0 0.0
        %2981 = vmatpush1.msra.mxu0 %v2841
        %2982 = vmatprep.subr.mxu0 0.0
        %2983 = vmatpush1.msra.mxu0 %v2842
        %2984 = vmatprep.subr.mxu0 0.0
        %2985 = vmatpush1.msra.mxu0 %v2843
        %2986 = vmatprep.subr.mxu0 0.0
        %2987 = vmatpush1.msra.mxu0 %v2844
        %2988 = vmatprep.subr.mxu0 0.0
        %2989 = vmatpush1.msra.mxu0 %v2845
        %2990 = vmatprep.subr.mxu0 0.0
        %2991 = vmatpush1.msra.mxu0 %v2846
        %2992 = vmatprep.subr.mxu0 0.0
        %2993 = vmatpush1.msra.mxu0 %v2847
        %2994 = vmatprep.subr.mxu0 0.0
        %2995 = vmatpush1.msra.mxu0 %v2848
        %2996 = vmatprep.subr.mxu0 0.0
        %2997 = vmatpush1.msra.mxu0 %v2849
        %2998 = vmatprep.subr.mxu0 0.0
        %2999 = vmatpush1.msra.mxu0 %v2850
        %3000 = vmatprep.subr.mxu0 0.0
        %3001 = vmatpush1.msra.mxu0 %v2851
        %3002 = vmatprep.subr.mxu0 0.0
        %3003 = vmatpush1.msra.mxu0 %v2852
        %3004 = vmatprep.subr.mxu0 0.0
        %3005 = vmatpush1.msra.mxu0 %v2853
        %3006 = vmatprep.subr.mxu0 0.0
        %3007 = vmatpush1.msra.mxu0 %v2854
        %3008 = vmatprep.subr.mxu0 0.0
        %3009 = vmatpush1.msra.mxu0 %v2855
        %3010 = vmatprep.subr.mxu0 0.0
        %3011 = vmatpush1.msra.mxu0 %v2856
        %3012 = vmatprep.subr.mxu0 0.0
        %3013 = vmatpush1.msra.mxu0 %v2857
        %3014 = vmatprep.mubr.f32.mxu0 %v2781
        %3015 = vmatmul.mubr.f32.gmra.mrb[0].mxu0 %v2780
        %v3016 = vpop.f32.mrb[0].mxu0
        %v3017 = vadd.f32 %v2932, %v3016
        %v3018 = vpop.f32.mrb[0].mxu0
        %3019 = vmatprep.mubr.f32.mxu0 %v2785
        %3020 = vmatmul.mubr.f32.gmra.mrb[0].mxu0 %v2784
        %v3021 = vpop.f32.mrb[0].mxu0
        %v3022 = vadd.f32 %v2937, %v3021
        %v3023 = vpop.f32.mrb[0].mxu0
        %3024 = vmatprep.mubr.f32.mxu0 %v2789
        %3025 = vmatmul.mubr.f32.gmra.mrb[0].mxu0 %v2788
        %v3026 = vpop.f32.mrb[0].mxu0
        %v3027 = vadd.f32 %v2942, %v3026
        %v3028 = vpop.f32.mrb[0].mxu0
        %3029 = vmatprep.mubr.f32.mxu0 %v2793
        %3030 = vmatmul.mubr.f32.gmra.mrb[0].mxu0 %v2792
        %v3031 = vpop.f32.mrb[0].mxu0
        %v3032 = vadd.f32 %v2947, %v3031
        %v3033 = vpop.f32.mrb[0].mxu0
        %3034 = vdwg.mxu0
        %v3035 = vadd.f32 %v2314, %v3017
        %v3036 = vadd.f32 %v2315, %v3022
        %v3037 = vadd.f32 %v2316, %v3027
        %v3038 = vadd.f32 %v2317, %v3032
        %3039 = vst [vmem:[%s484] sm:$0xff] %v3035
        %3040 = vst [vmem:[%s484 + $0x8] sm:$0xff] %v3036
        %3041 = vst [vmem:[%s484 + $0x10] sm:$0xff] %v3037
        %3042 = vst [vmem:[%s484 + $0x18] sm:$0x7f] %v3038
        %p3043 = scmp.lt.s32.totalorder %s26, 1
        %s3044 = scalar_select %p3043, %s26, 1
        %s3045 = smul.addr %s3044, 4
        %s3046 = smul.addr %s3045, 8
        %s3047 = scalar_lea.vmem %s13, %s3046
        // Predicated region
        $region85: #{tpu_custom_call.1} parent=71 // pred_check
          %p3048 = pneg %p322
        $region86: #{tpu_custom_call.1} parent=71 // pred_check_branch
          %3050 = sbr.rel (%p3048) target = $region88
        $region87: #{tpu_custom_call.1} parent=71 // pred_region
          _
        $region88: #{tpu_custom_call.1} parent=71 // pred_fallthru
          _
      $region72: #{tpu_custom_call.1} parent=5 // pred_fallthru
        _
      %p3051 = scmp.le.s32.totalorder 2, %s21
      // Predicated region
      $region89: #{tpu_custom_call.1} parent=5 // pred_check
        %p3052 = pneg %p3051
      $region90: #{tpu_custom_call.1} parent=5 // pred_check_branch
        %3054 = sbr.rel (%p3052) target = $region92
      $region91: #{tpu_custom_call.1} parent=5 // pred_region
        %s3055 = ssub.s32 %s21, 2
        // Predicated region
        $region93: #{tpu_custom_call.1} parent=91 // pred_check
          %p3056 = pneg %p328
        $region94: #{tpu_custom_call.1} parent=91 // pred_check_branch
          %3058 = sbr.rel (%p3056) target = $region96
        $region95: #{tpu_custom_call.1} parent=91 // pred_region
          %p3059 = scmp.lt.s32.totalorder %s27, 1
          %s3060 = scalar_select %p3059, %s27, 1
          %s3061 = smul.addr %s3060, 4
          %s3062 = smul.addr %s3061, 8
          %s3063 = scalar_lea.vmem %s13, %s3062
        $region96: #{tpu_custom_call.1} parent=91 // pred_fallthru
          _
      $region92: #{tpu_custom_call.1} parent=5 // pred_fallthru
        _
    $region6: #{tpu_custom_call.1} parent=1 // loop_footer
      %s25 = sadd.s32 1, %s21
    $region7: #{tpu_custom_call.1} parent=1 // loop_footer_branch
      %20 = sbr.rel target = $region3
    $region8: #{tpu_custom_call.1} parent=1 // loop_exit
      _
    %3064 = vsyncpa [#allocation3], 1
    %s3065 = scalar_lea.sflag [#allocation3], 1
    %3066 = vsyncpa %s3065, 1
    %3067 = vsyncpa [#allocation5], 1

</llo_original>
